<compile_context>
chip_gen: v7x
topology: tpu7x:2x2x1
jax: 0.10.0
libtpu: 0.0.40
codegen_flags: <defaults>
</compile_context>

<pallas_src>
import jax
import jax.numpy as jnp
from jax.experimental import pallas as pl
from jax.experimental.pallas import tpu as pltpu

_BN_EPS = 1e-5
_NEG_SLOPE = 0.2
_NOISE_STD = 0.05
_DROPOUT_P = 0.3
_LANE = 128
_MAX_BLOCK_M = 512
_VMEM_LIMIT = 32 * 1024 * 1024  # fits scoped VMEM on v5e/v6e/v7x

_KSIZE = 3
ENC_STRIDES = (2, 2, 2, 2)
_ENC_BLOCKS = ((1, 16), (16, 32), (32, 32), (32, 32))   # (cin, cout)
_DEC_BLOCKS = ((32, 32), (32, 32), (32, 32), (32, 16))  # all upsample=True


def _round_up(a, b):
    return (a + b - 1) // b * b


# ----------------------------------------------------------------------------- kernels
def _conv_stats_kernel(w_ref, p_ref, conv_ref, sum_ref, ssq_ref):
    """Pass 1: conv-as-matmul tile + per-channel sum / sum-of-squares accumulation.

    w_ref:    (Cout, K)   bf16  conv weight (constant block -> resident)
    p_ref:    (K, bm)     bf16  im2col patches, M on lanes
    conv_ref: (Cout, bm)  f32   conv output tile
    sum_ref:  (Cout, 1)   f32   running per-channel sum    (resident accumulator)
    ssq_ref:  (Cout, 1)   f32   running per-channel sum^2  (resident accumulator)
    """
    @pl.when(pl.program_id(0) == 0)
    def _init():
        sum_ref[...] = jnp.zeros_like(sum_ref)
        ssq_ref[...] = jnp.zeros_like(ssq_ref)

    acc = jnp.dot(w_ref[...], p_ref[...], preferred_element_type=jnp.float32)
    conv_ref[...] = acc
    sum_ref[...] += jnp.sum(acc, axis=1, keepdims=True)
    ssq_ref[...] += jnp.sum(acc * acc, axis=1, keepdims=True)


def _bn_act_kernel(conv_ref, scale_ref, shift_ref, o_ref):
    """Pass 2: y = conv * scale + shift ; LeakyReLU(0.2). Lane-dense, megacore-parallel."""
    y = conv_ref[...] * scale_ref[...] + shift_ref[...]
    o_ref[...] = jnp.where(y >= 0.0, y, _NEG_SLOPE * y)


# ----------------------------------------------------------------------------- conv plumbing
def _im2col_cnhw(x, k, stride, pad):
    """x: (C, N, H, W) -> patches (k*k*C, N*Ho*Wo), K ordered (kh, kw, cin)."""
    c, n, h, w = x.shape
    xp = jnp.pad(x, ((0, 0), (0, 0), (pad, pad), (pad, pad)))
    ho = (h + 2 * pad - k) // stride + 1
    wo = (w + 2 * pad - k) // stride + 1
    cols = []
    for i in range(k):
        for j in range(k):
            cols.append(xp[:, :, i:i + stride * ho:stride, j:j + stride * wo:stride])
    p = jnp.stack(cols, axis=0)                      # (k*k, C, N, Ho, Wo)
    return p.reshape(k * k * c, n * ho * wo), ho, wo


def _conv2d_pallas(x, w_oikk, stride):
    """Conv2d(bias=False, padding=(k-1)//2) on a CNHW tensor via tiled Pallas matmul.

    x:      (Cin, N, H, W) f32
    w_oikk: (Cout, Cin, k, k) f32  (PyTorch conv.weight layout)
    Returns (conv (Cout, M_pad) f32, sum (Cout,1), sumsq (Cout,1), m, ho, wo, bm).
    """
    cout, cin, k, _ = w_oikk.shape
    pad = (k - 1) // 2
    patches, ho, wo = _im2col_cnhw(x, k, stride, pad)
    kdim, m = patches.shape

    bm = min(_MAX_BLOCK_M, _round_up(m, _LANE))
    m_pad = _round_up(m, bm)
    if m_pad != m:
        # Zero patch columns contribute 0 to conv/sum/sumsq (no bias); sliced off later.
        patches = jnp.pad(patches, ((0, 0), (0, m_pad - m)))
    patches = patches.astype(jnp.bfloat16)
    w2 = jnp.transpose(w_oikk, (0, 2, 3, 1)).reshape(cout, kdim).astype(jnp.bfloat16)

    nm = m_pad // bm
    cost = pl.CostEstimate(
        flops=2 * cout * kdim * m_pad,
        transcendentals=0,
        bytes_accessed=kdim * m_pad * 2 + cout * kdim * 2 + cout * m_pad * 4,
    )

    conv, csum, cssq = pl.pallas_call(
        _conv_stats_kernel,
        out_shape=(
            jax.ShapeDtypeStruct((cout, m_pad), jnp.float32),
            jax.ShapeDtypeStruct((cout, 1), jnp.float32),
            jax.ShapeDtypeStruct((cout, 1), jnp.float32),
        ),
        grid=(nm,),
        in_specs=[
            pl.BlockSpec((cout, kdim), lambda i: (0, 0)),
            pl.BlockSpec((kdim, bm), lambda i: (0, i)),
        ],
        out_specs=(
            pl.BlockSpec((cout, bm), lambda i: (0, i)),
            pl.BlockSpec((cout, 1), lambda i: (0, 0)),
            pl.BlockSpec((cout, 1), lambda i: (0, 0)),
        ),
        compiler_params=pltpu.CompilerParams(
            dimension_semantics=("arbitrary",),   # stats accumulate across M tiles
            vmem_limit_bytes=_VMEM_LIMIT,
        ),
        cost_estimate=cost,
    )(w2, patches)
    return conv, csum, cssq, m, ho, wo, bm


def _bn_leakyrelu_pallas(conv, scale, shift, bm):
    """Apply y = conv*scale + shift, LeakyReLU(0.2), tiled over M ('parallel' axis)."""
    cout, m_pad = conv.shape
    nm = m_pad // bm
    return pl.pallas_call(
        _bn_act_kernel,
        out_shape=jax.ShapeDtypeStruct((cout, m_pad), jnp.float32),
        grid=(nm,),
        in_specs=[
            pl.BlockSpec((cout, bm), lambda i: (0, i)),
            pl.BlockSpec((cout, 1), lambda i: (0, 0)),
            pl.BlockSpec((cout, 1), lambda i: (0, 0)),
        ],
        out_specs=pl.BlockSpec((cout, bm), lambda i: (0, i)),
        compiler_params=pltpu.CompilerParams(
            dimension_semantics=("parallel",),    # pure elementwise: megacore-shardable
            vmem_limit_bytes=_VMEM_LIMIT,
        ),
    )(conv, scale, shift)


# ----------------------------------------------------------------------------- module forward
def _denoising_block(x, w, gamma, beta, key, *, stride=1, upsample=False):
    """DenoisingBlock.forward on CNHW tensors (training-mode semantics)."""
    c, n, h, wd = x.shape
    if upsample:
        # F.interpolate(scale_factor=2, bilinear, align_corners=False) == half-pixel resize.
        x = jax.image.resize(x, (c, n, 2 * h, 2 * wd), method="bilinear")

    # TODO(synk): noise/dropout use a fixed JAX PRNG stream; torch.randn_like /
    # nn.Dropout RNG cannot be reproduced bit-exactly.
    k_noise, k_drop = jax.random.split(key)
    x = x + _NOISE_STD * jax.random.normal(k_noise, x.shape, dtype=x.dtype)
    keep = jax.random.bernoulli(k_drop, p=1.0 - _DROPOUT_P, shape=x.shape)
    x = jnp.where(keep, x * (1.0 / (1.0 - _DROPOUT_P)), 0.0)

    conv, csum, cssq, m, ho, wo, bm = _conv2d_pallas(x, w, stride)
    cout = w.shape[0]
    inv_m = 1.0 / float(m)
    mean = csum * inv_m                                     # (Cout, 1)
    var = jnp.maximum(cssq * inv_m - mean * mean, 0.0)      # biased batch variance
    scale = gamma.reshape(cout, 1) * jax.lax.rsqrt(var + _BN_EPS)
    shift = beta.reshape(cout, 1) - mean * scale

    y = _bn_leakyrelu_pallas(conv, scale, shift, bm)        # (Cout, M_pad)
    return y[:, :m].reshape(cout, n, ho, wo)                # CNHW for the next layer


def _plain_conv(x, w, *, stride=1):
    """Bare `.conv` stages (no upsample / noise / dropout / norm / act)."""
    conv, _, _, m, ho, wo, _ = _conv2d_pallas(x, w, stride)
    cout = w.shape[0]
    n = x.shape[1]
    return conv[:, :m].reshape(cout, n, ho, wo)


@jax.jit
def dn_autoencoder_forward(x_nchw, params, key):
    x = jnp.transpose(x_nchw, (1, 0, 2, 3)).astype(jnp.float32)   # NCHW -> CNHW
    keys = jax.random.split(key, len(params["enc_blocks"]) + len(params["dec_blocks"]))
    ki = 0
    # Encoder: 4 stride-2 DenoisingBlocks + bare conv.
    for (w, g, b), stride in zip(params["enc_blocks"], ENC_STRIDES):
        x = _denoising_block(x, w, g, b, keys[ki], stride=stride)
        ki += 1
    x = _plain_conv(x, params["enc_conv"], stride=1)
    # Decoder: 4 upsampling DenoisingBlocks + bare conv.
    for (w, g, b) in params["dec_blocks"]:
        x = _denoising_block(x, w, g, b, keys[ki], upsample=True)
        ki += 1
    x = _plain_conv(x, params["dec_conv"], stride=1)
    return jnp.transpose(x, (1, 0, 2, 3))                          # CNHW -> NCHW


# ----------------------------------------------------------------------------- params / main
def _conv_weight(key, cout, cin, k=_KSIZE):
    fan_in = cin * k * k
    return (1.0 / fan_in ** 0.5) * jax.random.normal(key, (cout, cin, k, k), dtype=jnp.float32)


def init_params(key):
    keys = list(jax.random.split(key, len(_ENC_BLOCKS) + len(_DEC_BLOCKS) + 2))
    enc_blocks = []
    for cin, cout in _ENC_BLOCKS:
        enc_blocks.append((_conv_weight(keys.pop(0), cout, cin),
                           jnp.ones((cout,), jnp.float32),
                           jnp.zeros((cout,), jnp.float32)))
    enc_conv = _conv_weight(keys.pop(0), 32, 32)
    dec_blocks = []
    for cin, cout in _DEC_BLOCKS:
        dec_blocks.append((_conv_weight(keys.pop(0), cout, cin),
                           jnp.ones((cout,), jnp.float32),
                           jnp.zeros((cout,), jnp.float32)))
    dec_conv = _conv_weight(keys.pop(0), 1, 16)
    return {"enc_blocks": enc_blocks, "enc_conv": enc_conv,
            "dec_blocks": dec_blocks, "dec_conv": dec_conv}


if __name__ == "__main__":
    root = jax.random.PRNGKey(0)
    k_x, k_p, k_fwd = jax.random.split(root, 3)

    # Small shapes consistent with the module: first conv expects 1 input channel;
    # 4 stride-2 convs then 4 bilinear 2x upsamples restore the input resolution.
    N, C_IN, H, W = 2, 1, 32, 32
    x = jax.random.normal(k_x, (N, C_IN, H, W), dtype=jnp.float32)
    params = init_params(k_p)

    y = dn_autoencoder_forward(x, params, k_fwd)
    jax.block_until_ready(y)

    assert y.shape == (N, 1, H, W), y.shape
    assert bool(jnp.all(jnp.isfinite(y)))
    print("KERNEL_OK")
</pallas_src>

<mosaic_0001>
module attributes {stable_mosaic.version = 11 : i64} {
  func.func @_conv_stats_kernel(%arg0: i32, %arg1: memref<16x9xbf16, #tpu.memory_space<vmem>>, %arg2: memref<9x512xbf16, #tpu.memory_space<vmem>>, %arg3: memref<16x512xf32, #tpu.memory_space<vmem>>, %arg4: memref<16x1xf32, #tpu.memory_space<vmem>>, %arg5: memref<16x1xf32, #tpu.memory_space<vmem>>) attributes {dimension_semantics = [#tpu.dimension_semantics<arbitrary>], iteration_bounds = array<i64: 1>, scalar_prefetch = 0 : i64, scratch_operands = 0 : i64, tpu.core_type = #tpu.core_type<tc>, window_params = [{pipeline_mode = #tpu.pipeline_mode<synchronous>, transform_indices = @transform_0, window_bounds = array<i64: 16, 9>}, {transform_indices = @transform_1, window_bounds = array<i64: 9, 512>}, {transform_indices = @transform_2, window_bounds = array<i64: 16, 512>}, {pipeline_mode = #tpu.pipeline_mode<synchronous>, transform_indices = @transform_3, window_bounds = array<i64: 16, 1>}, {pipeline_mode = #tpu.pipeline_mode<synchronous>, transform_indices = @transform_4, window_bounds = array<i64: 16, 1>}]} {
    %c0_i32 = arith.constant 0 : i32
    %0 = arith.cmpi eq, %arg0, %c0_i32 : i32
    %1 = arith.extui %0 : i1 to i32
    %c0_i32_0 = arith.constant 0 : i32
    %2 = arith.cmpi ne, %1, %c0_i32_0 : i32
    scf.if %2 {
      %cst_16 = arith.constant 0.000000e+00 : f32
      %18 = vector.broadcast %cst_16 : f32 to vector<16x1xf32>
      %c0_17 = arith.constant 0 : index
      %c0_18 = arith.constant 0 : index
      %19 = vector.load %arg4[%c0_17, %c0_18] : memref<16x1xf32, #tpu.memory_space<vmem>>, vector<16x1xf32>
      tpu.vector_store %arg4[%c0_17, %c0_18], %18 {strides = array<i32>} : memref<16x1xf32, #tpu.memory_space<vmem>>, vector<16x1xf32>,
      %cst_19 = arith.constant 0.000000e+00 : f32
      %20 = vector.broadcast %cst_19 : f32 to vector<16x1xf32>
      %c0_20 = arith.constant 0 : index
      %c0_21 = arith.constant 0 : index
      %21 = vector.load %arg5[%c0_20, %c0_21] : memref<16x1xf32, #tpu.memory_space<vmem>>, vector<16x1xf32>
      tpu.vector_store %arg5[%c0_20, %c0_21], %20 {strides = array<i32>} : memref<16x1xf32, #tpu.memory_space<vmem>>, vector<16x1xf32>,
    } else {
    }
    %c0 = arith.constant 0 : index
    %c0_1 = arith.constant 0 : index
    %3 = vector.load %arg1[%c0, %c0_1] : memref<16x9xbf16, #tpu.memory_space<vmem>>, vector<16x9xbf16>
    %c0_2 = arith.constant 0 : index
    %c0_3 = arith.constant 0 : index
    %4 = vector.load %arg2[%c0_2, %c0_3] : memref<9x512xbf16, #tpu.memory_space<vmem>>, vector<9x512xbf16>
    %cst = arith.constant dense<0.000000e+00> : vector<16x512xf32>
    %5 = tpu.matmul %3, %4, %cst {dimension_numbers = #tpu.dot_dimension_numbers<[1], [0], [0], [1], [0, 0, 1, 1], [], []>} : vector<16x9xbf16>, vector<9x512xbf16>, vector<16x512xf32> -> vector<16x512xf32>
    %c0_4 = arith.constant 0 : index
    %c0_5 = arith.constant 0 : index
    %6 = vector.load %arg3[%c0_4, %c0_5] : memref<16x512xf32, #tpu.memory_space<vmem>>, vector<16x512xf32>
    tpu.vector_store %arg3[%c0_4, %c0_5], %5 {strides = array<i32>} : memref<16x512xf32, #tpu.memory_space<vmem>>, vector<16x512xf32>,
    %c0_6 = arith.constant 0 : index
    %c0_7 = arith.constant 0 : index
    %7 = vector.load %arg4[%c0_6, %c0_7] : memref<16x1xf32, #tpu.memory_space<vmem>>, vector<16x1xf32>
    %cst_8 = arith.constant dense<0.000000e+00> : vector<16xf32>
    %8 = vector.multi_reduction <add>, %5, %cst_8 [1] : vector<16x512xf32> to vector<16xf32>
    %9 = vector.shape_cast %8 : vector<16xf32> to vector<16x1xf32>
    %10 = arith.addf %7, %9 : vector<16x1xf32>
    %c0_9 = arith.constant 0 : index
    %c0_10 = arith.constant 0 : index
    %11 = vector.load %arg4[%c0_9, %c0_10] : memref<16x1xf32, #tpu.memory_space<vmem>>, vector<16x1xf32>
    tpu.vector_store %arg4[%c0_9, %c0_10], %10 {strides = array<i32>} : memref<16x1xf32, #tpu.memory_space<vmem>>, vector<16x1xf32>,
    %c0_11 = arith.constant 0 : index
    %c0_12 = arith.constant 0 : index
    %12 = vector.load %arg5[%c0_11, %c0_12] : memref<16x1xf32, #tpu.memory_space<vmem>>, vector<16x1xf32>
    %13 = arith.mulf %5, %5 : vector<16x512xf32>
    %cst_13 = arith.constant dense<0.000000e+00> : vector<16xf32>
    %14 = vector.multi_reduction <add>, %13, %cst_13 [1] : vector<16x512xf32> to vector<16xf32>
    %15 = vector.shape_cast %14 : vector<16xf32> to vector<16x1xf32>
    %16 = arith.addf %12, %15 : vector<16x1xf32>
    %c0_14 = arith.constant 0 : index
    %c0_15 = arith.constant 0 : index
    %17 = vector.load %arg5[%c0_14, %c0_15] : memref<16x1xf32, #tpu.memory_space<vmem>>, vector<16x1xf32>
    tpu.vector_store %arg5[%c0_14, %c0_15], %16 {strides = array<i32>} : memref<16x1xf32, #tpu.memory_space<vmem>>, vector<16x1xf32>,
    return
  }
  func.func @transform_0(%arg0: i32) -> (i32, i32) {
    %c0_i32 = arith.constant 0 : i32
    %c0_i32_0 = arith.constant 0 : i32
    %c0_i32_1 = arith.constant 0 : i32
    return %c0_i32, %c0_i32_0 : i32, i32
  }
  func.func @transform_1(%arg0: i32) -> (i32, i32) {
    %c0_i32 = arith.constant 0 : i32
    %c0_i32_0 = arith.constant 0 : i32
    return %c0_i32, %arg0 : i32, i32
  }
  func.func @transform_2(%arg0: i32) -> (i32, i32) {
    %c0_i32 = arith.constant 0 : i32
    %c0_i32_0 = arith.constant 0 : i32
    return %c0_i32, %arg0 : i32, i32
  }
  func.func @transform_3(%arg0: i32) -> (i32, i32) {
    %c0_i32 = arith.constant 0 : i32
    %c0_i32_0 = arith.constant 0 : i32
    %c0_i32_1 = arith.constant 0 : i32
    return %c0_i32, %c0_i32_0 : i32, i32
  }
  func.func @transform_4(%arg0: i32) -> (i32, i32) {
    %c0_i32 = arith.constant 0 : i32
    %c0_i32_0 = arith.constant 0 : i32
    %c0_i32_1 = arith.constant 0 : i32
    return %c0_i32, %c0_i32_0 : i32, i32
  }
}

module attributes {stable_mosaic.version = 11 : i64} {
  func.func @_bn_act_kernel(%arg0: i32, %arg1: memref<16x512xf32, #tpu.memory_space<vmem>>, %arg2: memref<16x1xf32, #tpu.memory_space<vmem>>, %arg3: memref<16x1xf32, #tpu.memory_space<vmem>>, %arg4: memref<16x512xf32, #tpu.memory_space<vmem>>) attributes {dimension_semantics = [#tpu.dimension_semantics<parallel>], iteration_bounds = array<i64: 1>, scalar_prefetch = 0 : i64, scratch_operands = 0 : i64, tpu.core_type = #tpu.core_type<tc>, window_params = [{transform_indices = @transform_0, window_bounds = array<i64: 16, 512>}, {pipeline_mode = #tpu.pipeline_mode<synchronous>, transform_indices = @transform_1, window_bounds = array<i64: 16, 1>}, {pipeline_mode = #tpu.pipeline_mode<synchronous>, transform_indices = @transform_2, window_bounds = array<i64: 16, 1>}, {transform_indices = @transform_3, window_bounds = array<i64: 16, 512>}]} {
    %c0 = arith.constant 0 : index
    %c0_0 = arith.constant 0 : index
    %0 = vector.load %arg1[%c0, %c0_0] : memref<16x512xf32, #tpu.memory_space<vmem>>, vector<16x512xf32>
    %c0_1 = arith.constant 0 : index
    %c0_2 = arith.constant 0 : index
    %1 = vector.load %arg2[%c0_1, %c0_2] : memref<16x1xf32, #tpu.memory_space<vmem>>, vector<16x1xf32>
    %2 = vector.broadcast %1 : vector<16x1xf32> to vector<16x512xf32>
    %3 = arith.mulf %0, %2 : vector<16x512xf32>
    %c0_3 = arith.constant 0 : index
    %c0_4 = arith.constant 0 : index
    %4 = vector.load %arg3[%c0_3, %c0_4] : memref<16x1xf32, #tpu.memory_space<vmem>>, vector<16x1xf32>
    %5 = vector.broadcast %4 : vector<16x1xf32> to vector<16x512xf32>
    %6 = arith.addf %3, %5 : vector<16x512xf32>
    %cst = arith.constant 0.000000e+00 : f32
    %7 = vector.broadcast %cst : f32 to vector<16x512xf32>
    %8 = arith.cmpf oge, %6, %7 : vector<16x512xf32>
    %cst_5 = arith.constant 2.000000e-01 : f32
    %9 = vector.broadcast %cst_5 : f32 to vector<16x512xf32>
    %10 = arith.mulf %9, %6 : vector<16x512xf32>
    %11 = arith.select %8, %6, %10 : vector<16x512xi1>, vector<16x512xf32>
    %c0_6 = arith.constant 0 : index
    %c0_7 = arith.constant 0 : index
    %12 = vector.load %arg4[%c0_6, %c0_7] : memref<16x512xf32, #tpu.memory_space<vmem>>, vector<16x512xf32>
    tpu.vector_store %arg4[%c0_6, %c0_7], %11 {strides = array<i32>} : memref<16x512xf32, #tpu.memory_space<vmem>>, vector<16x512xf32>,
    return
  }
  func.func @transform_0(%arg0: i32) -> (i32, i32) {
    %c0_i32 = arith.constant 0 : i32
    %c0_i32_0 = arith.constant 0 : i32
    return %c0_i32, %arg0 : i32, i32
  }
  func.func @transform_1(%arg0: i32) -> (i32, i32) {
    %c0_i32 = arith.constant 0 : i32
    %c0_i32_0 = arith.constant 0 : i32
    %c0_i32_1 = arith.constant 0 : i32
    return %c0_i32, %c0_i32_0 : i32, i32
  }
  func.func @transform_2(%arg0: i32) -> (i32, i32) {
    %c0_i32 = arith.constant 0 : i32
    %c0_i32_0 = arith.constant 0 : i32
    %c0_i32_1 = arith.constant 0 : i32
    return %c0_i32, %c0_i32_0 : i32, i32
  }
  func.func @transform_3(%arg0: i32) -> (i32, i32) {
    %c0_i32 = arith.constant 0 : i32
    %c0_i32_0 = arith.constant 0 : i32
    return %c0_i32, %arg0 : i32, i32
  }
}

module attributes {stable_mosaic.version = 11 : i64} {
  func.func @_conv_stats_kernel(%arg0: i32, %arg1: memref<32x144xbf16, #tpu.memory_space<vmem>>, %arg2: memref<144x128xbf16, #tpu.memory_space<vmem>>, %arg3: memref<32x128xf32, #tpu.memory_space<vmem>>, %arg4: memref<32x1xf32, #tpu.memory_space<vmem>>, %arg5: memref<32x1xf32, #tpu.memory_space<vmem>>) attributes {dimension_semantics = [#tpu.dimension_semantics<arbitrary>], iteration_bounds = array<i64: 1>, scalar_prefetch = 0 : i64, scratch_operands = 0 : i64, tpu.core_type = #tpu.core_type<tc>, window_params = [{pipeline_mode = #tpu.pipeline_mode<synchronous>, transform_indices = @transform_0, window_bounds = array<i64: 32, 144>}, {transform_indices = @transform_1, window_bounds = array<i64: 144, 128>}, {transform_indices = @transform_2, window_bounds = array<i64: 32, 128>}, {pipeline_mode = #tpu.pipeline_mode<synchronous>, transform_indices = @transform_3, window_bounds = array<i64: 32, 1>}, {pipeline_mode = #tpu.pipeline_mode<synchronous>, transform_indices = @transform_4, window_bounds = array<i64: 32, 1>}]} {
    %c0_i32 = arith.constant 0 : i32
    %0 = arith.cmpi eq, %arg0, %c0_i32 : i32
    %1 = arith.extui %0 : i1 to i32
    %c0_i32_0 = arith.constant 0 : i32
    %2 = arith.cmpi ne, %1, %c0_i32_0 : i32
    scf.if %2 {
      %cst_16 = arith.constant 0.000000e+00 : f32
      %18 = vector.broadcast %cst_16 : f32 to vector<32x1xf32>
      %c0_17 = arith.constant 0 : index
      %c0_18 = arith.constant 0 : index
      %19 = vector.load %arg4[%c0_17, %c0_18] : memref<32x1xf32, #tpu.memory_space<vmem>>, vector<32x1xf32>
      tpu.vector_store %arg4[%c0_17, %c0_18], %18 {strides = array<i32>} : memref<32x1xf32, #tpu.memory_space<vmem>>, vector<32x1xf32>,
      %cst_19 = arith.constant 0.000000e+00 : f32
      %20 = vector.broadcast %cst_19 : f32 to vector<32x1xf32>
      %c0_20 = arith.constant 0 : index
      %c0_21 = arith.constant 0 : index
      %21 = vector.load %arg5[%c0_20, %c0_21] : memref<32x1xf32, #tpu.memory_space<vmem>>, vector<32x1xf32>
      tpu.vector_store %arg5[%c0_20, %c0_21], %20 {strides = array<i32>} : memref<32x1xf32, #tpu.memory_space<vmem>>, vector<32x1xf32>,
    } else {
    }
    %c0 = arith.constant 0 : index
    %c0_1 = arith.constant 0 : index
    %3 = vector.load %arg1[%c0, %c0_1] : memref<32x144xbf16, #tpu.memory_space<vmem>>, vector<32x144xbf16>
    %c0_2 = arith.constant 0 : index
    %c0_3 = arith.constant 0 : index
    %4 = vector.load %arg2[%c0_2, %c0_3] : memref<144x128xbf16, #tpu.memory_space<vmem>>, vector<144x128xbf16>
    %cst = arith.constant dense<0.000000e+00> : vector<32x128xf32>
    %5 = tpu.matmul %3, %4, %cst {dimension_numbers = #tpu.dot_dimension_numbers<[1], [0], [0], [1], [0, 0, 1, 1], [], []>} : vector<32x144xbf16>, vector<144x128xbf16>, vector<32x128xf32> -> vector<32x128xf32>
    %c0_4 = arith.constant 0 : index
    %c0_5 = arith.constant 0 : index
    %6 = vector.load %arg3[%c0_4, %c0_5] : memref<32x128xf32, #tpu.memory_space<vmem>>, vector<32x128xf32>
    tpu.vector_store %arg3[%c0_4, %c0_5], %5 {strides = array<i32>} : memref<32x128xf32, #tpu.memory_space<vmem>>, vector<32x128xf32>,
    %c0_6 = arith.constant 0 : index
    %c0_7 = arith.constant 0 : index
    %7 = vector.load %arg4[%c0_6, %c0_7] : memref<32x1xf32, #tpu.memory_space<vmem>>, vector<32x1xf32>
    %cst_8 = arith.constant dense<0.000000e+00> : vector<32xf32>
    %8 = vector.multi_reduction <add>, %5, %cst_8 [1] : vector<32x128xf32> to vector<32xf32>
    %9 = vector.shape_cast %8 : vector<32xf32> to vector<32x1xf32>
    %10 = arith.addf %7, %9 : vector<32x1xf32>
    %c0_9 = arith.constant 0 : index
    %c0_10 = arith.constant 0 : index
    %11 = vector.load %arg4[%c0_9, %c0_10] : memref<32x1xf32, #tpu.memory_space<vmem>>, vector<32x1xf32>
    tpu.vector_store %arg4[%c0_9, %c0_10], %10 {strides = array<i32>} : memref<32x1xf32, #tpu.memory_space<vmem>>, vector<32x1xf32>,
    %c0_11 = arith.constant 0 : index
    %c0_12 = arith.constant 0 : index
    %12 = vector.load %arg5[%c0_11, %c0_12] : memref<32x1xf32, #tpu.memory_space<vmem>>, vector<32x1xf32>
    %13 = arith.mulf %5, %5 : vector<32x128xf32>
    %cst_13 = arith.constant dense<0.000000e+00> : vector<32xf32>
    %14 = vector.multi_reduction <add>, %13, %cst_13 [1] : vector<32x128xf32> to vector<32xf32>
    %15 = vector.shape_cast %14 : vector<32xf32> to vector<32x1xf32>
    %16 = arith.addf %12, %15 : vector<32x1xf32>
    %c0_14 = arith.constant 0 : index
    %c0_15 = arith.constant 0 : index
    %17 = vector.load %arg5[%c0_14, %c0_15] : memref<32x1xf32, #tpu.memory_space<vmem>>, vector<32x1xf32>
    tpu.vector_store %arg5[%c0_14, %c0_15], %16 {strides = array<i32>} : memref<32x1xf32, #tpu.memory_space<vmem>>, vector<32x1xf32>,
    return
  }
  func.func @transform_0(%arg0: i32) -> (i32, i32) {
    %c0_i32 = arith.constant 0 : i32
    %c0_i32_0 = arith.constant 0 : i32
    %c0_i32_1 = arith.constant 0 : i32
    return %c0_i32, %c0_i32_0 : i32, i32
  }
  func.func @transform_1(%arg0: i32) -> (i32, i32) {
    %c0_i32 = arith.constant 0 : i32
    %c0_i32_0 = arith.constant 0 : i32
    return %c0_i32, %arg0 : i32, i32
  }
  func.func @transform_2(%arg0: i32) -> (i32, i32) {
    %c0_i32 = arith.constant 0 : i32
    %c0_i32_0 = arith.constant 0 : i32
    return %c0_i32, %arg0 : i32, i32
  }
  func.func @transform_3(%arg0: i32) -> (i32, i32) {
    %c0_i32 = arith.constant 0 : i32
    %c0_i32_0 = arith.constant 0 : i32
    %c0_i32_1 = arith.constant 0 : i32
    return %c0_i32, %c0_i32_0 : i32, i32
  }
  func.func @transform_4(%arg0: i32) -> (i32, i32) {
    %c0_i32 = arith.constant 0 : i32
    %c0_i32_0 = arith.constant 0 : i32
    %c0_i32_1 = arith.constant 0 : i32
    return %c0_i32, %c0_i32_0 : i32, i32
  }
}

module attributes {stable_mosaic.version = 11 : i64} {
  func.func @_bn_act_kernel(%arg0: i32, %arg1: memref<32x128xf32, #tpu.memory_space<vmem>>, %arg2: memref<32x1xf32, #tpu.memory_space<vmem>>, %arg3: memref<32x1xf32, #tpu.memory_space<vmem>>, %arg4: memref<32x128xf32, #tpu.memory_space<vmem>>) attributes {dimension_semantics = [#tpu.dimension_semantics<parallel>], iteration_bounds = array<i64: 1>, scalar_prefetch = 0 : i64, scratch_operands = 0 : i64, tpu.core_type = #tpu.core_type<tc>, window_params = [{transform_indices = @transform_0, window_bounds = array<i64: 32, 128>}, {pipeline_mode = #tpu.pipeline_mode<synchronous>, transform_indices = @transform_1, window_bounds = array<i64: 32, 1>}, {pipeline_mode = #tpu.pipeline_mode<synchronous>, transform_indices = @transform_2, window_bounds = array<i64: 32, 1>}, {transform_indices = @transform_3, window_bounds = array<i64: 32, 128>}]} {
    %c0 = arith.constant 0 : index
    %c0_0 = arith.constant 0 : index
    %0 = vector.load %arg1[%c0, %c0_0] : memref<32x128xf32, #tpu.memory_space<vmem>>, vector<32x128xf32>
    %c0_1 = arith.constant 0 : index
    %c0_2 = arith.constant 0 : index
    %1 = vector.load %arg2[%c0_1, %c0_2] : memref<32x1xf32, #tpu.memory_space<vmem>>, vector<32x1xf32>
    %2 = vector.broadcast %1 : vector<32x1xf32> to vector<32x128xf32>
    %3 = arith.mulf %0, %2 : vector<32x128xf32>
    %c0_3 = arith.constant 0 : index
    %c0_4 = arith.constant 0 : index
    %4 = vector.load %arg3[%c0_3, %c0_4] : memref<32x1xf32, #tpu.memory_space<vmem>>, vector<32x1xf32>
    %5 = vector.broadcast %4 : vector<32x1xf32> to vector<32x128xf32>
    %6 = arith.addf %3, %5 : vector<32x128xf32>
    %cst = arith.constant 0.000000e+00 : f32
    %7 = vector.broadcast %cst : f32 to vector<32x128xf32>
    %8 = arith.cmpf oge, %6, %7 : vector<32x128xf32>
    %cst_5 = arith.constant 2.000000e-01 : f32
    %9 = vector.broadcast %cst_5 : f32 to vector<32x128xf32>
    %10 = arith.mulf %9, %6 : vector<32x128xf32>
    %11 = arith.select %8, %6, %10 : vector<32x128xi1>, vector<32x128xf32>
    %c0_6 = arith.constant 0 : index
    %c0_7 = arith.constant 0 : index
    %12 = vector.load %arg4[%c0_6, %c0_7] : memref<32x128xf32, #tpu.memory_space<vmem>>, vector<32x128xf32>
    tpu.vector_store %arg4[%c0_6, %c0_7], %11 {strides = array<i32>} : memref<32x128xf32, #tpu.memory_space<vmem>>, vector<32x128xf32>,
    return
  }
  func.func @transform_0(%arg0: i32) -> (i32, i32) {
    %c0_i32 = arith.constant 0 : i32
    %c0_i32_0 = arith.constant 0 : i32
    return %c0_i32, %arg0 : i32, i32
  }
  func.func @transform_1(%arg0: i32) -> (i32, i32) {
    %c0_i32 = arith.constant 0 : i32
    %c0_i32_0 = arith.constant 0 : i32
    %c0_i32_1 = arith.constant 0 : i32
    return %c0_i32, %c0_i32_0 : i32, i32
  }
  func.func @transform_2(%arg0: i32) -> (i32, i32) {
    %c0_i32 = arith.constant 0 : i32
    %c0_i32_0 = arith.constant 0 : i32
    %c0_i32_1 = arith.constant 0 : i32
    return %c0_i32, %c0_i32_0 : i32, i32
  }
  func.func @transform_3(%arg0: i32) -> (i32, i32) {
    %c0_i32 = arith.constant 0 : i32
    %c0_i32_0 = arith.constant 0 : i32
    return %c0_i32, %arg0 : i32, i32
  }
}

module attributes {stable_mosaic.version = 11 : i64} {
  func.func @_conv_stats_kernel(%arg0: i32, %arg1: memref<32x288xbf16, #tpu.memory_space<vmem>>, %arg2: memref<288x128xbf16, #tpu.memory_space<vmem>>, %arg3: memref<32x128xf32, #tpu.memory_space<vmem>>, %arg4: memref<32x1xf32, #tpu.memory_space<vmem>>, %arg5: memref<32x1xf32, #tpu.memory_space<vmem>>) attributes {dimension_semantics = [#tpu.dimension_semantics<arbitrary>], iteration_bounds = array<i64: 1>, scalar_prefetch = 0 : i64, scratch_operands = 0 : i64, tpu.core_type = #tpu.core_type<tc>, window_params = [{pipeline_mode = #tpu.pipeline_mode<synchronous>, transform_indices = @transform_0, window_bounds = array<i64: 32, 288>}, {transform_indices = @transform_1, window_bounds = array<i64: 288, 128>}, {transform_indices = @transform_2, window_bounds = array<i64: 32, 128>}, {pipeline_mode = #tpu.pipeline_mode<synchronous>, transform_indices = @transform_3, window_bounds = array<i64: 32, 1>}, {pipeline_mode = #tpu.pipeline_mode<synchronous>, transform_indices = @transform_4, window_bounds = array<i64: 32, 1>}]} {
    %c0_i32 = arith.constant 0 : i32
    %0 = arith.cmpi eq, %arg0, %c0_i32 : i32
    %1 = arith.extui %0 : i1 to i32
    %c0_i32_0 = arith.constant 0 : i32
    %2 = arith.cmpi ne, %1, %c0_i32_0 : i32
    scf.if %2 {
      %cst_16 = arith.constant 0.000000e+00 : f32
      %18 = vector.broadcast %cst_16 : f32 to vector<32x1xf32>
      %c0_17 = arith.constant 0 : index
      %c0_18 = arith.constant 0 : index
      %19 = vector.load %arg4[%c0_17, %c0_18] : memref<32x1xf32, #tpu.memory_space<vmem>>, vector<32x1xf32>
      tpu.vector_store %arg4[%c0_17, %c0_18], %18 {strides = array<i32>} : memref<32x1xf32, #tpu.memory_space<vmem>>, vector<32x1xf32>,
      %cst_19 = arith.constant 0.000000e+00 : f32
      %20 = vector.broadcast %cst_19 : f32 to vector<32x1xf32>
      %c0_20 = arith.constant 0 : index
      %c0_21 = arith.constant 0 : index
      %21 = vector.load %arg5[%c0_20, %c0_21] : memref<32x1xf32, #tpu.memory_space<vmem>>, vector<32x1xf32>
      tpu.vector_store %arg5[%c0_20, %c0_21], %20 {strides = array<i32>} : memref<32x1xf32, #tpu.memory_space<vmem>>, vector<32x1xf32>,
    } else {
    }
    %c0 = arith.constant 0 : index
    %c0_1 = arith.constant 0 : index
    %3 = vector.load %arg1[%c0, %c0_1] : memref<32x288xbf16, #tpu.memory_space<vmem>>, vector<32x288xbf16>
    %c0_2 = arith.constant 0 : index
    %c0_3 = arith.constant 0 : index
    %4 = vector.load %arg2[%c0_2, %c0_3] : memref<288x128xbf16, #tpu.memory_space<vmem>>, vector<288x128xbf16>
    %cst = arith.constant dense<0.000000e+00> : vector<32x128xf32>
    %5 = tpu.matmul %3, %4, %cst {dimension_numbers = #tpu.dot_dimension_numbers<[1], [0], [0], [1], [0, 0, 1, 1], [], []>} : vector<32x288xbf16>, vector<288x128xbf16>, vector<32x128xf32> -> vector<32x128xf32>
    %c0_4 = arith.constant 0 : index
    %c0_5 = arith.constant 0 : index
    %6 = vector.load %arg3[%c0_4, %c0_5] : memref<32x128xf32, #tpu.memory_space<vmem>>, vector<32x128xf32>
    tpu.vector_store %arg3[%c0_4, %c0_5], %5 {strides = array<i32>} : memref<32x128xf32, #tpu.memory_space<vmem>>, vector<32x128xf32>,
    %c0_6 = arith.constant 0 : index
    %c0_7 = arith.constant 0 : index
    %7 = vector.load %arg4[%c0_6, %c0_7] : memref<32x1xf32, #tpu.memory_space<vmem>>, vector<32x1xf32>
    %cst_8 = arith.constant dense<0.000000e+00> : vector<32xf32>
    %8 = vector.multi_reduction <add>, %5, %cst_8 [1] : vector<32x128xf32> to vector<32xf32>
    %9 = vector.shape_cast %8 : vector<32xf32> to vector<32x1xf32>
    %10 = arith.addf %7, %9 : vector<32x1xf32>
    %c0_9 = arith.constant 0 : index
    %c0_10 = arith.constant 0 : index
    %11 = vector.load %arg4[%c0_9, %c0_10] : memref<32x1xf32, #tpu.memory_space<vmem>>, vector<32x1xf32>
    tpu.vector_store %arg4[%c0_9, %c0_10], %10 {strides = array<i32>} : memref<32x1xf32, #tpu.memory_space<vmem>>, vector<32x1xf32>,
    %c0_11 = arith.constant 0 : index
    %c0_12 = arith.constant 0 : index
    %12 = vector.load %arg5[%c0_11, %c0_12] : memref<32x1xf32, #tpu.memory_space<vmem>>, vector<32x1xf32>
    %13 = arith.mulf %5, %5 : vector<32x128xf32>
    %cst_13 = arith.constant dense<0.000000e+00> : vector<32xf32>
    %14 = vector.multi_reduction <add>, %13, %cst_13 [1] : vector<32x128xf32> to vector<32xf32>
    %15 = vector.shape_cast %14 : vector<32xf32> to vector<32x1xf32>
    %16 = arith.addf %12, %15 : vector<32x1xf32>
    %c0_14 = arith.constant 0 : index
    %c0_15 = arith.constant 0 : index
    %17 = vector.load %arg5[%c0_14, %c0_15] : memref<32x1xf32, #tpu.memory_space<vmem>>, vector<32x1xf32>
    tpu.vector_store %arg5[%c0_14, %c0_15], %16 {strides = array<i32>} : memref<32x1xf32, #tpu.memory_space<vmem>>, vector<32x1xf32>,
    return
  }
  func.func @transform_0(%arg0: i32) -> (i32, i32) {
    %c0_i32 = arith.constant 0 : i32
    %c0_i32_0 = arith.constant 0 : i32
    %c0_i32_1 = arith.constant 0 : i32
    return %c0_i32, %c0_i32_0 : i32, i32
  }
  func.func @transform_1(%arg0: i32) -> (i32, i32) {
    %c0_i32 = arith.constant 0 : i32
    %c0_i32_0 = arith.constant 0 : i32
    return %c0_i32, %arg0 : i32, i32
  }
  func.func @transform_2(%arg0: i32) -> (i32, i32) {
    %c0_i32 = arith.constant 0 : i32
    %c0_i32_0 = arith.constant 0 : i32
    return %c0_i32, %arg0 : i32, i32
  }
  func.func @transform_3(%arg0: i32) -> (i32, i32) {
    %c0_i32 = arith.constant 0 : i32
    %c0_i32_0 = arith.constant 0 : i32
    %c0_i32_1 = arith.constant 0 : i32
    return %c0_i32, %c0_i32_0 : i32, i32
  }
  func.func @transform_4(%arg0: i32) -> (i32, i32) {
    %c0_i32 = arith.constant 0 : i32
    %c0_i32_0 = arith.constant 0 : i32
    %c0_i32_1 = arith.constant 0 : i32
    return %c0_i32, %c0_i32_0 : i32, i32
  }
}

module attributes {stable_mosaic.version = 11 : i64} {
  func.func @_conv_stats_kernel(%arg0: i32, %arg1: memref<32x288xbf16, #tpu.memory_space<vmem>>, %arg2: memref<288x128xbf16, #tpu.memory_space<vmem>>, %arg3: memref<32x128xf32, #tpu.memory_space<vmem>>, %arg4: memref<32x1xf32, #tpu.memory_space<vmem>>, %arg5: memref<32x1xf32, #tpu.memory_space<vmem>>) attributes {dimension_semantics = [#tpu.dimension_semantics<arbitrary>], iteration_bounds = array<i64: 1>, scalar_prefetch = 0 : i64, scratch_operands = 0 : i64, tpu.core_type = #tpu.core_type<tc>, window_params = [{pipeline_mode = #tpu.pipeline_mode<synchronous>, transform_indices = @transform_0, window_bounds = array<i64: 32, 288>}, {transform_indices = @transform_1, window_bounds = array<i64: 288, 128>}, {transform_indices = @transform_2, window_bounds = array<i64: 32, 128>}, {pipeline_mode = #tpu.pipeline_mode<synchronous>, transform_indices = @transform_3, window_bounds = array<i64: 32, 1>}, {pipeline_mode = #tpu.pipeline_mode<synchronous>, transform_indices = @transform_4, window_bounds = array<i64: 32, 1>}]} {
    %c0_i32 = arith.constant 0 : i32
    %0 = arith.cmpi eq, %arg0, %c0_i32 : i32
    %1 = arith.extui %0 : i1 to i32
    %c0_i32_0 = arith.constant 0 : i32
    %2 = arith.cmpi ne, %1, %c0_i32_0 : i32
    scf.if %2 {
      %cst_16 = arith.constant 0.000000e+00 : f32
      %18 = vector.broadcast %cst_16 : f32 to vector<32x1xf32>
      %c0_17 = arith.constant 0 : index
      %c0_18 = arith.constant 0 : index
      %19 = vector.load %arg4[%c0_17, %c0_18] : memref<32x1xf32, #tpu.memory_space<vmem>>, vector<32x1xf32>
      tpu.vector_store %arg4[%c0_17, %c0_18], %18 {strides = array<i32>} : memref<32x1xf32, #tpu.memory_space<vmem>>, vector<32x1xf32>,
      %cst_19 = arith.constant 0.000000e+00 : f32
      %20 = vector.broadcast %cst_19 : f32 to vector<32x1xf32>
      %c0_20 = arith.constant 0 : index
      %c0_21 = arith.constant 0 : index
      %21 = vector.load %arg5[%c0_20, %c0_21] : memref<32x1xf32, #tpu.memory_space<vmem>>, vector<32x1xf32>
      tpu.vector_store %arg5[%c0_20, %c0_21], %20 {strides = array<i32>} : memref<32x1xf32, #tpu.memory_space<vmem>>, vector<32x1xf32>,
    } else {
    }
    %c0 = arith.constant 0 : index
    %c0_1 = arith.constant 0 : index
    %3 = vector.load %arg1[%c0, %c0_1] : memref<32x288xbf16, #tpu.memory_space<vmem>>, vector<32x288xbf16>
    %c0_2 = arith.constant 0 : index
    %c0_3 = arith.constant 0 : index
    %4 = vector.load %arg2[%c0_2, %c0_3] : memref<288x128xbf16, #tpu.memory_space<vmem>>, vector<288x128xbf16>
    %cst = arith.constant dense<0.000000e+00> : vector<32x128xf32>
    %5 = tpu.matmul %3, %4, %cst {dimension_numbers = #tpu.dot_dimension_numbers<[1], [0], [0], [1], [0, 0, 1, 1], [], []>} : vector<32x288xbf16>, vector<288x128xbf16>, vector<32x128xf32> -> vector<32x128xf32>
    %c0_4 = arith.constant 0 : index
    %c0_5 = arith.constant 0 : index
    %6 = vector.load %arg3[%c0_4, %c0_5] : memref<32x128xf32, #tpu.memory_space<vmem>>, vector<32x128xf32>
    tpu.vector_store %arg3[%c0_4, %c0_5], %5 {strides = array<i32>} : memref<32x128xf32, #tpu.memory_space<vmem>>, vector<32x128xf32>,
    %c0_6 = arith.constant 0 : index
    %c0_7 = arith.constant 0 : index
    %7 = vector.load %arg4[%c0_6, %c0_7] : memref<32x1xf32, #tpu.memory_space<vmem>>, vector<32x1xf32>
    %cst_8 = arith.constant dense<0.000000e+00> : vector<32xf32>
    %8 = vector.multi_reduction <add>, %5, %cst_8 [1] : vector<32x128xf32> to vector<32xf32>
    %9 = vector.shape_cast %8 : vector<32xf32> to vector<32x1xf32>
    %10 = arith.addf %7, %9 : vector<32x1xf32>
    %c0_9 = arith.constant 0 : index
    %c0_10 = arith.constant 0 : index
    %11 = vector.load %arg4[%c0_9, %c0_10] : memref<32x1xf32, #tpu.memory_space<vmem>>, vector<32x1xf32>
    tpu.vector_store %arg4[%c0_9, %c0_10], %10 {strides = array<i32>} : memref<32x1xf32, #tpu.memory_space<vmem>>, vector<32x1xf32>,
    %c0_11 = arith.constant 0 : index
    %c0_12 = arith.constant 0 : index
    %12 = vector.load %arg5[%c0_11, %c0_12] : memref<32x1xf32, #tpu.memory_space<vmem>>, vector<32x1xf32>
    %13 = arith.mulf %5, %5 : vector<32x128xf32>
    %cst_13 = arith.constant dense<0.000000e+00> : vector<32xf32>
    %14 = vector.multi_reduction <add>, %13, %cst_13 [1] : vector<32x128xf32> to vector<32xf32>
    %15 = vector.shape_cast %14 : vector<32xf32> to vector<32x1xf32>
    %16 = arith.addf %12, %15 : vector<32x1xf32>
    %c0_14 = arith.constant 0 : index
    %c0_15 = arith.constant 0 : index
    %17 = vector.load %arg5[%c0_14, %c0_15] : memref<32x1xf32, #tpu.memory_space<vmem>>, vector<32x1xf32>
    tpu.vector_store %arg5[%c0_14, %c0_15], %16 {strides = array<i32>} : memref<32x1xf32, #tpu.memory_space<vmem>>, vector<32x1xf32>,
    return
  }
  func.func @transform_0(%arg0: i32) -> (i32, i32) {
    %c0_i32 = arith.constant 0 : i32
    %c0_i32_0 = arith.constant 0 : i32
    %c0_i32_1 = arith.constant 0 : i32
    return %c0_i32, %c0_i32_0 : i32, i32
  }
  func.func @transform_1(%arg0: i32) -> (i32, i32) {
    %c0_i32 = arith.constant 0 : i32
    %c0_i32_0 = arith.constant 0 : i32
    return %c0_i32, %arg0 : i32, i32
  }
  func.func @transform_2(%arg0: i32) -> (i32, i32) {
    %c0_i32 = arith.constant 0 : i32
    %c0_i32_0 = arith.constant 0 : i32
    return %c0_i32, %arg0 : i32, i32
  }
  func.func @transform_3(%arg0: i32) -> (i32, i32) {
    %c0_i32 = arith.constant 0 : i32
    %c0_i32_0 = arith.constant 0 : i32
    %c0_i32_1 = arith.constant 0 : i32
    return %c0_i32, %c0_i32_0 : i32, i32
  }
  func.func @transform_4(%arg0: i32) -> (i32, i32) {
    %c0_i32 = arith.constant 0 : i32
    %c0_i32_0 = arith.constant 0 : i32
    %c0_i32_1 = arith.constant 0 : i32
    return %c0_i32, %c0_i32_0 : i32, i32
  }
}

module attributes {stable_mosaic.version = 11 : i64} {
  func.func @_conv_stats_kernel(%arg0: i32, %arg1: memref<32x288xbf16, #tpu.memory_space<vmem>>, %arg2: memref<288x512xbf16, #tpu.memory_space<vmem>>, %arg3: memref<32x512xf32, #tpu.memory_space<vmem>>, %arg4: memref<32x1xf32, #tpu.memory_space<vmem>>, %arg5: memref<32x1xf32, #tpu.memory_space<vmem>>) attributes {dimension_semantics = [#tpu.dimension_semantics<arbitrary>], iteration_bounds = array<i64: 1>, scalar_prefetch = 0 : i64, scratch_operands = 0 : i64, tpu.core_type = #tpu.core_type<tc>, window_params = [{pipeline_mode = #tpu.pipeline_mode<synchronous>, transform_indices = @transform_0, window_bounds = array<i64: 32, 288>}, {transform_indices = @transform_1, window_bounds = array<i64: 288, 512>}, {transform_indices = @transform_2, window_bounds = array<i64: 32, 512>}, {pipeline_mode = #tpu.pipeline_mode<synchronous>, transform_indices = @transform_3, window_bounds = array<i64: 32, 1>}, {pipeline_mode = #tpu.pipeline_mode<synchronous>, transform_indices = @transform_4, window_bounds = array<i64: 32, 1>}]} {
    %c0_i32 = arith.constant 0 : i32
    %0 = arith.cmpi eq, %arg0, %c0_i32 : i32
    %1 = arith.extui %0 : i1 to i32
    %c0_i32_0 = arith.constant 0 : i32
    %2 = arith.cmpi ne, %1, %c0_i32_0 : i32
    scf.if %2 {
      %cst_16 = arith.constant 0.000000e+00 : f32
      %18 = vector.broadcast %cst_16 : f32 to vector<32x1xf32>
      %c0_17 = arith.constant 0 : index
      %c0_18 = arith.constant 0 : index
      %19 = vector.load %arg4[%c0_17, %c0_18] : memref<32x1xf32, #tpu.memory_space<vmem>>, vector<32x1xf32>
      tpu.vector_store %arg4[%c0_17, %c0_18], %18 {strides = array<i32>} : memref<32x1xf32, #tpu.memory_space<vmem>>, vector<32x1xf32>,
      %cst_19 = arith.constant 0.000000e+00 : f32
      %20 = vector.broadcast %cst_19 : f32 to vector<32x1xf32>
      %c0_20 = arith.constant 0 : index
      %c0_21 = arith.constant 0 : index
      %21 = vector.load %arg5[%c0_20, %c0_21] : memref<32x1xf32, #tpu.memory_space<vmem>>, vector<32x1xf32>
      tpu.vector_store %arg5[%c0_20, %c0_21], %20 {strides = array<i32>} : memref<32x1xf32, #tpu.memory_space<vmem>>, vector<32x1xf32>,
    } else {
    }
    %c0 = arith.constant 0 : index
    %c0_1 = arith.constant 0 : index
    %3 = vector.load %arg1[%c0, %c0_1] : memref<32x288xbf16, #tpu.memory_space<vmem>>, vector<32x288xbf16>
    %c0_2 = arith.constant 0 : index
    %c0_3 = arith.constant 0 : index
    %4 = vector.load %arg2[%c0_2, %c0_3] : memref<288x512xbf16, #tpu.memory_space<vmem>>, vector<288x512xbf16>
    %cst = arith.constant dense<0.000000e+00> : vector<32x512xf32>
    %5 = tpu.matmul %3, %4, %cst {dimension_numbers = #tpu.dot_dimension_numbers<[1], [0], [0], [1], [0, 0, 1, 1], [], []>} : vector<32x288xbf16>, vector<288x512xbf16>, vector<32x512xf32> -> vector<32x512xf32>
    %c0_4 = arith.constant 0 : index
    %c0_5 = arith.constant 0 : index
    %6 = vector.load %arg3[%c0_4, %c0_5] : memref<32x512xf32, #tpu.memory_space<vmem>>, vector<32x512xf32>
    tpu.vector_store %arg3[%c0_4, %c0_5], %5 {strides = array<i32>} : memref<32x512xf32, #tpu.memory_space<vmem>>, vector<32x512xf32>,
    %c0_6 = arith.constant 0 : index
    %c0_7 = arith.constant 0 : index
    %7 = vector.load %arg4[%c0_6, %c0_7] : memref<32x1xf32, #tpu.memory_space<vmem>>, vector<32x1xf32>
    %cst_8 = arith.constant dense<0.000000e+00> : vector<32xf32>
    %8 = vector.multi_reduction <add>, %5, %cst_8 [1] : vector<32x512xf32> to vector<32xf32>
    %9 = vector.shape_cast %8 : vector<32xf32> to vector<32x1xf32>
    %10 = arith.addf %7, %9 : vector<32x1xf32>
    %c0_9 = arith.constant 0 : index
    %c0_10 = arith.constant 0 : index
    %11 = vector.load %arg4[%c0_9, %c0_10] : memref<32x1xf32, #tpu.memory_space<vmem>>, vector<32x1xf32>
    tpu.vector_store %arg4[%c0_9, %c0_10], %10 {strides = array<i32>} : memref<32x1xf32, #tpu.memory_space<vmem>>, vector<32x1xf32>,
    %c0_11 = arith.constant 0 : index
    %c0_12 = arith.constant 0 : index
    %12 = vector.load %arg5[%c0_11, %c0_12] : memref<32x1xf32, #tpu.memory_space<vmem>>, vector<32x1xf32>
    %13 = arith.mulf %5, %5 : vector<32x512xf32>
    %cst_13 = arith.constant dense<0.000000e+00> : vector<32xf32>
    %14 = vector.multi_reduction <add>, %13, %cst_13 [1] : vector<32x512xf32> to vector<32xf32>
    %15 = vector.shape_cast %14 : vector<32xf32> to vector<32x1xf32>
    %16 = arith.addf %12, %15 : vector<32x1xf32>
    %c0_14 = arith.constant 0 : index
    %c0_15 = arith.constant 0 : index
    %17 = vector.load %arg5[%c0_14, %c0_15] : memref<32x1xf32, #tpu.memory_space<vmem>>, vector<32x1xf32>
    tpu.vector_store %arg5[%c0_14, %c0_15], %16 {strides = array<i32>} : memref<32x1xf32, #tpu.memory_space<vmem>>, vector<32x1xf32>,
    return
  }
  func.func @transform_0(%arg0: i32) -> (i32, i32) {
    %c0_i32 = arith.constant 0 : i32
    %c0_i32_0 = arith.constant 0 : i32
    %c0_i32_1 = arith.constant 0 : i32
    return %c0_i32, %c0_i32_0 : i32, i32
  }
  func.func @transform_1(%arg0: i32) -> (i32, i32) {
    %c0_i32 = arith.constant 0 : i32
    %c0_i32_0 = arith.constant 0 : i32
    return %c0_i32, %arg0 : i32, i32
  }
  func.func @transform_2(%arg0: i32) -> (i32, i32) {
    %c0_i32 = arith.constant 0 : i32
    %c0_i32_0 = arith.constant 0 : i32
    return %c0_i32, %arg0 : i32, i32
  }
  func.func @transform_3(%arg0: i32) -> (i32, i32) {
    %c0_i32 = arith.constant 0 : i32
    %c0_i32_0 = arith.constant 0 : i32
    %c0_i32_1 = arith.constant 0 : i32
    return %c0_i32, %c0_i32_0 : i32, i32
  }
  func.func @transform_4(%arg0: i32) -> (i32, i32) {
    %c0_i32 = arith.constant 0 : i32
    %c0_i32_0 = arith.constant 0 : i32
    %c0_i32_1 = arith.constant 0 : i32
    return %c0_i32, %c0_i32_0 : i32, i32
  }
}

module attributes {stable_mosaic.version = 11 : i64} {
  func.func @_bn_act_kernel(%arg0: i32, %arg1: memref<32x512xf32, #tpu.memory_space<vmem>>, %arg2: memref<32x1xf32, #tpu.memory_space<vmem>>, %arg3: memref<32x1xf32, #tpu.memory_space<vmem>>, %arg4: memref<32x512xf32, #tpu.memory_space<vmem>>) attributes {dimension_semantics = [#tpu.dimension_semantics<parallel>], iteration_bounds = array<i64: 1>, scalar_prefetch = 0 : i64, scratch_operands = 0 : i64, tpu.core_type = #tpu.core_type<tc>, window_params = [{transform_indices = @transform_0, window_bounds = array<i64: 32, 512>}, {pipeline_mode = #tpu.pipeline_mode<synchronous>, transform_indices = @transform_1, window_bounds = array<i64: 32, 1>}, {pipeline_mode = #tpu.pipeline_mode<synchronous>, transform_indices = @transform_2, window_bounds = array<i64: 32, 1>}, {transform_indices = @transform_3, window_bounds = array<i64: 32, 512>}]} {
    %c0 = arith.constant 0 : index
    %c0_0 = arith.constant 0 : index
    %0 = vector.load %arg1[%c0, %c0_0] : memref<32x512xf32, #tpu.memory_space<vmem>>, vector<32x512xf32>
    %c0_1 = arith.constant 0 : index
    %c0_2 = arith.constant 0 : index
    %1 = vector.load %arg2[%c0_1, %c0_2] : memref<32x1xf32, #tpu.memory_space<vmem>>, vector<32x1xf32>
    %2 = vector.broadcast %1 : vector<32x1xf32> to vector<32x512xf32>
    %3 = arith.mulf %0, %2 : vector<32x512xf32>
    %c0_3 = arith.constant 0 : index
    %c0_4 = arith.constant 0 : index
    %4 = vector.load %arg3[%c0_3, %c0_4] : memref<32x1xf32, #tpu.memory_space<vmem>>, vector<32x1xf32>
    %5 = vector.broadcast %4 : vector<32x1xf32> to vector<32x512xf32>
    %6 = arith.addf %3, %5 : vector<32x512xf32>
    %cst = arith.constant 0.000000e+00 : f32
    %7 = vector.broadcast %cst : f32 to vector<32x512xf32>
    %8 = arith.cmpf oge, %6, %7 : vector<32x512xf32>
    %cst_5 = arith.constant 2.000000e-01 : f32
    %9 = vector.broadcast %cst_5 : f32 to vector<32x512xf32>
    %10 = arith.mulf %9, %6 : vector<32x512xf32>
    %11 = arith.select %8, %6, %10 : vector<32x512xi1>, vector<32x512xf32>
    %c0_6 = arith.constant 0 : index
    %c0_7 = arith.constant 0 : index
    %12 = vector.load %arg4[%c0_6, %c0_7] : memref<32x512xf32, #tpu.memory_space<vmem>>, vector<32x512xf32>
    tpu.vector_store %arg4[%c0_6, %c0_7], %11 {strides = array<i32>} : memref<32x512xf32, #tpu.memory_space<vmem>>, vector<32x512xf32>,
    return
  }
  func.func @transform_0(%arg0: i32) -> (i32, i32) {
    %c0_i32 = arith.constant 0 : i32
    %c0_i32_0 = arith.constant 0 : i32
    return %c0_i32, %arg0 : i32, i32
  }
  func.func @transform_1(%arg0: i32) -> (i32, i32) {
    %c0_i32 = arith.constant 0 : i32
    %c0_i32_0 = arith.constant 0 : i32
    %c0_i32_1 = arith.constant 0 : i32
    return %c0_i32, %c0_i32_0 : i32, i32
  }
  func.func @transform_2(%arg0: i32) -> (i32, i32) {
    %c0_i32 = arith.constant 0 : i32
    %c0_i32_0 = arith.constant 0 : i32
    %c0_i32_1 = arith.constant 0 : i32
    return %c0_i32, %c0_i32_0 : i32, i32
  }
  func.func @transform_3(%arg0: i32) -> (i32, i32) {
    %c0_i32 = arith.constant 0 : i32
    %c0_i32_0 = arith.constant 0 : i32
    return %c0_i32, %arg0 : i32, i32
  }
}

module attributes {stable_mosaic.version = 11 : i64} {
  func.func @_conv_stats_kernel(%arg0: i32, %arg1: memref<16x288xbf16, #tpu.memory_space<vmem>>, %arg2: memref<288x512xbf16, #tpu.memory_space<vmem>>, %arg3: memref<16x512xf32, #tpu.memory_space<vmem>>, %arg4: memref<16x1xf32, #tpu.memory_space<vmem>>, %arg5: memref<16x1xf32, #tpu.memory_space<vmem>>) attributes {dimension_semantics = [#tpu.dimension_semantics<arbitrary>], iteration_bounds = array<i64: 4>, scalar_prefetch = 0 : i64, scratch_operands = 0 : i64, tpu.core_type = #tpu.core_type<tc>, window_params = [{pipeline_mode = #tpu.pipeline_mode<synchronous>, transform_indices = @transform_0, window_bounds = array<i64: 16, 288>}, {transform_indices = @transform_1, window_bounds = array<i64: 288, 512>}, {transform_indices = @transform_2, window_bounds = array<i64: 16, 512>}, {pipeline_mode = #tpu.pipeline_mode<synchronous>, transform_indices = @transform_3, window_bounds = array<i64: 16, 1>}, {pipeline_mode = #tpu.pipeline_mode<synchronous>, transform_indices = @transform_4, window_bounds = array<i64: 16, 1>}]} {
    %c0_i32 = arith.constant 0 : i32
    %0 = arith.cmpi eq, %arg0, %c0_i32 : i32
    %1 = arith.extui %0 : i1 to i32
    %c0_i32_0 = arith.constant 0 : i32
    %2 = arith.cmpi ne, %1, %c0_i32_0 : i32
    scf.if %2 {
      %cst_16 = arith.constant 0.000000e+00 : f32
      %18 = vector.broadcast %cst_16 : f32 to vector<16x1xf32>
      %c0_17 = arith.constant 0 : index
      %c0_18 = arith.constant 0 : index
      %19 = vector.load %arg4[%c0_17, %c0_18] : memref<16x1xf32, #tpu.memory_space<vmem>>, vector<16x1xf32>
      tpu.vector_store %arg4[%c0_17, %c0_18], %18 {strides = array<i32>} : memref<16x1xf32, #tpu.memory_space<vmem>>, vector<16x1xf32>,
      %cst_19 = arith.constant 0.000000e+00 : f32
      %20 = vector.broadcast %cst_19 : f32 to vector<16x1xf32>
      %c0_20 = arith.constant 0 : index
      %c0_21 = arith.constant 0 : index
      %21 = vector.load %arg5[%c0_20, %c0_21] : memref<16x1xf32, #tpu.memory_space<vmem>>, vector<16x1xf32>
      tpu.vector_store %arg5[%c0_20, %c0_21], %20 {strides = array<i32>} : memref<16x1xf32, #tpu.memory_space<vmem>>, vector<16x1xf32>,
    } else {
    }
    %c0 = arith.constant 0 : index
    %c0_1 = arith.constant 0 : index
    %3 = vector.load %arg1[%c0, %c0_1] : memref<16x288xbf16, #tpu.memory_space<vmem>>, vector<16x288xbf16>
    %c0_2 = arith.constant 0 : index
    %c0_3 = arith.constant 0 : index
    %4 = vector.load %arg2[%c0_2, %c0_3] : memref<288x512xbf16, #tpu.memory_space<vmem>>, vector<288x512xbf16>
    %cst = arith.constant dense<0.000000e+00> : vector<16x512xf32>
    %5 = tpu.matmul %3, %4, %cst {dimension_numbers = #tpu.dot_dimension_numbers<[1], [0], [0], [1], [0, 0, 1, 1], [], []>} : vector<16x288xbf16>, vector<288x512xbf16>, vector<16x512xf32> -> vector<16x512xf32>
    %c0_4 = arith.constant 0 : index
    %c0_5 = arith.constant 0 : index
    %6 = vector.load %arg3[%c0_4, %c0_5] : memref<16x512xf32, #tpu.memory_space<vmem>>, vector<16x512xf32>
    tpu.vector_store %arg3[%c0_4, %c0_5], %5 {strides = array<i32>} : memref<16x512xf32, #tpu.memory_space<vmem>>, vector<16x512xf32>,
    %c0_6 = arith.constant 0 : index
    %c0_7 = arith.constant 0 : index
    %7 = vector.load %arg4[%c0_6, %c0_7] : memref<16x1xf32, #tpu.memory_space<vmem>>, vector<16x1xf32>
    %cst_8 = arith.constant dense<0.000000e+00> : vector<16xf32>
    %8 = vector.multi_reduction <add>, %5, %cst_8 [1] : vector<16x512xf32> to vector<16xf32>
    %9 = vector.shape_cast %8 : vector<16xf32> to vector<16x1xf32>
    %10 = arith.addf %7, %9 : vector<16x1xf32>
    %c0_9 = arith.constant 0 : index
    %c0_10 = arith.constant 0 : index
    %11 = vector.load %arg4[%c0_9, %c0_10] : memref<16x1xf32, #tpu.memory_space<vmem>>, vector<16x1xf32>
    tpu.vector_store %arg4[%c0_9, %c0_10], %10 {strides = array<i32>} : memref<16x1xf32, #tpu.memory_space<vmem>>, vector<16x1xf32>,
    %c0_11 = arith.constant 0 : index
    %c0_12 = arith.constant 0 : index
    %12 = vector.load %arg5[%c0_11, %c0_12] : memref<16x1xf32, #tpu.memory_space<vmem>>, vector<16x1xf32>
    %13 = arith.mulf %5, %5 : vector<16x512xf32>
    %cst_13 = arith.constant dense<0.000000e+00> : vector<16xf32>
    %14 = vector.multi_reduction <add>, %13, %cst_13 [1] : vector<16x512xf32> to vector<16xf32>
    %15 = vector.shape_cast %14 : vector<16xf32> to vector<16x1xf32>
    %16 = arith.addf %12, %15 : vector<16x1xf32>
    %c0_14 = arith.constant 0 : index
    %c0_15 = arith.constant 0 : index
    %17 = vector.load %arg5[%c0_14, %c0_15] : memref<16x1xf32, #tpu.memory_space<vmem>>, vector<16x1xf32>
    tpu.vector_store %arg5[%c0_14, %c0_15], %16 {strides = array<i32>} : memref<16x1xf32, #tpu.memory_space<vmem>>, vector<16x1xf32>,
    return
  }
  func.func @transform_0(%arg0: i32) -> (i32, i32) {
    %c0_i32 = arith.constant 0 : i32
    %c0_i32_0 = arith.constant 0 : i32
    %c0_i32_1 = arith.constant 0 : i32
    return %c0_i32, %c0_i32_0 : i32, i32
  }
  func.func @transform_1(%arg0: i32) -> (i32, i32) {
    %c0_i32 = arith.constant 0 : i32
    %c0_i32_0 = arith.constant 0 : i32
    return %c0_i32, %arg0 : i32, i32
  }
  func.func @transform_2(%arg0: i32) -> (i32, i32) {
    %c0_i32 = arith.constant 0 : i32
    %c0_i32_0 = arith.constant 0 : i32
    return %c0_i32, %arg0 : i32, i32
  }
  func.func @transform_3(%arg0: i32) -> (i32, i32) {
    %c0_i32 = arith.constant 0 : i32
    %c0_i32_0 = arith.constant 0 : i32
    %c0_i32_1 = arith.constant 0 : i32
    return %c0_i32, %c0_i32_0 : i32, i32
  }
  func.func @transform_4(%arg0: i32) -> (i32, i32) {
    %c0_i32 = arith.constant 0 : i32
    %c0_i32_0 = arith.constant 0 : i32
    %c0_i32_1 = arith.constant 0 : i32
    return %c0_i32, %c0_i32_0 : i32, i32
  }
}

module attributes {stable_mosaic.version = 11 : i64} {
  func.func @_bn_act_kernel(%arg0: i32, %arg1: memref<16x512xf32, #tpu.memory_space<vmem>>, %arg2: memref<16x1xf32, #tpu.memory_space<vmem>>, %arg3: memref<16x1xf32, #tpu.memory_space<vmem>>, %arg4: memref<16x512xf32, #tpu.memory_space<vmem>>) attributes {dimension_semantics = [#tpu.dimension_semantics<parallel>], iteration_bounds = array<i64: 4>, scalar_prefetch = 0 : i64, scratch_operands = 0 : i64, tpu.core_type = #tpu.core_type<tc>, window_params = [{transform_indices = @transform_0, window_bounds = array<i64: 16, 512>}, {pipeline_mode = #tpu.pipeline_mode<synchronous>, transform_indices = @transform_1, window_bounds = array<i64: 16, 1>}, {pipeline_mode = #tpu.pipeline_mode<synchronous>, transform_indices = @transform_2, window_bounds = array<i64: 16, 1>}, {transform_indices = @transform_3, window_bounds = array<i64: 16, 512>}]} {
    %c0 = arith.constant 0 : index
    %c0_0 = arith.constant 0 : index
    %0 = vector.load %arg1[%c0, %c0_0] : memref<16x512xf32, #tpu.memory_space<vmem>>, vector<16x512xf32>
    %c0_1 = arith.constant 0 : index
    %c0_2 = arith.constant 0 : index
    %1 = vector.load %arg2[%c0_1, %c0_2] : memref<16x1xf32, #tpu.memory_space<vmem>>, vector<16x1xf32>
    %2 = vector.broadcast %1 : vector<16x1xf32> to vector<16x512xf32>
    %3 = arith.mulf %0, %2 : vector<16x512xf32>
    %c0_3 = arith.constant 0 : index
    %c0_4 = arith.constant 0 : index
    %4 = vector.load %arg3[%c0_3, %c0_4] : memref<16x1xf32, #tpu.memory_space<vmem>>, vector<16x1xf32>
    %5 = vector.broadcast %4 : vector<16x1xf32> to vector<16x512xf32>
    %6 = arith.addf %3, %5 : vector<16x512xf32>
    %cst = arith.constant 0.000000e+00 : f32
    %7 = vector.broadcast %cst : f32 to vector<16x512xf32>
    %8 = arith.cmpf oge, %6, %7 : vector<16x512xf32>
    %cst_5 = arith.constant 2.000000e-01 : f32
    %9 = vector.broadcast %cst_5 : f32 to vector<16x512xf32>
    %10 = arith.mulf %9, %6 : vector<16x512xf32>
    %11 = arith.select %8, %6, %10 : vector<16x512xi1>, vector<16x512xf32>
    %c0_6 = arith.constant 0 : index
    %c0_7 = arith.constant 0 : index
    %12 = vector.load %arg4[%c0_6, %c0_7] : memref<16x512xf32, #tpu.memory_space<vmem>>, vector<16x512xf32>
    tpu.vector_store %arg4[%c0_6, %c0_7], %11 {strides = array<i32>} : memref<16x512xf32, #tpu.memory_space<vmem>>, vector<16x512xf32>,
    return
  }
  func.func @transform_0(%arg0: i32) -> (i32, i32) {
    %c0_i32 = arith.constant 0 : i32
    %c0_i32_0 = arith.constant 0 : i32
    return %c0_i32, %arg0 : i32, i32
  }
  func.func @transform_1(%arg0: i32) -> (i32, i32) {
    %c0_i32 = arith.constant 0 : i32
    %c0_i32_0 = arith.constant 0 : i32
    %c0_i32_1 = arith.constant 0 : i32
    return %c0_i32, %c0_i32_0 : i32, i32
  }
  func.func @transform_2(%arg0: i32) -> (i32, i32) {
    %c0_i32 = arith.constant 0 : i32
    %c0_i32_0 = arith.constant 0 : i32
    %c0_i32_1 = arith.constant 0 : i32
    return %c0_i32, %c0_i32_0 : i32, i32
  }
  func.func @transform_3(%arg0: i32) -> (i32, i32) {
    %c0_i32 = arith.constant 0 : i32
    %c0_i32_0 = arith.constant 0 : i32
    return %c0_i32, %arg0 : i32, i32
  }
}

module attributes {stable_mosaic.version = 11 : i64} {
  func.func @_conv_stats_kernel(%arg0: i32, %arg1: memref<1x144xbf16, #tpu.memory_space<vmem>>, %arg2: memref<144x512xbf16, #tpu.memory_space<vmem>>, %arg3: memref<1x512xf32, #tpu.memory_space<vmem>>, %arg4: memref<1x1xf32, #tpu.memory_space<vmem>>, %arg5: memref<1x1xf32, #tpu.memory_space<vmem>>) attributes {dimension_semantics = [#tpu.dimension_semantics<arbitrary>], iteration_bounds = array<i64: 4>, scalar_prefetch = 0 : i64, scratch_operands = 0 : i64, tpu.core_type = #tpu.core_type<tc>, window_params = [{pipeline_mode = #tpu.pipeline_mode<synchronous>, transform_indices = @transform_0, window_bounds = array<i64: 1, 144>}, {transform_indices = @transform_1, window_bounds = array<i64: 144, 512>}, {transform_indices = @transform_2, window_bounds = array<i64: 1, 512>}, {pipeline_mode = #tpu.pipeline_mode<synchronous>, transform_indices = @transform_3, window_bounds = array<i64: 1, 1>}, {pipeline_mode = #tpu.pipeline_mode<synchronous>, transform_indices = @transform_4, window_bounds = array<i64: 1, 1>}]} {
    %c0_i32 = arith.constant 0 : i32
    %0 = arith.cmpi eq, %arg0, %c0_i32 : i32
    %1 = arith.extui %0 : i1 to i32
    %c0_i32_0 = arith.constant 0 : i32
    %2 = arith.cmpi ne, %1, %c0_i32_0 : i32
    scf.if %2 {
      %cst_16 = arith.constant 0.000000e+00 : f32
      %18 = vector.broadcast %cst_16 : f32 to vector<1x1xf32>
      %c0_17 = arith.constant 0 : index
      %c0_18 = arith.constant 0 : index
      %19 = vector.load %arg4[%c0_17, %c0_18] : memref<1x1xf32, #tpu.memory_space<vmem>>, vector<1x1xf32>
      tpu.vector_store %arg4[%c0_17, %c0_18], %18 {strides = array<i32>} : memref<1x1xf32, #tpu.memory_space<vmem>>, vector<1x1xf32>,
      %cst_19 = arith.constant 0.000000e+00 : f32
      %20 = vector.broadcast %cst_19 : f32 to vector<1x1xf32>
      %c0_20 = arith.constant 0 : index
      %c0_21 = arith.constant 0 : index
      %21 = vector.load %arg5[%c0_20, %c0_21] : memref<1x1xf32, #tpu.memory_space<vmem>>, vector<1x1xf32>
      tpu.vector_store %arg5[%c0_20, %c0_21], %20 {strides = array<i32>} : memref<1x1xf32, #tpu.memory_space<vmem>>, vector<1x1xf32>,
    } else {
    }
    %c0 = arith.constant 0 : index
    %c0_1 = arith.constant 0 : index
    %3 = vector.load %arg1[%c0, %c0_1] : memref<1x144xbf16, #tpu.memory_space<vmem>>, vector<1x144xbf16>
    %c0_2 = arith.constant 0 : index
    %c0_3 = arith.constant 0 : index
    %4 = vector.load %arg2[%c0_2, %c0_3] : memref<144x512xbf16, #tpu.memory_space<vmem>>, vector<144x512xbf16>
    %cst = arith.constant dense<0.000000e+00> : vector<1x512xf32>
    %5 = tpu.matmul %3, %4, %cst {dimension_numbers = #tpu.dot_dimension_numbers<[1], [0], [0], [1], [0, 0, 1, 1], [], []>} : vector<1x144xbf16>, vector<144x512xbf16>, vector<1x512xf32> -> vector<1x512xf32>
    %c0_4 = arith.constant 0 : index
    %c0_5 = arith.constant 0 : index
    %6 = vector.load %arg3[%c0_4, %c0_5] : memref<1x512xf32, #tpu.memory_space<vmem>>, vector<1x512xf32>
    tpu.vector_store %arg3[%c0_4, %c0_5], %5 {strides = array<i32>} : memref<1x512xf32, #tpu.memory_space<vmem>>, vector<1x512xf32>,
    %c0_6 = arith.constant 0 : index
    %c0_7 = arith.constant 0 : index
    %7 = vector.load %arg4[%c0_6, %c0_7] : memref<1x1xf32, #tpu.memory_space<vmem>>, vector<1x1xf32>
    %cst_8 = arith.constant dense<0.000000e+00> : vector<1xf32>
    %8 = vector.multi_reduction <add>, %5, %cst_8 [1] : vector<1x512xf32> to vector<1xf32>
    %9 = vector.shape_cast %8 : vector<1xf32> to vector<1x1xf32>
    %10 = arith.addf %7, %9 : vector<1x1xf32>
    %c0_9 = arith.constant 0 : index
    %c0_10 = arith.constant 0 : index
    %11 = vector.load %arg4[%c0_9, %c0_10] : memref<1x1xf32, #tpu.memory_space<vmem>>, vector<1x1xf32>
    tpu.vector_store %arg4[%c0_9, %c0_10], %10 {strides = array<i32>} : memref<1x1xf32, #tpu.memory_space<vmem>>, vector<1x1xf32>,
    %c0_11 = arith.constant 0 : index
    %c0_12 = arith.constant 0 : index
    %12 = vector.load %arg5[%c0_11, %c0_12] : memref<1x1xf32, #tpu.memory_space<vmem>>, vector<1x1xf32>
    %13 = arith.mulf %5, %5 : vector<1x512xf32>
    %cst_13 = arith.constant dense<0.000000e+00> : vector<1xf32>
    %14 = vector.multi_reduction <add>, %13, %cst_13 [1] : vector<1x512xf32> to vector<1xf32>
    %15 = vector.shape_cast %14 : vector<1xf32> to vector<1x1xf32>
    %16 = arith.addf %12, %15 : vector<1x1xf32>
    %c0_14 = arith.constant 0 : index
    %c0_15 = arith.constant 0 : index
    %17 = vector.load %arg5[%c0_14, %c0_15] : memref<1x1xf32, #tpu.memory_space<vmem>>, vector<1x1xf32>
    tpu.vector_store %arg5[%c0_14, %c0_15], %16 {strides = array<i32>} : memref<1x1xf32, #tpu.memory_space<vmem>>, vector<1x1xf32>,
    return
  }
  func.func @transform_0(%arg0: i32) -> (i32, i32) {
    %c0_i32 = arith.constant 0 : i32
    %c0_i32_0 = arith.constant 0 : i32
    %c0_i32_1 = arith.constant 0 : i32
    return %c0_i32, %c0_i32_0 : i32, i32
  }
  func.func @transform_1(%arg0: i32) -> (i32, i32) {
    %c0_i32 = arith.constant 0 : i32
    %c0_i32_0 = arith.constant 0 : i32
    return %c0_i32, %arg0 : i32, i32
  }
  func.func @transform_2(%arg0: i32) -> (i32, i32) {
    %c0_i32 = arith.constant 0 : i32
    %c0_i32_0 = arith.constant 0 : i32
    return %c0_i32, %arg0 : i32, i32
  }
  func.func @transform_3(%arg0: i32) -> (i32, i32) {
    %c0_i32 = arith.constant 0 : i32
    %c0_i32_0 = arith.constant 0 : i32
    %c0_i32_1 = arith.constant 0 : i32
    return %c0_i32, %c0_i32_0 : i32, i32
  }
  func.func @transform_4(%arg0: i32) -> (i32, i32) {
    %c0_i32 = arith.constant 0 : i32
    %c0_i32_0 = arith.constant 0 : i32
    %c0_i32_1 = arith.constant 0 : i32
    return %c0_i32, %c0_i32_0 : i32, i32
  }
}

</mosaic_0001>

<llo_original>
// kernel: dn_autoencoder_forward.21
$region0: #{dn_autoencoder_forward.21}
  #allocation0 [shape = 'u32[]', space=smem, size = 0x4, offset = 0x4, fixed_abs, tag = 'smem constant byte address 0x4 - core index']
  #allocation1 [shape = 'u32[144,128]{1,0:T(1,128)}', space=vmem, size = 0x12000, scoped, tag = 'internal scratch']
  %s0 = inlined_call_operand.vmem [shape: f32[16,512], index: 0, kind: input, shape index: {}]
  %s1 = inlined_call_operand.vmem [shape: f32[16,1], index: 1, kind: input, shape index: {}]
  %s2 = inlined_call_operand.vmem [shape: f32[16,1], index: 2, kind: input, shape index: {}]
  %s3 = inlined_call_operand.vmem [shape: f32[16,512], index: 3, kind: output, shape index: {}]
  %s4 = sld [smem:[#allocation0]]
  $region22: #{dn_autoencoder_forward.21} parent=0
    _
  %s6 = ssub.s32 1, %s4
  %s7 = scalar_select 0, %s6, %s4
  // Predicated region
  $region2: #{dn_autoencoder_forward.21} parent=0 // pred_check
    _
  $region3: #{dn_autoencoder_forward.21} parent=0 // pred_check_branch
    %9 = sbr.rel (0) target = $region5
  $region4: #{dn_autoencoder_forward.21} parent=0 // pred_region
    _
  $region5: #{dn_autoencoder_forward.21} parent=0 // pred_fallthru
    _
  // Predicated region
  $region6: #{dn_autoencoder_forward.21} parent=0 // pred_check
    _
  $region7: #{dn_autoencoder_forward.21} parent=0 // pred_check_branch
    %11 = sbr.rel (0) target = $region9
  $region8: #{dn_autoencoder_forward.21} parent=0 // pred_region
    _
  $region9: #{dn_autoencoder_forward.21} parent=0 // pred_fallthru
    _
  // Predicated region
  $region10: #{dn_autoencoder_forward.21} parent=0 // pred_check
    _
  $region11: #{dn_autoencoder_forward.21} parent=0 // pred_check_branch
    %13 = sbr.rel (0) target = $region13
  $region12: #{dn_autoencoder_forward.21} parent=0 // pred_region
    _
  $region13: #{dn_autoencoder_forward.21} parent=0 // pred_fallthru
    _
  %v14 = vld [vmem:[%s0] sm:$0xff]
  %v15 = vld [vmem:[%s0 + $0x8] sm:$0xff]
  %v16 = vld [vmem:[%s0 + $0x10] sm:$0xff]
  %v17 = vld [vmem:[%s0 + $0x18] sm:$0xff]
  %v18 = vld [vmem:[%s0 + $0x20] sm:$0xff]
  %v19 = vld [vmem:[%s0 + $0x28] sm:$0xff]
  %v20 = vld [vmem:[%s0 + $0x30] sm:$0xff]
  %v21 = vld [vmem:[%s0 + $0x38] sm:$0xff]
  %v22 = vld [vmem:[%s1] sm:$0xff]
  %v23 = vld [vmem:[%s1 + $0x8] sm:$0xff]
  %25 = vset.pattern.permute.xlu0 0
  %26 = vperm.xlu0 %25, %v22
  %v27 = vpop.permute.xlu0 %26
  %30 = vset.pattern.permute.xlu0 0
  %31 = vperm.xlu0 %30, %v23
  %v32 = vpop.permute.xlu0 %31
  %v34 = vmul.f32 %v14, %v27
  %v35 = vmul.f32 %v15, %v27
  %v36 = vmul.f32 %v16, %v27
  %v37 = vmul.f32 %v17, %v27
  %v38 = vmul.f32 %v18, %v32
  %v39 = vmul.f32 %v19, %v32
  %v40 = vmul.f32 %v20, %v32
  %v41 = vmul.f32 %v21, %v32
  %v42 = vld [vmem:[%s2] sm:$0xff]
  %v43 = vld [vmem:[%s2 + $0x8] sm:$0xff]
  %45 = vset.pattern.permute.xlu0 0
  %46 = vperm.xlu0 %45, %v42
  %v47 = vpop.permute.xlu0 %46
  %50 = vset.pattern.permute.xlu0 0
  %51 = vperm.xlu0 %50, %v43
  %v52 = vpop.permute.xlu0 %51
  %v54 = vadd.f32 %v34, %v47
  %v55 = vadd.f32 %v35, %v47
  %v56 = vadd.f32 %v36, %v47
  %v57 = vadd.f32 %v37, %v47
  %v58 = vadd.f32 %v38, %v52
  %v59 = vadd.f32 %v39, %v52
  %v60 = vadd.f32 %v40, %v52
  %v61 = vadd.f32 %v41, %v52
  %vm62 = vcmp.ge.f32.partialorder %v54, 0.0
  %vm63 = vcmp.ge.f32.partialorder %v55, 0.0
  %vm64 = vcmp.ge.f32.partialorder %v56, 0.0
  %vm65 = vcmp.ge.f32.partialorder %v57, 0.0
  %vm66 = vcmp.ge.f32.partialorder %v58, 0.0
  %vm67 = vcmp.ge.f32.partialorder %v59, 0.0
  %vm68 = vcmp.ge.f32.partialorder %v60, 0.0
  %vm69 = vcmp.ge.f32.partialorder %v61, 0.0
  %v70 = vmul.f32 %v54, 0.2
  %v71 = vmul.f32 %v55, 0.2
  %v72 = vmul.f32 %v56, 0.2
  %v73 = vmul.f32 %v57, 0.2
  %v74 = vmul.f32 %v58, 0.2
  %v75 = vmul.f32 %v59, 0.2
  %v76 = vmul.f32 %v60, 0.2
  %v77 = vmul.f32 %v61, 0.2
  %v78 = vsel %vm62, %v54, %v70
  %v79 = vsel %vm63, %v55, %v71
  %v80 = vsel %vm64, %v56, %v72
  %v81 = vsel %vm65, %v57, %v73
  %v82 = vsel %vm66, %v58, %v74
  %v83 = vsel %vm67, %v59, %v75
  %v84 = vsel %vm68, %v60, %v76
  %v85 = vsel %vm69, %v61, %v77
  %86 = vst [vmem:[%s3] sm:$0xff] %v78
  %87 = vst [vmem:[%s3 + $0x8] sm:$0xff] %v79
  %88 = vst [vmem:[%s3 + $0x10] sm:$0xff] %v80
  %89 = vst [vmem:[%s3 + $0x18] sm:$0xff] %v81
  %90 = vst [vmem:[%s3 + $0x20] sm:$0xff] %v82
  %91 = vst [vmem:[%s3 + $0x28] sm:$0xff] %v83
  %92 = vst [vmem:[%s3 + $0x30] sm:$0xff] %v84
  %93 = vst [vmem:[%s3 + $0x38] sm:$0xff] %v85
  // Predicated region
  $region14: #{dn_autoencoder_forward.21} parent=0 // pred_check
    _
  $region15: #{dn_autoencoder_forward.21} parent=0 // pred_check_branch
    %95 = sbr.rel (0) target = $region17
  $region16: #{dn_autoencoder_forward.21} parent=0 // pred_region
    _
  $region17: #{dn_autoencoder_forward.21} parent=0 // pred_fallthru
    _
  // Predicated region
  $region18: #{dn_autoencoder_forward.21} parent=0 // pred_check
    _
  $region19: #{dn_autoencoder_forward.21} parent=0 // pred_check_branch
    %97 = sbr.rel (0) target = $region21
  $region20: #{dn_autoencoder_forward.21} parent=0 // pred_region
    _
  $region21: #{dn_autoencoder_forward.21} parent=0 // pred_fallthru
    _

// kernel: dn_autoencoder_forward.20
$region0: #{dn_autoencoder_forward.20}
  #allocation0 [shape = 'u32[]', space=smem, size = 0x4, offset = 0x4, fixed_abs, tag = 'smem constant byte address 0x4 - core index']
  #allocation1 [shape = 'u32[144,128]{1,0:T(1,128)}', space=vmem, size = 0x12000, scoped, tag = 'internal scratch']
  %s0 = inlined_call_operand.vmem [shape: bf16[16,9], index: 0, kind: input, shape index: {}]
  %s1 = inlined_call_operand.vmem [shape: bf16[9,512], index: 1, kind: input, shape index: {}]
  %s2 = inlined_call_operand.vmem [shape: f32[16,512], index: 2, kind: output, shape index: {0}]
  %s3 = inlined_call_operand.vmem [shape: f32[16,1], index: 3, kind: output, shape index: {1}]
  %s4 = inlined_call_operand.vmem [shape: f32[16,1], index: 4, kind: output, shape index: {2}]
  %5 = xla_tuple %s2, %s3, %s4
  %s6 = sld [smem:[#allocation0]]
  $region38: #{dn_autoencoder_forward.20} parent=0
    _
  %s8 = ssub.s32 1, %s6
  %s9 = scalar_select 0, %s8, %s6
  // Predicated region
  $region2: #{dn_autoencoder_forward.20} parent=0 // pred_check
    _
  $region3: #{dn_autoencoder_forward.20} parent=0 // pred_check_branch
    %11 = sbr.rel (0) target = $region5
  $region4: #{dn_autoencoder_forward.20} parent=0 // pred_region
    _
  $region5: #{dn_autoencoder_forward.20} parent=0 // pred_fallthru
    _
  // Predicated region
  $region6: #{dn_autoencoder_forward.20} parent=0 // pred_check
    _
  $region7: #{dn_autoencoder_forward.20} parent=0 // pred_check_branch
    %13 = sbr.rel (0) target = $region9
  $region8: #{dn_autoencoder_forward.20} parent=0 // pred_region
    _
  $region9: #{dn_autoencoder_forward.20} parent=0 // pred_fallthru
    _
  %p15 = scmp.eq.s32.totalorder 0, 0
  // Predicated region
  $region10: #{dn_autoencoder_forward.20} parent=0 // pred_check
    %p16 = pneg %p15
  $region11: #{dn_autoencoder_forward.20} parent=0 // pred_check_branch
    %18 = sbr.rel (%p16) target = $region13
  $region12: #{dn_autoencoder_forward.20} parent=0 // pred_region
    %vm19 = vcmask 7168
    %20 = vst.msk [vmem:[%s3] sm:$0xff] %vm19, 0.0
    %21 = vst.msk [vmem:[%s3 + $0x8] sm:$0xff] %vm19, 0.0
    %22 = vst.msk [vmem:[%s4] sm:$0xff] %vm19, 0.0
    %23 = vst.msk [vmem:[%s4 + $0x8] sm:$0xff] %vm19, 0.0
  $region13: #{dn_autoencoder_forward.20} parent=0 // pred_fallthru
    _
  %v24 = vld [vmem:[%s0] sm:$0xf]
  %v25 = vld [vmem:[%s0 + $0x4] sm:$0xf]
  %v26 = vld [vmem:[%s1] sm:$0xff]
  %v27 = vld [vmem:[%s1 + $0x8] sm:$0xff]
  %v28 = vld [vmem:[%s1 + $0x10] sm:$0x11]
  %v29 = vld [vmem:[%s1 + $0x18] sm:$0x11]
  %v32 = vunpack.c.l.b16 %v24
  %v33 = vunpack.c.l.b16 %v25
  %v34 = vpack.c.b16 %v33, %v32
  %v39 = vunpack.c.l.b16 %v26
  %v40 = vunpack.c.h.b16 %v26
  %v41 = vunpack.c.l.b16 %v27
  %v42 = vunpack.c.h.b16 %v27
  %v43 = vunpack.c.l.b16 %v28
  %v44 = vunpack.c.h.b16 %v28
  %v45 = vunpack.c.l.b16 %v29
  %v46 = vunpack.c.h.b16 %v29
  %v47 = vpack.c.b16 %v43, %v39
  %v48 = vpack.c.b16 %v44, %v40
  %v49 = vpack.c.b16 %v45, %v41
  %v50 = vpack.c.b16 %v46, %v42
  %vm51 = vcmask 72704
  %v53 = vsel %vm51, %v34, 0
  %vm55 = vcmask 1043456
  %vm56 = vcmask 1044480
  %v57 = vsel %vm55, 4294967295, 65535
  %v58 = vsel %vm56, %v57, 0
  %v60 = vand.u32 %v47, %v58
  %v63 = vand.u32 %v48, %v58
  %v66 = vand.u32 %v49, %v58
  %v69 = vand.u32 %v50, %v58
  %71 = vmatprep.subr.bf16.mxu0 %v63
  %72 = vmatpush1.bf16.msra.mxu0 %v60
  %73 = vmatprep.subr.bf16.mxu0 0
  %74 = vmatpush1.bf16.msra.mxu0 0
  %75 = vmatprep.subr.bf16.mxu0 0
  %76 = vmatpush1.bf16.msra.mxu0 0
  %77 = vmatprep.subr.bf16.mxu0 0
  %78 = vmatpush1.bf16.msra.mxu0 0
  %79 = vmatprep.subr.bf16.mxu0 0
  %80 = vmatpush1.bf16.msra.mxu0 0
  %81 = vmatprep.subr.bf16.mxu0 0
  %82 = vmatpush1.bf16.msra.mxu0 0
  %83 = vmatprep.subr.bf16.mxu0 0
  %84 = vmatpush1.bf16.msra.mxu0 0
  %85 = vmatprep.subr.bf16.mxu0 0
  %86 = vmatpush1.bf16.msra.mxu0 0
  %87 = vmatprep.subr.bf16.mxu0 0
  %88 = vmatpush1.bf16.msra.mxu0 0
  %89 = vmatprep.subr.bf16.mxu0 0
  %90 = vmatpush1.bf16.msra.mxu0 0
  %91 = vmatprep.subr.bf16.mxu0 0
  %92 = vmatpush1.bf16.msra.mxu0 0
  %93 = vmatprep.subr.bf16.mxu0 0
  %94 = vmatpush1.bf16.msra.mxu0 0
  %95 = vmatprep.subr.bf16.mxu0 0
  %96 = vmatpush1.bf16.msra.mxu0 0
  %97 = vmatprep.subr.bf16.mxu0 0
  %98 = vmatpush1.bf16.msra.mxu0 0
  %99 = vmatprep.subr.bf16.mxu0 0
  %100 = vmatpush1.bf16.msra.mxu0 0
  %101 = vmatprep.subr.bf16.mxu0 0
  %102 = vmatpush1.bf16.msra.mxu0 0
  %103 = vmatprep.mubr.bf16.mxu0 0
  %104 = vmatmul.mubr.bf16.gmra.mrb[0].mxu0 %v53
  %v105 = vpop.f32.mrb[0].mxu0
  %v106 = vadd.f32 0.0, %v105
  %v107 = vpop.f32.mrb[0].mxu0
  %v108 = vadd.f32 0.0, %v107
  %v109 = vpop.f32.mrb[0].mxu0
  %v110 = vadd.f32 0.0, %v109
  %v111 = vpop.f32.mrb[0].mxu0
  %v112 = vadd.f32 0.0, %v111
  %113 = vdwg.mxu0
  %114 = vmatprep.subr.bf16.mxu0 %v69
  %115 = vmatpush1.bf16.msra.mxu0 %v66
  %116 = vmatprep.subr.bf16.mxu0 0
  %117 = vmatpush1.bf16.msra.mxu0 0
  %118 = vmatprep.subr.bf16.mxu0 0
  %119 = vmatpush1.bf16.msra.mxu0 0
  %120 = vmatprep.subr.bf16.mxu0 0
  %121 = vmatpush1.bf16.msra.mxu0 0
  %122 = vmatprep.subr.bf16.mxu0 0
  %123 = vmatpush1.bf16.msra.mxu0 0
  %124 = vmatprep.subr.bf16.mxu0 0
  %125 = vmatpush1.bf16.msra.mxu0 0
  %126 = vmatprep.subr.bf16.mxu0 0
  %127 = vmatpush1.bf16.msra.mxu0 0
  %128 = vmatprep.subr.bf16.mxu0 0
  %129 = vmatpush1.bf16.msra.mxu0 0
  %130 = vmatprep.subr.bf16.mxu0 0
  %131 = vmatpush1.bf16.msra.mxu0 0
  %132 = vmatprep.subr.bf16.mxu0 0
  %133 = vmatpush1.bf16.msra.mxu0 0
  %134 = vmatprep.subr.bf16.mxu0 0
  %135 = vmatpush1.bf16.msra.mxu0 0
  %136 = vmatprep.subr.bf16.mxu0 0
  %137 = vmatpush1.bf16.msra.mxu0 0
  %138 = vmatprep.subr.bf16.mxu0 0
  %139 = vmatpush1.bf16.msra.mxu0 0
  %140 = vmatprep.subr.bf16.mxu0 0
  %141 = vmatpush1.bf16.msra.mxu0 0
  %142 = vmatprep.subr.bf16.mxu0 0
  %143 = vmatpush1.bf16.msra.mxu0 0
  %144 = vmatprep.subr.bf16.mxu0 0
  %145 = vmatpush1.bf16.msra.mxu0 0
  %146 = vmatprep.mubr.bf16.mxu0 0
  %147 = vmatmul.mubr.bf16.gmra.mrb[0].mxu0 %v53
  %v148 = vpop.f32.mrb[0].mxu0
  %v149 = vadd.f32 0.0, %v148
  %v150 = vpop.f32.mrb[0].mxu0
  %v151 = vadd.f32 0.0, %v150
  %v152 = vpop.f32.mrb[0].mxu0
  %v153 = vadd.f32 0.0, %v152
  %v154 = vpop.f32.mrb[0].mxu0
  %v155 = vadd.f32 0.0, %v154
  %156 = vdwg.mxu0
  %157 = vst [vmem:[%s2] sm:$0xff] %v106
  %158 = vst [vmem:[%s2 + $0x8] sm:$0xff] %v108
  %159 = vst [vmem:[%s2 + $0x10] sm:$0xff] %v149
  %160 = vst [vmem:[%s2 + $0x18] sm:$0xff] %v151
  %161 = vst [vmem:[%s2 + $0x20] sm:$0xff] %v110
  %162 = vst [vmem:[%s2 + $0x28] sm:$0xff] %v112
  %163 = vst [vmem:[%s2 + $0x30] sm:$0xff] %v153
  %164 = vst [vmem:[%s2 + $0x38] sm:$0xff] %v155
  %v165 = vld [vmem:[%s3] sm:$0xff]
  %v166 = vld [vmem:[%s3 + $0x8] sm:$0xff]
  %v167 = vadd.f32 %v106, %v108
  %v168 = vadd.f32 %v167, %v149
  %v169 = vadd.f32 %v168, %v151
  %170 = vadd.xlane.f32.xlu0 %v169
  %v171 = vpop.xlane.xlu0 %170
  %v172 = vadd.f32 %v110, %v112
  %v173 = vadd.f32 %v172, %v153
  %v174 = vadd.f32 %v173, %v155
  %175 = vadd.xlane.f32.xlu0 %v174
  %v176 = vpop.xlane.xlu0 %175
  %v177 = vadd.f32 %v165, %v171
  %v178 = vadd.f32 %v166, %v176
  %vm179 = vcmask 7168
  %180 = vst.msk [vmem:[%s3] sm:$0xff] %vm179, %v177
  %181 = vst.msk [vmem:[%s3 + $0x8] sm:$0xff] %vm179, %v178
  %v182 = vld [vmem:[%s4] sm:$0xff]
  %v183 = vld [vmem:[%s4 + $0x8] sm:$0xff]
  %v184 = vmul.f32 %v106, %v106
  %v185 = vmul.f32 %v108, %v108
  %v186 = vmul.f32 %v149, %v149
  %v187 = vmul.f32 %v151, %v151
  %v188 = vmul.f32 %v110, %v110
  %v189 = vmul.f32 %v112, %v112
  %v190 = vmul.f32 %v153, %v153
  %v191 = vmul.f32 %v155, %v155
  %v192 = vadd.f32 %v184, %v185
  %v193 = vadd.f32 %v192, %v186
  %v194 = vadd.f32 %v193, %v187
  %195 = vadd.xlane.f32.xlu0 %v194
  %v196 = vpop.xlane.xlu0 %195
  %v197 = vadd.f32 %v188, %v189
  %v198 = vadd.f32 %v197, %v190
  %v199 = vadd.f32 %v198, %v191
  %200 = vadd.xlane.f32.xlu0 %v199
  %v201 = vpop.xlane.xlu0 %200
  %v202 = vadd.f32 %v182, %v196
  %v203 = vadd.f32 %v183, %v201
  %204 = vst.msk [vmem:[%s4] sm:$0xff] %vm179, %v202
  %205 = vst.msk [vmem:[%s4 + $0x8] sm:$0xff] %vm179, %v203
  // Predicated region
  $region14: #{dn_autoencoder_forward.20} parent=0 // pred_check
    _
  $region15: #{dn_autoencoder_forward.20} parent=0 // pred_check_branch
    %207 = sbr.rel (0) target = $region17
  $region16: #{dn_autoencoder_forward.20} parent=0 // pred_region
    _
  $region17: #{dn_autoencoder_forward.20} parent=0 // pred_fallthru
    _
  // Predicated region
  $region18: #{dn_autoencoder_forward.20} parent=0 // pred_check
    _
  $region19: #{dn_autoencoder_forward.20} parent=0 // pred_check_branch
    %209 = sbr.rel (0) target = $region21
  $region20: #{dn_autoencoder_forward.20} parent=0 // pred_region
    _
  $region21: #{dn_autoencoder_forward.20} parent=0 // pred_fallthru
    _
  // Predicated region
  $region22: #{dn_autoencoder_forward.20} parent=0 // pred_check
    _
  $region23: #{dn_autoencoder_forward.20} parent=0 // pred_check_branch
    %211 = sbr.rel (0) target = $region25
  $region24: #{dn_autoencoder_forward.20} parent=0 // pred_region
    _
  $region25: #{dn_autoencoder_forward.20} parent=0 // pred_fallthru
    _
  // Predicated region
  $region26: #{dn_autoencoder_forward.20} parent=0 // pred_check
    _
  $region27: #{dn_autoencoder_forward.20} parent=0 // pred_check_branch
    %213 = sbr.rel (0) target = $region29
  $region28: #{dn_autoencoder_forward.20} parent=0 // pred_region
    _
  $region29: #{dn_autoencoder_forward.20} parent=0 // pred_fallthru
    _
  // Predicated region
  $region30: #{dn_autoencoder_forward.20} parent=0 // pred_check
    _
  $region31: #{dn_autoencoder_forward.20} parent=0 // pred_check_branch
    %215 = sbr.rel (0) target = $region33
  $region32: #{dn_autoencoder_forward.20} parent=0 // pred_region
    _
  $region33: #{dn_autoencoder_forward.20} parent=0 // pred_fallthru
    _
  // Predicated region
  $region34: #{dn_autoencoder_forward.20} parent=0 // pred_check
    _
  $region35: #{dn_autoencoder_forward.20} parent=0 // pred_check_branch
    %217 = sbr.rel (0) target = $region37
  $region36: #{dn_autoencoder_forward.20} parent=0 // pred_region
    _
  $region37: #{dn_autoencoder_forward.20} parent=0 // pred_fallthru
    _

// kernel: dn_autoencoder_forward.22
$region0: #{dn_autoencoder_forward.22}
  #allocation0 [shape = 'u32[]', space=smem, size = 0x4, offset = 0x4, fixed_abs, tag = 'smem constant byte address 0x4 - core index']
  #allocation1 [shape = 'u32[144,128]{1,0:T(1,128)}', space=vmem, size = 0x12000, scoped, tag = 'internal scratch']
  %s0 = inlined_call_operand.vmem [shape: bf16[32,144], index: 0, kind: input, shape index: {}]
  %s1 = inlined_call_operand.vmem [shape: bf16[144,128], index: 1, kind: input, shape index: {}]
  %s2 = inlined_call_operand.vmem [shape: f32[32,128], index: 2, kind: output, shape index: {0}]
  %s3 = inlined_call_operand.vmem [shape: f32[32,1], index: 3, kind: output, shape index: {1}]
  %s4 = inlined_call_operand.vmem [shape: f32[32,1], index: 4, kind: output, shape index: {2}]
  %5 = xla_tuple %s2, %s3, %s4
  %s6 = sld [smem:[#allocation0]]
  $region38: #{dn_autoencoder_forward.22} parent=0
    _
  %s8 = ssub.s32 1, %s6
  %s9 = scalar_select 0, %s8, %s6
  // Predicated region
  $region2: #{dn_autoencoder_forward.22} parent=0 // pred_check
    _
  $region3: #{dn_autoencoder_forward.22} parent=0 // pred_check_branch
    %11 = sbr.rel (0) target = $region5
  $region4: #{dn_autoencoder_forward.22} parent=0 // pred_region
    _
  $region5: #{dn_autoencoder_forward.22} parent=0 // pred_fallthru
    _
  // Predicated region
  $region6: #{dn_autoencoder_forward.22} parent=0 // pred_check
    _
  $region7: #{dn_autoencoder_forward.22} parent=0 // pred_check_branch
    %13 = sbr.rel (0) target = $region9
  $region8: #{dn_autoencoder_forward.22} parent=0 // pred_region
    _
  $region9: #{dn_autoencoder_forward.22} parent=0 // pred_fallthru
    _
  %p15 = scmp.eq.s32.totalorder 0, 0
  // Predicated region
  $region10: #{dn_autoencoder_forward.22} parent=0 // pred_check
    %p16 = pneg %p15
  $region11: #{dn_autoencoder_forward.22} parent=0 // pred_check_branch
    %18 = sbr.rel (%p16) target = $region13
  $region12: #{dn_autoencoder_forward.22} parent=0 // pred_region
    %vm19 = vcmask 7168
    %20 = vst.msk [vmem:[%s3] sm:$0xff] %vm19, 0.0
    %21 = vst.msk [vmem:[%s3 + $0x8] sm:$0xff] %vm19, 0.0
    %22 = vst.msk [vmem:[%s3 + $0x10] sm:$0xff] %vm19, 0.0
    %23 = vst.msk [vmem:[%s3 + $0x18] sm:$0xff] %vm19, 0.0
    %24 = vst.msk [vmem:[%s4] sm:$0xff] %vm19, 0.0
    %25 = vst.msk [vmem:[%s4 + $0x8] sm:$0xff] %vm19, 0.0
    %26 = vst.msk [vmem:[%s4 + $0x10] sm:$0xff] %vm19, 0.0
    %27 = vst.msk [vmem:[%s4 + $0x18] sm:$0xff] %vm19, 0.0
  $region13: #{dn_autoencoder_forward.22} parent=0 // pred_fallthru
    _
  %v28 = vld [vmem:[%s0] sm:$0xff]
  %v29 = vld [vmem:[%s0 + $0x8] sm:$0xff]
  %v30 = vld [vmem:[%s0 + $0x10] sm:$0xff]
  %v31 = vld [vmem:[%s0 + $0x18] sm:$0xff]
  %v32 = vld [vmem:[%s1] sm:$0xf]
  %v33 = vld [vmem:[%s1 + $0x4] sm:$0xf]
  %v34 = vld [vmem:[%s1 + $0x8] sm:$0xf]
  %v35 = vld [vmem:[%s1 + $0xc] sm:$0xf]
  %v36 = vld [vmem:[%s1 + $0x10] sm:$0xf]
  %v37 = vld [vmem:[%s1 + $0x14] sm:$0xf]
  %v38 = vld [vmem:[%s1 + $0x18] sm:$0xf]
  %v39 = vld [vmem:[%s1 + $0x1c] sm:$0xf]
  %v40 = vld [vmem:[%s1 + $0x20] sm:$0xf]
  %v41 = vld [vmem:[%s1 + $0x24] sm:$0xf]
  %v42 = vld [vmem:[%s1 + $0x28] sm:$0xf]
  %v43 = vld [vmem:[%s1 + $0x2c] sm:$0xf]
  %v44 = vld [vmem:[%s1 + $0x30] sm:$0xf]
  %v45 = vld [vmem:[%s1 + $0x34] sm:$0xf]
  %v46 = vld [vmem:[%s1 + $0x38] sm:$0xf]
  %v47 = vld [vmem:[%s1 + $0x3c] sm:$0xf]
  %v48 = vld [vmem:[%s1 + $0x40] sm:$0xf]
  %v49 = vld [vmem:[%s1 + $0x44] sm:$0xf]
  %v54 = vunpack.c.l.b16 %v28
  %v55 = vunpack.c.h.b16 %v28
  %v56 = vunpack.c.l.b16 %v29
  %v57 = vunpack.c.h.b16 %v29
  %v58 = vunpack.c.l.b16 %v30
  %v59 = vunpack.c.h.b16 %v30
  %v60 = vunpack.c.l.b16 %v31
  %v61 = vunpack.c.h.b16 %v31
  %v62 = vpack.c.b16 %v56, %v54
  %v63 = vpack.c.b16 %v57, %v55
  %v64 = vpack.c.b16 %v60, %v58
  %v65 = vpack.c.b16 %v61, %v59
  %v86 = vunpack.c.l.b16 %v32
  %v87 = vunpack.c.l.b16 %v33
  %v88 = vunpack.c.l.b16 %v34
  %v89 = vunpack.c.l.b16 %v35
  %v90 = vunpack.c.l.b16 %v36
  %v91 = vunpack.c.l.b16 %v37
  %v92 = vunpack.c.l.b16 %v38
  %v93 = vunpack.c.l.b16 %v39
  %v94 = vunpack.c.l.b16 %v40
  %v95 = vunpack.c.l.b16 %v41
  %v96 = vunpack.c.l.b16 %v42
  %v97 = vunpack.c.l.b16 %v43
  %v98 = vunpack.c.l.b16 %v44
  %v99 = vunpack.c.l.b16 %v45
  %v100 = vunpack.c.l.b16 %v46
  %v101 = vunpack.c.l.b16 %v47
  %v102 = vunpack.c.l.b16 %v48
  %v103 = vunpack.c.l.b16 %v49
  %v104 = vpack.c.b16 %v87, %v86
  %v105 = vpack.c.b16 %v89, %v88
  %v106 = vpack.c.b16 %v91, %v90
  %v107 = vpack.c.b16 %v93, %v92
  %v108 = vpack.c.b16 %v95, %v94
  %v109 = vpack.c.b16 %v97, %v96
  %v110 = vpack.c.b16 %v99, %v98
  %v111 = vpack.c.b16 %v101, %v100
  %v112 = vpack.c.b16 %v103, %v102
  %vm122 = vcmask 130048
  %v124 = vsel %vm122, %v63, 0
  %v127 = vsel %vm122, %v65, 0
  %129 = vmatprep.subr.bf16.mxu0 0
  %130 = vmatpush1.bf16.msra.mxu0 %v104
  %131 = vmatprep.subr.bf16.mxu0 0
  %132 = vmatpush1.bf16.msra.mxu0 %v105
  %133 = vmatprep.subr.bf16.mxu0 0
  %134 = vmatpush1.bf16.msra.mxu0 %v106
  %135 = vmatprep.subr.bf16.mxu0 0
  %136 = vmatpush1.bf16.msra.mxu0 %v107
  %137 = vmatprep.subr.bf16.mxu0 0
  %138 = vmatpush1.bf16.msra.mxu0 %v108
  %139 = vmatprep.subr.bf16.mxu0 0
  %140 = vmatpush1.bf16.msra.mxu0 %v109
  %141 = vmatprep.subr.bf16.mxu0 0
  %142 = vmatpush1.bf16.msra.mxu0 %v110
  %143 = vmatprep.subr.bf16.mxu0 0
  %144 = vmatpush1.bf16.msra.mxu0 %v111
  %145 = vmatprep.subr.bf16.mxu0 0
  %146 = vmatpush1.bf16.msra.mxu0 %v112
  %147 = vmatprep.subr.bf16.mxu0 0
  %148 = vmatpush1.bf16.msra.mxu0 0
  %149 = vmatprep.subr.bf16.mxu0 0
  %150 = vmatpush1.bf16.msra.mxu0 0
  %151 = vmatprep.subr.bf16.mxu0 0
  %152 = vmatpush1.bf16.msra.mxu0 0
  %153 = vmatprep.subr.bf16.mxu0 0
  %154 = vmatpush1.bf16.msra.mxu0 0
  %155 = vmatprep.subr.bf16.mxu0 0
  %156 = vmatpush1.bf16.msra.mxu0 0
  %157 = vmatprep.subr.bf16.mxu0 0
  %158 = vmatpush1.bf16.msra.mxu0 0
  %159 = vmatprep.subr.bf16.mxu0 0
  %160 = vmatpush1.bf16.msra.mxu0 0
  %161 = vmatprep.mubr.bf16.mxu0 %v124
  %162 = vmatmul.mubr.bf16.gmra.mrb[0].mxu0 %v62
  %v163 = vpop.f32.mrb[0].mxu0
  %v164 = vadd.f32 0.0, %v163
  %v165 = vpop.f32.mrb[0].mxu0
  %v166 = vpop.f32.mrb[0].mxu0
  %v167 = vadd.f32 0.0, %v166
  %v168 = vpop.f32.mrb[0].mxu0
  %169 = vmatprep.mubr.bf16.mxu0 %v127
  %170 = vmatmul.mubr.bf16.gmra.mrb[0].mxu0 %v64
  %v171 = vpop.f32.mrb[0].mxu0
  %v172 = vadd.f32 0.0, %v171
  %v173 = vpop.f32.mrb[0].mxu0
  %v174 = vpop.f32.mrb[0].mxu0
  %v175 = vadd.f32 0.0, %v174
  %v176 = vpop.f32.mrb[0].mxu0
  %177 = vdwg.mxu0
  %178 = vst [vmem:[%s2] sm:$0xff] %v164
  %179 = vst [vmem:[%s2 + $0x8] sm:$0xff] %v167
  %180 = vst [vmem:[%s2 + $0x10] sm:$0xff] %v172
  %181 = vst [vmem:[%s2 + $0x18] sm:$0xff] %v175
  %v182 = vld [vmem:[%s3] sm:$0xff]
  %v183 = vld [vmem:[%s3 + $0x8] sm:$0xff]
  %v184 = vld [vmem:[%s3 + $0x10] sm:$0xff]
  %v185 = vld [vmem:[%s3 + $0x18] sm:$0xff]
  %186 = vadd.xlane.f32.xlu0 %v164
  %v187 = vpop.xlane.xlu0 %186
  %188 = vadd.xlane.f32.xlu0 %v167
  %v189 = vpop.xlane.xlu0 %188
  %190 = vadd.xlane.f32.xlu0 %v172
  %v191 = vpop.xlane.xlu0 %190
  %192 = vadd.xlane.f32.xlu0 %v175
  %v193 = vpop.xlane.xlu0 %192
  %v194 = vadd.f32 %v182, %v187
  %v195 = vadd.f32 %v183, %v189
  %v196 = vadd.f32 %v184, %v191
  %v197 = vadd.f32 %v185, %v193
  %vm198 = vcmask 7168
  %199 = vst.msk [vmem:[%s3] sm:$0xff] %vm198, %v194
  %200 = vst.msk [vmem:[%s3 + $0x8] sm:$0xff] %vm198, %v195
  %201 = vst.msk [vmem:[%s3 + $0x10] sm:$0xff] %vm198, %v196
  %202 = vst.msk [vmem:[%s3 + $0x18] sm:$0xff] %vm198, %v197
  %v203 = vld [vmem:[%s4] sm:$0xff]
  %v204 = vld [vmem:[%s4 + $0x8] sm:$0xff]
  %v205 = vld [vmem:[%s4 + $0x10] sm:$0xff]
  %v206 = vld [vmem:[%s4 + $0x18] sm:$0xff]
  %v207 = vmul.f32 %v164, %v164
  %v208 = vmul.f32 %v167, %v167
  %v209 = vmul.f32 %v172, %v172
  %v210 = vmul.f32 %v175, %v175
  %211 = vadd.xlane.f32.xlu0 %v207
  %v212 = vpop.xlane.xlu0 %211
  %213 = vadd.xlane.f32.xlu0 %v208
  %v214 = vpop.xlane.xlu0 %213
  %215 = vadd.xlane.f32.xlu0 %v209
  %v216 = vpop.xlane.xlu0 %215
  %217 = vadd.xlane.f32.xlu0 %v210
  %v218 = vpop.xlane.xlu0 %217
  %v219 = vadd.f32 %v203, %v212
  %v220 = vadd.f32 %v204, %v214
  %v221 = vadd.f32 %v205, %v216
  %v222 = vadd.f32 %v206, %v218
  %223 = vst.msk [vmem:[%s4] sm:$0xff] %vm198, %v219
  %224 = vst.msk [vmem:[%s4 + $0x8] sm:$0xff] %vm198, %v220
  %225 = vst.msk [vmem:[%s4 + $0x10] sm:$0xff] %vm198, %v221
  %226 = vst.msk [vmem:[%s4 + $0x18] sm:$0xff] %vm198, %v222
  // Predicated region
  $region14: #{dn_autoencoder_forward.22} parent=0 // pred_check
    _
  $region15: #{dn_autoencoder_forward.22} parent=0 // pred_check_branch
    %228 = sbr.rel (0) target = $region17
  $region16: #{dn_autoencoder_forward.22} parent=0 // pred_region
    _
  $region17: #{dn_autoencoder_forward.22} parent=0 // pred_fallthru
    _
  // Predicated region
  $region18: #{dn_autoencoder_forward.22} parent=0 // pred_check
    _
  $region19: #{dn_autoencoder_forward.22} parent=0 // pred_check_branch
    %230 = sbr.rel (0) target = $region21
  $region20: #{dn_autoencoder_forward.22} parent=0 // pred_region
    _
  $region21: #{dn_autoencoder_forward.22} parent=0 // pred_fallthru
    _
  // Predicated region
  $region22: #{dn_autoencoder_forward.22} parent=0 // pred_check
    _
  $region23: #{dn_autoencoder_forward.22} parent=0 // pred_check_branch
    %232 = sbr.rel (0) target = $region25
  $region24: #{dn_autoencoder_forward.22} parent=0 // pred_region
    _
  $region25: #{dn_autoencoder_forward.22} parent=0 // pred_fallthru
    _
  // Predicated region
  $region26: #{dn_autoencoder_forward.22} parent=0 // pred_check
    _
  $region27: #{dn_autoencoder_forward.22} parent=0 // pred_check_branch
    %234 = sbr.rel (0) target = $region29
  $region28: #{dn_autoencoder_forward.22} parent=0 // pred_region
    _
  $region29: #{dn_autoencoder_forward.22} parent=0 // pred_fallthru
    _
  // Predicated region
  $region30: #{dn_autoencoder_forward.22} parent=0 // pred_check
    _
  $region31: #{dn_autoencoder_forward.22} parent=0 // pred_check_branch
    %236 = sbr.rel (0) target = $region33
  $region32: #{dn_autoencoder_forward.22} parent=0 // pred_region
    _
  $region33: #{dn_autoencoder_forward.22} parent=0 // pred_fallthru
    _
  // Predicated region
  $region34: #{dn_autoencoder_forward.22} parent=0 // pred_check
    _
  $region35: #{dn_autoencoder_forward.22} parent=0 // pred_check_branch
    %238 = sbr.rel (0) target = $region37
  $region36: #{dn_autoencoder_forward.22} parent=0 // pred_region
    _
  $region37: #{dn_autoencoder_forward.22} parent=0 // pred_fallthru
    _

// kernel: dn_autoencoder_forward.23
$region0: #{dn_autoencoder_forward.23}
  #allocation0 [shape = 'u32[]', space=smem, size = 0x4, offset = 0x4, fixed_abs, tag = 'smem constant byte address 0x4 - core index']
  #allocation1 [shape = 'u32[144,128]{1,0:T(1,128)}', space=vmem, size = 0x12000, scoped, tag = 'internal scratch']
  %s0 = inlined_call_operand.vmem [shape: f32[32,128], index: 0, kind: input, shape index: {}]
  %s1 = inlined_call_operand.vmem [shape: f32[32,1], index: 1, kind: input, shape index: {}]
  %s2 = inlined_call_operand.vmem [shape: f32[32,1], index: 2, kind: input, shape index: {}]
  %s3 = inlined_call_operand.vmem [shape: f32[32,128], index: 3, kind: output, shape index: {}]
  %s4 = sld [smem:[#allocation0]]
  $region22: #{dn_autoencoder_forward.23} parent=0
    _
  %s6 = ssub.s32 1, %s4
  %s7 = scalar_select 0, %s6, %s4
  // Predicated region
  $region2: #{dn_autoencoder_forward.23} parent=0 // pred_check
    _
  $region3: #{dn_autoencoder_forward.23} parent=0 // pred_check_branch
    %9 = sbr.rel (0) target = $region5
  $region4: #{dn_autoencoder_forward.23} parent=0 // pred_region
    _
  $region5: #{dn_autoencoder_forward.23} parent=0 // pred_fallthru
    _
  // Predicated region
  $region6: #{dn_autoencoder_forward.23} parent=0 // pred_check
    _
  $region7: #{dn_autoencoder_forward.23} parent=0 // pred_check_branch
    %11 = sbr.rel (0) target = $region9
  $region8: #{dn_autoencoder_forward.23} parent=0 // pred_region
    _
  $region9: #{dn_autoencoder_forward.23} parent=0 // pred_fallthru
    _
  // Predicated region
  $region10: #{dn_autoencoder_forward.23} parent=0 // pred_check
    _
  $region11: #{dn_autoencoder_forward.23} parent=0 // pred_check_branch
    %13 = sbr.rel (0) target = $region13
  $region12: #{dn_autoencoder_forward.23} parent=0 // pred_region
    _
  $region13: #{dn_autoencoder_forward.23} parent=0 // pred_fallthru
    _
  %v14 = vld [vmem:[%s0] sm:$0xff]
  %v15 = vld [vmem:[%s0 + $0x8] sm:$0xff]
  %v16 = vld [vmem:[%s0 + $0x10] sm:$0xff]
  %v17 = vld [vmem:[%s0 + $0x18] sm:$0xff]
  %v18 = vld [vmem:[%s1] sm:$0xff]
  %v19 = vld [vmem:[%s1 + $0x8] sm:$0xff]
  %v20 = vld [vmem:[%s1 + $0x10] sm:$0xff]
  %v21 = vld [vmem:[%s1 + $0x18] sm:$0xff]
  %23 = vset.pattern.permute.xlu0 0
  %24 = vperm.xlu0 %23, %v18
  %v25 = vpop.permute.xlu0 %24
  %28 = vset.pattern.permute.xlu0 0
  %29 = vperm.xlu0 %28, %v19
  %v30 = vpop.permute.xlu0 %29
  %33 = vset.pattern.permute.xlu0 0
  %34 = vperm.xlu0 %33, %v20
  %v35 = vpop.permute.xlu0 %34
  %38 = vset.pattern.permute.xlu0 0
  %39 = vperm.xlu0 %38, %v21
  %v40 = vpop.permute.xlu0 %39
  %v42 = vmul.f32 %v14, %v25
  %v43 = vmul.f32 %v15, %v30
  %v44 = vmul.f32 %v16, %v35
  %v45 = vmul.f32 %v17, %v40
  %v46 = vld [vmem:[%s2] sm:$0xff]
  %v47 = vld [vmem:[%s2 + $0x8] sm:$0xff]
  %v48 = vld [vmem:[%s2 + $0x10] sm:$0xff]
  %v49 = vld [vmem:[%s2 + $0x18] sm:$0xff]
  %51 = vset.pattern.permute.xlu0 0
  %52 = vperm.xlu0 %51, %v46
  %v53 = vpop.permute.xlu0 %52
  %56 = vset.pattern.permute.xlu0 0
  %57 = vperm.xlu0 %56, %v47
  %v58 = vpop.permute.xlu0 %57
  %61 = vset.pattern.permute.xlu0 0
  %62 = vperm.xlu0 %61, %v48
  %v63 = vpop.permute.xlu0 %62
  %66 = vset.pattern.permute.xlu0 0
  %67 = vperm.xlu0 %66, %v49
  %v68 = vpop.permute.xlu0 %67
  %v70 = vadd.f32 %v42, %v53
  %v71 = vadd.f32 %v43, %v58
  %v72 = vadd.f32 %v44, %v63
  %v73 = vadd.f32 %v45, %v68
  %vm74 = vcmp.ge.f32.partialorder %v70, 0.0
  %vm75 = vcmp.ge.f32.partialorder %v71, 0.0
  %vm76 = vcmp.ge.f32.partialorder %v72, 0.0
  %vm77 = vcmp.ge.f32.partialorder %v73, 0.0
  %v78 = vmul.f32 %v70, 0.2
  %v79 = vmul.f32 %v71, 0.2
  %v80 = vmul.f32 %v72, 0.2
  %v81 = vmul.f32 %v73, 0.2
  %v82 = vsel %vm74, %v70, %v78
  %v83 = vsel %vm75, %v71, %v79
  %v84 = vsel %vm76, %v72, %v80
  %v85 = vsel %vm77, %v73, %v81
  %86 = vst [vmem:[%s3] sm:$0xff] %v82
  %87 = vst [vmem:[%s3 + $0x8] sm:$0xff] %v83
  %88 = vst [vmem:[%s3 + $0x10] sm:$0xff] %v84
  %89 = vst [vmem:[%s3 + $0x18] sm:$0xff] %v85
  // Predicated region
  $region14: #{dn_autoencoder_forward.23} parent=0 // pred_check
    _
  $region15: #{dn_autoencoder_forward.23} parent=0 // pred_check_branch
    %91 = sbr.rel (0) target = $region17
  $region16: #{dn_autoencoder_forward.23} parent=0 // pred_region
    _
  $region17: #{dn_autoencoder_forward.23} parent=0 // pred_fallthru
    _
  // Predicated region
  $region18: #{dn_autoencoder_forward.23} parent=0 // pred_check
    _
  $region19: #{dn_autoencoder_forward.23} parent=0 // pred_check_branch
    %93 = sbr.rel (0) target = $region21
  $region20: #{dn_autoencoder_forward.23} parent=0 // pred_region
    _
  $region21: #{dn_autoencoder_forward.23} parent=0 // pred_fallthru
    _

// kernel: dn_autoencoder_forward.24
$region0: #{dn_autoencoder_forward.24}
  #allocation0 [shape = 'u32[]', space=smem, size = 0x4, offset = 0x4, fixed_abs, tag = 'smem constant byte address 0x4 - core index']
  #allocation1 [shape = 'u32[144,128]{1,0:T(1,128)}', space=vmem, size = 0x12000, scoped, tag = 'internal scratch']
  %s0 = inlined_call_operand.vmem [shape: bf16[32,288], index: 0, kind: input, shape index: {}]
  %s1 = inlined_call_operand.vmem [shape: bf16[288,128], index: 1, kind: input, shape index: {}]
  %s2 = inlined_call_operand.vmem [shape: f32[32,128], index: 2, kind: output, shape index: {0}]
  %s3 = inlined_call_operand.vmem [shape: f32[32,1], index: 3, kind: output, shape index: {1}]
  %s4 = inlined_call_operand.vmem [shape: f32[32,1], index: 4, kind: output, shape index: {2}]
  %5 = xla_tuple %s2, %s3, %s4
  %s6 = sld [smem:[#allocation0]]
  $region38: #{dn_autoencoder_forward.24} parent=0
    _
  %s8 = ssub.s32 1, %s6
  %s9 = scalar_select 0, %s8, %s6
  // Predicated region
  $region2: #{dn_autoencoder_forward.24} parent=0 // pred_check
    _
  $region3: #{dn_autoencoder_forward.24} parent=0 // pred_check_branch
    %11 = sbr.rel (0) target = $region5
  $region4: #{dn_autoencoder_forward.24} parent=0 // pred_region
    _
  $region5: #{dn_autoencoder_forward.24} parent=0 // pred_fallthru
    _
  // Predicated region
  $region6: #{dn_autoencoder_forward.24} parent=0 // pred_check
    _
  $region7: #{dn_autoencoder_forward.24} parent=0 // pred_check_branch
    %13 = sbr.rel (0) target = $region9
  $region8: #{dn_autoencoder_forward.24} parent=0 // pred_region
    _
  $region9: #{dn_autoencoder_forward.24} parent=0 // pred_fallthru
    _
  %p15 = scmp.eq.s32.totalorder 0, 0
  // Predicated region
  $region10: #{dn_autoencoder_forward.24} parent=0 // pred_check
    %p16 = pneg %p15
  $region11: #{dn_autoencoder_forward.24} parent=0 // pred_check_branch
    %18 = sbr.rel (%p16) target = $region13
  $region12: #{dn_autoencoder_forward.24} parent=0 // pred_region
    %vm19 = vcmask 7168
    %20 = vst.msk [vmem:[%s3] sm:$0xff] %vm19, 0.0
    %21 = vst.msk [vmem:[%s3 + $0x8] sm:$0xff] %vm19, 0.0
    %22 = vst.msk [vmem:[%s3 + $0x10] sm:$0xff] %vm19, 0.0
    %23 = vst.msk [vmem:[%s3 + $0x18] sm:$0xff] %vm19, 0.0
    %24 = vst.msk [vmem:[%s4] sm:$0xff] %vm19, 0.0
    %25 = vst.msk [vmem:[%s4 + $0x8] sm:$0xff] %vm19, 0.0
    %26 = vst.msk [vmem:[%s4 + $0x10] sm:$0xff] %vm19, 0.0
    %27 = vst.msk [vmem:[%s4 + $0x18] sm:$0xff] %vm19, 0.0
  $region13: #{dn_autoencoder_forward.24} parent=0 // pred_fallthru
    _
  %v28 = vld [vmem:[%s0] sm:$0xff]
  %v29 = vld [vmem:[%s0 + $0x8] sm:$0xf]
  %v30 = vld [vmem:[%s0 + $0xc] sm:$0xff]
  %v31 = vld [vmem:[%s0 + $0x14] sm:$0xf]
  %v32 = vld [vmem:[%s0 + $0x18] sm:$0xff]
  %v33 = vld [vmem:[%s0 + $0x20] sm:$0xf]
  %v34 = vld [vmem:[%s0 + $0x24] sm:$0xff]
  %v35 = vld [vmem:[%s0 + $0x2c] sm:$0xf]
  %v36 = vld [vmem:[%s1] sm:$0xf]
  %v37 = vld [vmem:[%s1 + $0x4] sm:$0xf]
  %v38 = vld [vmem:[%s1 + $0x8] sm:$0xf]
  %v39 = vld [vmem:[%s1 + $0xc] sm:$0xf]
  %v40 = vld [vmem:[%s1 + $0x10] sm:$0xf]
  %v41 = vld [vmem:[%s1 + $0x14] sm:$0xf]
  %v42 = vld [vmem:[%s1 + $0x18] sm:$0xf]
  %v43 = vld [vmem:[%s1 + $0x1c] sm:$0xf]
  %v44 = vld [vmem:[%s1 + $0x20] sm:$0xf]
  %v45 = vld [vmem:[%s1 + $0x24] sm:$0xf]
  %v46 = vld [vmem:[%s1 + $0x28] sm:$0xf]
  %v47 = vld [vmem:[%s1 + $0x2c] sm:$0xf]
  %v48 = vld [vmem:[%s1 + $0x30] sm:$0xf]
  %v49 = vld [vmem:[%s1 + $0x34] sm:$0xf]
  %v50 = vld [vmem:[%s1 + $0x38] sm:$0xf]
  %v51 = vld [vmem:[%s1 + $0x3c] sm:$0xf]
  %v52 = vld [vmem:[%s1 + $0x40] sm:$0xf]
  %v53 = vld [vmem:[%s1 + $0x44] sm:$0xf]
  %v54 = vld [vmem:[%s1 + $0x48] sm:$0xf]
  %v55 = vld [vmem:[%s1 + $0x4c] sm:$0xf]
  %v56 = vld [vmem:[%s1 + $0x50] sm:$0xf]
  %v57 = vld [vmem:[%s1 + $0x54] sm:$0xf]
  %v58 = vld [vmem:[%s1 + $0x58] sm:$0xf]
  %v59 = vld [vmem:[%s1 + $0x5c] sm:$0xf]
  %v60 = vld [vmem:[%s1 + $0x60] sm:$0xf]
  %v61 = vld [vmem:[%s1 + $0x64] sm:$0xf]
  %v62 = vld [vmem:[%s1 + $0x68] sm:$0xf]
  %v63 = vld [vmem:[%s1 + $0x6c] sm:$0xf]
  %v64 = vld [vmem:[%s1 + $0x70] sm:$0xf]
  %v65 = vld [vmem:[%s1 + $0x74] sm:$0xf]
  %v66 = vld [vmem:[%s1 + $0x78] sm:$0xf]
  %v67 = vld [vmem:[%s1 + $0x7c] sm:$0xf]
  %v68 = vld [vmem:[%s1 + $0x80] sm:$0xf]
  %v69 = vld [vmem:[%s1 + $0x84] sm:$0xf]
  %v70 = vld [vmem:[%s1 + $0x88] sm:$0xf]
  %v71 = vld [vmem:[%s1 + $0x8c] sm:$0xf]
  %v80 = vunpack.c.l.b16 %v28
  %v81 = vunpack.c.h.b16 %v28
  %v82 = vunpack.c.l.b16 %v29
  %v83 = vunpack.c.l.b16 %v30
  %v84 = vunpack.c.h.b16 %v30
  %v85 = vunpack.c.l.b16 %v31
  %v86 = vunpack.c.l.b16 %v32
  %v87 = vunpack.c.h.b16 %v32
  %v88 = vunpack.c.l.b16 %v33
  %v89 = vunpack.c.l.b16 %v34
  %v90 = vunpack.c.h.b16 %v34
  %v91 = vunpack.c.l.b16 %v35
  %v92 = vpack.c.b16 %v83, %v80
  %v93 = vpack.c.b16 %v84, %v81
  %v94 = vpack.c.b16 %v85, %v82
  %v95 = vpack.c.b16 %v89, %v86
  %v96 = vpack.c.b16 %v90, %v87
  %v97 = vpack.c.b16 %v91, %v88
  %v138 = vunpack.c.l.b16 %v36
  %v139 = vunpack.c.l.b16 %v37
  %v140 = vunpack.c.l.b16 %v38
  %v141 = vunpack.c.l.b16 %v39
  %v142 = vunpack.c.l.b16 %v40
  %v143 = vunpack.c.l.b16 %v41
  %v144 = vunpack.c.l.b16 %v42
  %v145 = vunpack.c.l.b16 %v43
  %v146 = vunpack.c.l.b16 %v44
  %v147 = vunpack.c.l.b16 %v45
  %v148 = vunpack.c.l.b16 %v46
  %v149 = vunpack.c.l.b16 %v47
  %v150 = vunpack.c.l.b16 %v48
  %v151 = vunpack.c.l.b16 %v49
  %v152 = vunpack.c.l.b16 %v50
  %v153 = vunpack.c.l.b16 %v51
  %v154 = vunpack.c.l.b16 %v52
  %v155 = vunpack.c.l.b16 %v53
  %v156 = vunpack.c.l.b16 %v54
  %v157 = vunpack.c.l.b16 %v55
  %v158 = vunpack.c.l.b16 %v56
  %v159 = vunpack.c.l.b16 %v57
  %v160 = vunpack.c.l.b16 %v58
  %v161 = vunpack.c.l.b16 %v59
  %v162 = vunpack.c.l.b16 %v60
  %v163 = vunpack.c.l.b16 %v61
  %v164 = vunpack.c.l.b16 %v62
  %v165 = vunpack.c.l.b16 %v63
  %v166 = vunpack.c.l.b16 %v64
  %v167 = vunpack.c.l.b16 %v65
  %v168 = vunpack.c.l.b16 %v66
  %v169 = vunpack.c.l.b16 %v67
  %v170 = vunpack.c.l.b16 %v68
  %v171 = vunpack.c.l.b16 %v69
  %v172 = vunpack.c.l.b16 %v70
  %v173 = vunpack.c.l.b16 %v71
  %v174 = vpack.c.b16 %v139, %v138
  %v175 = vpack.c.b16 %v141, %v140
  %v176 = vpack.c.b16 %v143, %v142
  %v177 = vpack.c.b16 %v145, %v144
  %v178 = vpack.c.b16 %v147, %v146
  %v179 = vpack.c.b16 %v149, %v148
  %v180 = vpack.c.b16 %v151, %v150
  %v181 = vpack.c.b16 %v153, %v152
  %v182 = vpack.c.b16 %v155, %v154
  %v183 = vpack.c.b16 %v157, %v156
  %v184 = vpack.c.b16 %v159, %v158
  %v185 = vpack.c.b16 %v161, %v160
  %v186 = vpack.c.b16 %v163, %v162
  %v187 = vpack.c.b16 %v165, %v164
  %v188 = vpack.c.b16 %v167, %v166
  %v189 = vpack.c.b16 %v169, %v168
  %v190 = vpack.c.b16 %v171, %v170
  %v191 = vpack.c.b16 %v173, %v172
  %vm210 = vcmask 261120
  %v212 = vsel %vm210, %v94, 0
  %v215 = vsel %vm210, %v97, 0
  %217 = vmatprep.subr.bf16.mxu0 0
  %218 = vmatpush1.bf16.msra.mxu0 %v174
  %219 = vmatprep.subr.bf16.mxu0 0
  %220 = vmatpush1.bf16.msra.mxu0 %v175
  %221 = vmatprep.subr.bf16.mxu0 0
  %222 = vmatpush1.bf16.msra.mxu0 %v176
  %223 = vmatprep.subr.bf16.mxu0 0
  %224 = vmatpush1.bf16.msra.mxu0 %v177
  %225 = vmatprep.subr.bf16.mxu0 0
  %226 = vmatpush1.bf16.msra.mxu0 %v178
  %227 = vmatprep.subr.bf16.mxu0 0
  %228 = vmatpush1.bf16.msra.mxu0 %v179
  %229 = vmatprep.subr.bf16.mxu0 0
  %230 = vmatpush1.bf16.msra.mxu0 %v180
  %231 = vmatprep.subr.bf16.mxu0 0
  %232 = vmatpush1.bf16.msra.mxu0 %v181
  %233 = vmatprep.subr.bf16.mxu0 0
  %234 = vmatpush1.bf16.msra.mxu0 %v182
  %235 = vmatprep.subr.bf16.mxu0 0
  %236 = vmatpush1.bf16.msra.mxu0 %v183
  %237 = vmatprep.subr.bf16.mxu0 0
  %238 = vmatpush1.bf16.msra.mxu0 %v184
  %239 = vmatprep.subr.bf16.mxu0 0
  %240 = vmatpush1.bf16.msra.mxu0 %v185
  %241 = vmatprep.subr.bf16.mxu0 0
  %242 = vmatpush1.bf16.msra.mxu0 %v186
  %243 = vmatprep.subr.bf16.mxu0 0
  %244 = vmatpush1.bf16.msra.mxu0 %v187
  %245 = vmatprep.subr.bf16.mxu0 0
  %246 = vmatpush1.bf16.msra.mxu0 %v188
  %247 = vmatprep.subr.bf16.mxu0 0
  %248 = vmatpush1.bf16.msra.mxu0 %v189
  %249 = vmatprep.mubr.bf16.mxu0 %v93
  %250 = vmatmul.mubr.bf16.gmra.mrb[0].mxu0 %v92
  %v251 = vpop.f32.mrb[0].mxu0
  %v252 = vadd.f32 0.0, %v251
  %v253 = vpop.f32.mrb[0].mxu0
  %v254 = vpop.f32.mrb[0].mxu0
  %v255 = vadd.f32 0.0, %v254
  %v256 = vpop.f32.mrb[0].mxu0
  %257 = vmatprep.mubr.bf16.mxu0 %v96
  %258 = vmatmul.mubr.bf16.gmra.mrb[0].mxu0 %v95
  %v259 = vpop.f32.mrb[0].mxu0
  %v260 = vadd.f32 0.0, %v259
  %v261 = vpop.f32.mrb[0].mxu0
  %v262 = vpop.f32.mrb[0].mxu0
  %v263 = vadd.f32 0.0, %v262
  %v264 = vpop.f32.mrb[0].mxu0
  %265 = vdwg.mxu0
  %266 = vmatprep.subr.bf16.mxu0 0
  %267 = vmatpush1.bf16.msra.mxu0 %v190
  %268 = vmatprep.subr.bf16.mxu0 0
  %269 = vmatpush1.bf16.msra.mxu0 %v191
  %270 = vmatprep.subr.bf16.mxu0 0
  %271 = vmatpush1.bf16.msra.mxu0 0
  %272 = vmatprep.subr.bf16.mxu0 0
  %273 = vmatpush1.bf16.msra.mxu0 0
  %274 = vmatprep.subr.bf16.mxu0 0
  %275 = vmatpush1.bf16.msra.mxu0 0
  %276 = vmatprep.subr.bf16.mxu0 0
  %277 = vmatpush1.bf16.msra.mxu0 0
  %278 = vmatprep.subr.bf16.mxu0 0
  %279 = vmatpush1.bf16.msra.mxu0 0
  %280 = vmatprep.subr.bf16.mxu0 0
  %281 = vmatpush1.bf16.msra.mxu0 0
  %282 = vmatprep.subr.bf16.mxu0 0
  %283 = vmatpush1.bf16.msra.mxu0 0
  %284 = vmatprep.subr.bf16.mxu0 0
  %285 = vmatpush1.bf16.msra.mxu0 0
  %286 = vmatprep.subr.bf16.mxu0 0
  %287 = vmatpush1.bf16.msra.mxu0 0
  %288 = vmatprep.subr.bf16.mxu0 0
  %289 = vmatpush1.bf16.msra.mxu0 0
  %290 = vmatprep.subr.bf16.mxu0 0
  %291 = vmatpush1.bf16.msra.mxu0 0
  %292 = vmatprep.subr.bf16.mxu0 0
  %293 = vmatpush1.bf16.msra.mxu0 0
  %294 = vmatprep.subr.bf16.mxu0 0
  %295 = vmatpush1.bf16.msra.mxu0 0
  %296 = vmatprep.subr.bf16.mxu0 0
  %297 = vmatpush1.bf16.msra.mxu0 0
  %298 = vmatprep.mubr.bf16.mxu0 0
  %299 = vmatmul.mubr.bf16.gmra.mrb[0].mxu0 %v212
  %v300 = vpop.f32.mrb[0].mxu0
  %v301 = vadd.f32 %v252, %v300
  %v302 = vpop.f32.mrb[0].mxu0
  %v303 = vpop.f32.mrb[0].mxu0
  %v304 = vadd.f32 %v255, %v303
  %v305 = vpop.f32.mrb[0].mxu0
  %306 = vmatprep.mubr.bf16.mxu0 0
  %307 = vmatmul.mubr.bf16.gmra.mrb[0].mxu0 %v215
  %v308 = vpop.f32.mrb[0].mxu0
  %v309 = vadd.f32 %v260, %v308
  %v310 = vpop.f32.mrb[0].mxu0
  %v311 = vpop.f32.mrb[0].mxu0
  %v312 = vadd.f32 %v263, %v311
  %v313 = vpop.f32.mrb[0].mxu0
  %314 = vdwg.mxu0
  %315 = vst [vmem:[%s2] sm:$0xff] %v301
  %316 = vst [vmem:[%s2 + $0x8] sm:$0xff] %v304
  %317 = vst [vmem:[%s2 + $0x10] sm:$0xff] %v309
  %318 = vst [vmem:[%s2 + $0x18] sm:$0xff] %v312
  %v319 = vld [vmem:[%s3] sm:$0xff]
  %v320 = vld [vmem:[%s3 + $0x8] sm:$0xff]
  %v321 = vld [vmem:[%s3 + $0x10] sm:$0xff]
  %v322 = vld [vmem:[%s3 + $0x18] sm:$0xff]
  %323 = vadd.xlane.f32.xlu0 %v301
  %v324 = vpop.xlane.xlu0 %323
  %325 = vadd.xlane.f32.xlu0 %v304
  %v326 = vpop.xlane.xlu0 %325
  %327 = vadd.xlane.f32.xlu0 %v309
  %v328 = vpop.xlane.xlu0 %327
  %329 = vadd.xlane.f32.xlu0 %v312
  %v330 = vpop.xlane.xlu0 %329
  %v331 = vadd.f32 %v319, %v324
  %v332 = vadd.f32 %v320, %v326
  %v333 = vadd.f32 %v321, %v328
  %v334 = vadd.f32 %v322, %v330
  %vm335 = vcmask 7168
  %336 = vst.msk [vmem:[%s3] sm:$0xff] %vm335, %v331
  %337 = vst.msk [vmem:[%s3 + $0x8] sm:$0xff] %vm335, %v332
  %338 = vst.msk [vmem:[%s3 + $0x10] sm:$0xff] %vm335, %v333
  %339 = vst.msk [vmem:[%s3 + $0x18] sm:$0xff] %vm335, %v334
  %v340 = vld [vmem:[%s4] sm:$0xff]
  %v341 = vld [vmem:[%s4 + $0x8] sm:$0xff]
  %v342 = vld [vmem:[%s4 + $0x10] sm:$0xff]
  %v343 = vld [vmem:[%s4 + $0x18] sm:$0xff]
  %v344 = vmul.f32 %v301, %v301
  %v345 = vmul.f32 %v304, %v304
  %v346 = vmul.f32 %v309, %v309
  %v347 = vmul.f32 %v312, %v312
  %348 = vadd.xlane.f32.xlu0 %v344
  %v349 = vpop.xlane.xlu0 %348
  %350 = vadd.xlane.f32.xlu0 %v345
  %v351 = vpop.xlane.xlu0 %350
  %352 = vadd.xlane.f32.xlu0 %v346
  %v353 = vpop.xlane.xlu0 %352
  %354 = vadd.xlane.f32.xlu0 %v347
  %v355 = vpop.xlane.xlu0 %354
  %v356 = vadd.f32 %v340, %v349
  %v357 = vadd.f32 %v341, %v351
  %v358 = vadd.f32 %v342, %v353
  %v359 = vadd.f32 %v343, %v355
  %360 = vst.msk [vmem:[%s4] sm:$0xff] %vm335, %v356
  %361 = vst.msk [vmem:[%s4 + $0x8] sm:$0xff] %vm335, %v357
  %362 = vst.msk [vmem:[%s4 + $0x10] sm:$0xff] %vm335, %v358
  %363 = vst.msk [vmem:[%s4 + $0x18] sm:$0xff] %vm335, %v359
  // Predicated region
  $region14: #{dn_autoencoder_forward.24} parent=0 // pred_check
    _
  $region15: #{dn_autoencoder_forward.24} parent=0 // pred_check_branch
    %365 = sbr.rel (0) target = $region17
  $region16: #{dn_autoencoder_forward.24} parent=0 // pred_region
    _
  $region17: #{dn_autoencoder_forward.24} parent=0 // pred_fallthru
    _
  // Predicated region
  $region18: #{dn_autoencoder_forward.24} parent=0 // pred_check
    _
  $region19: #{dn_autoencoder_forward.24} parent=0 // pred_check_branch
    %367 = sbr.rel (0) target = $region21
  $region20: #{dn_autoencoder_forward.24} parent=0 // pred_region
    _
  $region21: #{dn_autoencoder_forward.24} parent=0 // pred_fallthru
    _
  // Predicated region
  $region22: #{dn_autoencoder_forward.24} parent=0 // pred_check
    _
  $region23: #{dn_autoencoder_forward.24} parent=0 // pred_check_branch
    %369 = sbr.rel (0) target = $region25
  $region24: #{dn_autoencoder_forward.24} parent=0 // pred_region
    _
  $region25: #{dn_autoencoder_forward.24} parent=0 // pred_fallthru
    _
  // Predicated region
  $region26: #{dn_autoencoder_forward.24} parent=0 // pred_check
    _
  $region27: #{dn_autoencoder_forward.24} parent=0 // pred_check_branch
    %371 = sbr.rel (0) target = $region29
  $region28: #{dn_autoencoder_forward.24} parent=0 // pred_region
    _
  $region29: #{dn_autoencoder_forward.24} parent=0 // pred_fallthru
    _
  // Predicated region
  $region30: #{dn_autoencoder_forward.24} parent=0 // pred_check
    _
  $region31: #{dn_autoencoder_forward.24} parent=0 // pred_check_branch
    %373 = sbr.rel (0) target = $region33
  $region32: #{dn_autoencoder_forward.24} parent=0 // pred_region
    _
  $region33: #{dn_autoencoder_forward.24} parent=0 // pred_fallthru
    _
  // Predicated region
  $region34: #{dn_autoencoder_forward.24} parent=0 // pred_check
    _
  $region35: #{dn_autoencoder_forward.24} parent=0 // pred_check_branch
    %375 = sbr.rel (0) target = $region37
  $region36: #{dn_autoencoder_forward.24} parent=0 // pred_region
    _
  $region37: #{dn_autoencoder_forward.24} parent=0 // pred_fallthru
    _

// kernel: dn_autoencoder_forward.28
$region0: #{dn_autoencoder_forward.28}
  #allocation0 [shape = 'u32[]', space=smem, size = 0x4, offset = 0x4, fixed_abs, tag = 'smem constant byte address 0x4 - core index']
  #allocation1 [shape = 'u32[144,128]{1,0:T(1,128)}', space=vmem, size = 0x12000, scoped, tag = 'internal scratch']
  %s0 = inlined_call_operand.vmem [shape: bf16[32,288], index: 0, kind: input, shape index: {}]
  %s1 = inlined_call_operand.vmem [shape: bf16[288,128], index: 1, kind: input, shape index: {}]
  %s2 = inlined_call_operand.vmem [shape: f32[32,128], index: 2, kind: output, shape index: {0}]
  %s3 = inlined_call_operand.hbm [shape: f32[32,1], index: 3, kind: output, shape index: {1}]
  %s4 = inlined_call_operand.hbm [shape: f32[32,1], index: 4, kind: output, shape index: {2}]
  %5 = xla_tuple %s2, %s3, %s4
  %s6 = sld [smem:[#allocation0]]
  $region38: #{dn_autoencoder_forward.28} parent=0
    _
  %s8 = ssub.s32 1, %s6
  %s9 = scalar_select 0, %s8, %s6
  $region1: #{dn_autoencoder_forward.28} parent=0
    #allocation2 [shape = 'u8[16384]{0}', space=vmem, size = 0x4000, scoped, tag = 'output window, operand 1, single buffered']
    #allocation3 [shape = 's32[1]{0}', space=sflag, size = 0x4, scoped, tag = 'scoped memory for dn_autoencoder_forward.28']
    #allocation4 [shape = 'u8[16384]{0}', space=vmem, size = 0x4000, scoped, tag = 'output window, operand 2, single buffered']
    #allocation5 [shape = 's32[1]{0}', space=sflag, size = 0x4, scoped, tag = 'scoped memory for dn_autoencoder_forward.28']
    %10 = vsyncpa [#allocation3], 0
    %11 = vsyncpa [#allocation5], 0
    // Predicated region
    $region2: #{dn_autoencoder_forward.28} parent=1 // pred_check
      _
    $region3: #{dn_autoencoder_forward.28} parent=1 // pred_check_branch
      %13 = sbr.rel (0) target = $region5
    $region4: #{dn_autoencoder_forward.28} parent=1 // pred_region
      _
    $region5: #{dn_autoencoder_forward.28} parent=1 // pred_fallthru
      _
    // Predicated region
    $region6: #{dn_autoencoder_forward.28} parent=1 // pred_check
      _
    $region7: #{dn_autoencoder_forward.28} parent=1 // pred_check_branch
      %15 = sbr.rel (0) target = $region9
    $region8: #{dn_autoencoder_forward.28} parent=1 // pred_region
      _
    $region9: #{dn_autoencoder_forward.28} parent=1 // pred_fallthru
      _
    %p17 = scmp.eq.s32.totalorder 0, 0
    // Predicated region
    $region10: #{dn_autoencoder_forward.28} parent=1 // pred_check
      %p18 = pneg %p17
    $region11: #{dn_autoencoder_forward.28} parent=1 // pred_check_branch
      %20 = sbr.rel (%p18) target = $region13
    $region12: #{dn_autoencoder_forward.28} parent=1 // pred_region
      %vm21 = vcmask 7168
      %22 = vst.msk [vmem:[#allocation2] sm:$0xff] %vm21, 0.0
      %23 = vst.msk [vmem:[#allocation2 + $0x8] sm:$0xff] %vm21, 0.0
      %24 = vst.msk [vmem:[#allocation2 + $0x10] sm:$0xff] %vm21, 0.0
      %25 = vst.msk [vmem:[#allocation2 + $0x18] sm:$0xff] %vm21, 0.0
      %26 = vst.msk [vmem:[#allocation4] sm:$0xff] %vm21, 0.0
      %27 = vst.msk [vmem:[#allocation4 + $0x8] sm:$0xff] %vm21, 0.0
      %28 = vst.msk [vmem:[#allocation4 + $0x10] sm:$0xff] %vm21, 0.0
      %29 = vst.msk [vmem:[#allocation4 + $0x18] sm:$0xff] %vm21, 0.0
    $region13: #{dn_autoencoder_forward.28} parent=1 // pred_fallthru
      _
    %v30 = vld [vmem:[%s0] sm:$0xff]
    %v31 = vld [vmem:[%s0 + $0x8] sm:$0xf]
    %v32 = vld [vmem:[%s0 + $0xc] sm:$0xff]
    %v33 = vld [vmem:[%s0 + $0x14] sm:$0xf]
    %v34 = vld [vmem:[%s0 + $0x18] sm:$0xff]
    %v35 = vld [vmem:[%s0 + $0x20] sm:$0xf]
    %v36 = vld [vmem:[%s0 + $0x24] sm:$0xff]
    %v37 = vld [vmem:[%s0 + $0x2c] sm:$0xf]
    %v38 = vld [vmem:[%s1] sm:$0xf]
    %v39 = vld [vmem:[%s1 + $0x4] sm:$0xf]
    %v40 = vld [vmem:[%s1 + $0x8] sm:$0xf]
    %v41 = vld [vmem:[%s1 + $0xc] sm:$0xf]
    %v42 = vld [vmem:[%s1 + $0x10] sm:$0xf]
    %v43 = vld [vmem:[%s1 + $0x14] sm:$0xf]
    %v44 = vld [vmem:[%s1 + $0x18] sm:$0xf]
    %v45 = vld [vmem:[%s1 + $0x1c] sm:$0xf]
    %v46 = vld [vmem:[%s1 + $0x20] sm:$0xf]
    %v47 = vld [vmem:[%s1 + $0x24] sm:$0xf]
    %v48 = vld [vmem:[%s1 + $0x28] sm:$0xf]
    %v49 = vld [vmem:[%s1 + $0x2c] sm:$0xf]
    %v50 = vld [vmem:[%s1 + $0x30] sm:$0xf]
    %v51 = vld [vmem:[%s1 + $0x34] sm:$0xf]
    %v52 = vld [vmem:[%s1 + $0x38] sm:$0xf]
    %v53 = vld [vmem:[%s1 + $0x3c] sm:$0xf]
    %v54 = vld [vmem:[%s1 + $0x40] sm:$0xf]
    %v55 = vld [vmem:[%s1 + $0x44] sm:$0xf]
    %v56 = vld [vmem:[%s1 + $0x48] sm:$0xf]
    %v57 = vld [vmem:[%s1 + $0x4c] sm:$0xf]
    %v58 = vld [vmem:[%s1 + $0x50] sm:$0xf]
    %v59 = vld [vmem:[%s1 + $0x54] sm:$0xf]
    %v60 = vld [vmem:[%s1 + $0x58] sm:$0xf]
    %v61 = vld [vmem:[%s1 + $0x5c] sm:$0xf]
    %v62 = vld [vmem:[%s1 + $0x60] sm:$0xf]
    %v63 = vld [vmem:[%s1 + $0x64] sm:$0xf]
    %v64 = vld [vmem:[%s1 + $0x68] sm:$0xf]
    %v65 = vld [vmem:[%s1 + $0x6c] sm:$0xf]
    %v66 = vld [vmem:[%s1 + $0x70] sm:$0xf]
    %v67 = vld [vmem:[%s1 + $0x74] sm:$0xf]
    %v68 = vld [vmem:[%s1 + $0x78] sm:$0xf]
    %v69 = vld [vmem:[%s1 + $0x7c] sm:$0xf]
    %v70 = vld [vmem:[%s1 + $0x80] sm:$0xf]
    %v71 = vld [vmem:[%s1 + $0x84] sm:$0xf]
    %v72 = vld [vmem:[%s1 + $0x88] sm:$0xf]
    %v73 = vld [vmem:[%s1 + $0x8c] sm:$0xf]
    %v82 = vunpack.c.l.b16 %v30
    %v83 = vunpack.c.h.b16 %v30
    %v84 = vunpack.c.l.b16 %v31
    %v85 = vunpack.c.l.b16 %v32
    %v86 = vunpack.c.h.b16 %v32
    %v87 = vunpack.c.l.b16 %v33
    %v88 = vunpack.c.l.b16 %v34
    %v89 = vunpack.c.h.b16 %v34
    %v90 = vunpack.c.l.b16 %v35
    %v91 = vunpack.c.l.b16 %v36
    %v92 = vunpack.c.h.b16 %v36
    %v93 = vunpack.c.l.b16 %v37
    %v94 = vpack.c.b16 %v85, %v82
    %v95 = vpack.c.b16 %v86, %v83
    %v96 = vpack.c.b16 %v87, %v84
    %v97 = vpack.c.b16 %v91, %v88
    %v98 = vpack.c.b16 %v92, %v89
    %v99 = vpack.c.b16 %v93, %v90
    %v140 = vunpack.c.l.b16 %v38
    %v141 = vunpack.c.l.b16 %v39
    %v142 = vunpack.c.l.b16 %v40
    %v143 = vunpack.c.l.b16 %v41
    %v144 = vunpack.c.l.b16 %v42
    %v145 = vunpack.c.l.b16 %v43
    %v146 = vunpack.c.l.b16 %v44
    %v147 = vunpack.c.l.b16 %v45
    %v148 = vunpack.c.l.b16 %v46
    %v149 = vunpack.c.l.b16 %v47
    %v150 = vunpack.c.l.b16 %v48
    %v151 = vunpack.c.l.b16 %v49
    %v152 = vunpack.c.l.b16 %v50
    %v153 = vunpack.c.l.b16 %v51
    %v154 = vunpack.c.l.b16 %v52
    %v155 = vunpack.c.l.b16 %v53
    %v156 = vunpack.c.l.b16 %v54
    %v157 = vunpack.c.l.b16 %v55
    %v158 = vunpack.c.l.b16 %v56
    %v159 = vunpack.c.l.b16 %v57
    %v160 = vunpack.c.l.b16 %v58
    %v161 = vunpack.c.l.b16 %v59
    %v162 = vunpack.c.l.b16 %v60
    %v163 = vunpack.c.l.b16 %v61
    %v164 = vunpack.c.l.b16 %v62
    %v165 = vunpack.c.l.b16 %v63
    %v166 = vunpack.c.l.b16 %v64
    %v167 = vunpack.c.l.b16 %v65
    %v168 = vunpack.c.l.b16 %v66
    %v169 = vunpack.c.l.b16 %v67
    %v170 = vunpack.c.l.b16 %v68
    %v171 = vunpack.c.l.b16 %v69
    %v172 = vunpack.c.l.b16 %v70
    %v173 = vunpack.c.l.b16 %v71
    %v174 = vunpack.c.l.b16 %v72
    %v175 = vunpack.c.l.b16 %v73
    %v176 = vpack.c.b16 %v141, %v140
    %v177 = vpack.c.b16 %v143, %v142
    %v178 = vpack.c.b16 %v145, %v144
    %v179 = vpack.c.b16 %v147, %v146
    %v180 = vpack.c.b16 %v149, %v148
    %v181 = vpack.c.b16 %v151, %v150
    %v182 = vpack.c.b16 %v153, %v152
    %v183 = vpack.c.b16 %v155, %v154
    %v184 = vpack.c.b16 %v157, %v156
    %v185 = vpack.c.b16 %v159, %v158
    %v186 = vpack.c.b16 %v161, %v160
    %v187 = vpack.c.b16 %v163, %v162
    %v188 = vpack.c.b16 %v165, %v164
    %v189 = vpack.c.b16 %v167, %v166
    %v190 = vpack.c.b16 %v169, %v168
    %v191 = vpack.c.b16 %v171, %v170
    %v192 = vpack.c.b16 %v173, %v172
    %v193 = vpack.c.b16 %v175, %v174
    %vm212 = vcmask 261120
    %v214 = vsel %vm212, %v96, 0
    %v217 = vsel %vm212, %v99, 0
    %219 = vmatprep.subr.bf16.mxu0 0
    %220 = vmatpush1.bf16.msra.mxu0 %v176
    %221 = vmatprep.subr.bf16.mxu0 0
    %222 = vmatpush1.bf16.msra.mxu0 %v177
    %223 = vmatprep.subr.bf16.mxu0 0
    %224 = vmatpush1.bf16.msra.mxu0 %v178
    %225 = vmatprep.subr.bf16.mxu0 0
    %226 = vmatpush1.bf16.msra.mxu0 %v179
    %227 = vmatprep.subr.bf16.mxu0 0
    %228 = vmatpush1.bf16.msra.mxu0 %v180
    %229 = vmatprep.subr.bf16.mxu0 0
    %230 = vmatpush1.bf16.msra.mxu0 %v181
    %231 = vmatprep.subr.bf16.mxu0 0
    %232 = vmatpush1.bf16.msra.mxu0 %v182
    %233 = vmatprep.subr.bf16.mxu0 0
    %234 = vmatpush1.bf16.msra.mxu0 %v183
    %235 = vmatprep.subr.bf16.mxu0 0
    %236 = vmatpush1.bf16.msra.mxu0 %v184
    %237 = vmatprep.subr.bf16.mxu0 0
    %238 = vmatpush1.bf16.msra.mxu0 %v185
    %239 = vmatprep.subr.bf16.mxu0 0
    %240 = vmatpush1.bf16.msra.mxu0 %v186
    %241 = vmatprep.subr.bf16.mxu0 0
    %242 = vmatpush1.bf16.msra.mxu0 %v187
    %243 = vmatprep.subr.bf16.mxu0 0
    %244 = vmatpush1.bf16.msra.mxu0 %v188
    %245 = vmatprep.subr.bf16.mxu0 0
    %246 = vmatpush1.bf16.msra.mxu0 %v189
    %247 = vmatprep.subr.bf16.mxu0 0
    %248 = vmatpush1.bf16.msra.mxu0 %v190
    %249 = vmatprep.subr.bf16.mxu0 0
    %250 = vmatpush1.bf16.msra.mxu0 %v191
    %251 = vmatprep.mubr.bf16.mxu0 %v95
    %252 = vmatmul.mubr.bf16.gmra.mrb[0].mxu0 %v94
    %v253 = vpop.f32.mrb[0].mxu0
    %v254 = vadd.f32 0.0, %v253
    %v255 = vpop.f32.mrb[0].mxu0
    %v256 = vpop.f32.mrb[0].mxu0
    %v257 = vadd.f32 0.0, %v256
    %v258 = vpop.f32.mrb[0].mxu0
    %259 = vmatprep.mubr.bf16.mxu0 %v98
    %260 = vmatmul.mubr.bf16.gmra.mrb[0].mxu0 %v97
    %v261 = vpop.f32.mrb[0].mxu0
    %v262 = vadd.f32 0.0, %v261
    %v263 = vpop.f32.mrb[0].mxu0
    %v264 = vpop.f32.mrb[0].mxu0
    %v265 = vadd.f32 0.0, %v264
    %v266 = vpop.f32.mrb[0].mxu0
    %267 = vdwg.mxu0
    %268 = vmatprep.subr.bf16.mxu0 0
    %269 = vmatpush1.bf16.msra.mxu0 %v192
    %270 = vmatprep.subr.bf16.mxu0 0
    %271 = vmatpush1.bf16.msra.mxu0 %v193
    %272 = vmatprep.subr.bf16.mxu0 0
    %273 = vmatpush1.bf16.msra.mxu0 0
    %274 = vmatprep.subr.bf16.mxu0 0
    %275 = vmatpush1.bf16.msra.mxu0 0
    %276 = vmatprep.subr.bf16.mxu0 0
    %277 = vmatpush1.bf16.msra.mxu0 0
    %278 = vmatprep.subr.bf16.mxu0 0
    %279 = vmatpush1.bf16.msra.mxu0 0
    %280 = vmatprep.subr.bf16.mxu0 0
    %281 = vmatpush1.bf16.msra.mxu0 0
    %282 = vmatprep.subr.bf16.mxu0 0
    %283 = vmatpush1.bf16.msra.mxu0 0
    %284 = vmatprep.subr.bf16.mxu0 0
    %285 = vmatpush1.bf16.msra.mxu0 0
    %286 = vmatprep.subr.bf16.mxu0 0
    %287 = vmatpush1.bf16.msra.mxu0 0
    %288 = vmatprep.subr.bf16.mxu0 0
    %289 = vmatpush1.bf16.msra.mxu0 0
    %290 = vmatprep.subr.bf16.mxu0 0
    %291 = vmatpush1.bf16.msra.mxu0 0
    %292 = vmatprep.subr.bf16.mxu0 0
    %293 = vmatpush1.bf16.msra.mxu0 0
    %294 = vmatprep.subr.bf16.mxu0 0
    %295 = vmatpush1.bf16.msra.mxu0 0
    %296 = vmatprep.subr.bf16.mxu0 0
    %297 = vmatpush1.bf16.msra.mxu0 0
    %298 = vmatprep.subr.bf16.mxu0 0
    %299 = vmatpush1.bf16.msra.mxu0 0
    %300 = vmatprep.mubr.bf16.mxu0 0
    %301 = vmatmul.mubr.bf16.gmra.mrb[0].mxu0 %v214
    %v302 = vpop.f32.mrb[0].mxu0
    %v303 = vadd.f32 %v254, %v302
    %v304 = vpop.f32.mrb[0].mxu0
    %v305 = vpop.f32.mrb[0].mxu0
    %v306 = vadd.f32 %v257, %v305
    %v307 = vpop.f32.mrb[0].mxu0
    %308 = vmatprep.mubr.bf16.mxu0 0
    %309 = vmatmul.mubr.bf16.gmra.mrb[0].mxu0 %v217
    %v310 = vpop.f32.mrb[0].mxu0
    %v311 = vadd.f32 %v262, %v310
    %v312 = vpop.f32.mrb[0].mxu0
    %v313 = vpop.f32.mrb[0].mxu0
    %v314 = vadd.f32 %v265, %v313
    %v315 = vpop.f32.mrb[0].mxu0
    %316 = vdwg.mxu0
    %317 = vst [vmem:[%s2] sm:$0xff] %v303
    %318 = vst [vmem:[%s2 + $0x8] sm:$0xff] %v306
    %319 = vst [vmem:[%s2 + $0x10] sm:$0xff] %v311
    %320 = vst [vmem:[%s2 + $0x18] sm:$0xff] %v314
    %v321 = vld [vmem:[#allocation2] sm:$0xff]
    %v322 = vld [vmem:[#allocation2 + $0x8] sm:$0xff]
    %v323 = vld [vmem:[#allocation2 + $0x10] sm:$0xff]
    %v324 = vld [vmem:[#allocation2 + $0x18] sm:$0xff]
    %325 = vadd.xlane.f32.xlu0 %v303
    %v326 = vpop.xlane.xlu0 %325
    %327 = vadd.xlane.f32.xlu0 %v306
    %v328 = vpop.xlane.xlu0 %327
    %329 = vadd.xlane.f32.xlu0 %v311
    %v330 = vpop.xlane.xlu0 %329
    %331 = vadd.xlane.f32.xlu0 %v314
    %v332 = vpop.xlane.xlu0 %331
    %v333 = vadd.f32 %v321, %v326
    %v334 = vadd.f32 %v322, %v328
    %v335 = vadd.f32 %v323, %v330
    %v336 = vadd.f32 %v324, %v332
    %vm337 = vcmask 7168
    %338 = vst.msk [vmem:[#allocation2] sm:$0xff] %vm337, %v333
    %339 = vst.msk [vmem:[#allocation2 + $0x8] sm:$0xff] %vm337, %v334
    %340 = vst.msk [vmem:[#allocation2 + $0x10] sm:$0xff] %vm337, %v335
    %341 = vst.msk [vmem:[#allocation2 + $0x18] sm:$0xff] %vm337, %v336
    %v342 = vld [vmem:[#allocation4] sm:$0xff]
    %v343 = vld [vmem:[#allocation4 + $0x8] sm:$0xff]
    %v344 = vld [vmem:[#allocation4 + $0x10] sm:$0xff]
    %v345 = vld [vmem:[#allocation4 + $0x18] sm:$0xff]
    %v346 = vmul.f32 %v303, %v303
    %v347 = vmul.f32 %v306, %v306
    %v348 = vmul.f32 %v311, %v311
    %v349 = vmul.f32 %v314, %v314
    %350 = vadd.xlane.f32.xlu0 %v346
    %v351 = vpop.xlane.xlu0 %350
    %352 = vadd.xlane.f32.xlu0 %v347
    %v353 = vpop.xlane.xlu0 %352
    %354 = vadd.xlane.f32.xlu0 %v348
    %v355 = vpop.xlane.xlu0 %354
    %356 = vadd.xlane.f32.xlu0 %v349
    %v357 = vpop.xlane.xlu0 %356
    %v358 = vadd.f32 %v342, %v351
    %v359 = vadd.f32 %v343, %v353
    %v360 = vadd.f32 %v344, %v355
    %v361 = vadd.f32 %v345, %v357
    %362 = vst.msk [vmem:[#allocation4] sm:$0xff] %vm337, %v358
    %363 = vst.msk [vmem:[#allocation4 + $0x8] sm:$0xff] %vm337, %v359
    %364 = vst.msk [vmem:[#allocation4 + $0x10] sm:$0xff] %vm337, %v360
    %365 = vst.msk [vmem:[#allocation4 + $0x18] sm:$0xff] %vm337, %v361
    // Predicated region
    $region14: #{dn_autoencoder_forward.28} parent=1 // pred_check
      _
    $region15: #{dn_autoencoder_forward.28} parent=1 // pred_check_branch
      %367 = sbr.rel (0) target = $region17
    $region16: #{dn_autoencoder_forward.28} parent=1 // pred_region
      _
    $region17: #{dn_autoencoder_forward.28} parent=1 // pred_fallthru
      _
    // Predicated region
    $region18: #{dn_autoencoder_forward.28} parent=1 // pred_check
      _
    $region19: #{dn_autoencoder_forward.28} parent=1 // pred_check_branch
      %369 = sbr.rel (0) target = $region21
    $region20: #{dn_autoencoder_forward.28} parent=1 // pred_region
      %s371 = ssub.s32 512, 512
      %372 = vsyncadd [#allocation3], %s371
      %s373 = sshll.u32 [#allocation2], 4
      %s374 = int_to_ptr.vmem [resolvable:$true] %s373
      %379 = dma.vmem_to_hbm [thread:$0]  %s374, 512, %s3, [#allocation3], 128, 128, 8
    $region21: #{dn_autoencoder_forward.28} parent=1 // pred_fallthru
      _
    // Predicated region
    $region22: #{dn_autoencoder_forward.28} parent=1 // pred_check
      _
    $region23: #{dn_autoencoder_forward.28} parent=1 // pred_check_branch
      %381 = sbr.rel (0) target = $region25
    $region24: #{dn_autoencoder_forward.28} parent=1 // pred_region
      %s383 = ssub.s32 512, 512
      %384 = vsyncadd [#allocation5], %s383
      %s385 = sshll.u32 [#allocation4], 4
      %s386 = int_to_ptr.vmem [resolvable:$true] %s385
      %391 = dma.vmem_to_hbm [thread:$0]  %s386, 512, %s4, [#allocation5], 128, 128, 8
    $region25: #{dn_autoencoder_forward.28} parent=1 // pred_fallthru
      _
    // Predicated region
    $region26: #{dn_autoencoder_forward.28} parent=1 // pred_check
      _
    $region27: #{dn_autoencoder_forward.28} parent=1 // pred_check_branch
      %393 = sbr.rel (0) target = $region29
    $region28: #{dn_autoencoder_forward.28} parent=1 // pred_region
      _
    $region29: #{dn_autoencoder_forward.28} parent=1 // pred_fallthru
      _
    // Predicated region
    $region30: #{dn_autoencoder_forward.28} parent=1 // pred_check
      _
    $region31: #{dn_autoencoder_forward.28} parent=1 // pred_check_branch
      %395 = sbr.rel (0) target = $region33
    $region32: #{dn_autoencoder_forward.28} parent=1 // pred_region
      %396 = dma.done [#allocation3], 512
    $region33: #{dn_autoencoder_forward.28} parent=1 // pred_fallthru
      _
    // Predicated region
    $region34: #{dn_autoencoder_forward.28} parent=1 // pred_check
      _
    $region35: #{dn_autoencoder_forward.28} parent=1 // pred_check_branch
      %398 = sbr.rel (0) target = $region37
    $region36: #{dn_autoencoder_forward.28} parent=1 // pred_region
      %399 = dma.done [#allocation5], 512
    $region37: #{dn_autoencoder_forward.28} parent=1 // pred_fallthru
      _
    %400 = vsyncpa [#allocation3], 1
    %401 = vsyncpa [#allocation5], 1

// kernel: dn_autoencoder_forward.33
$region0: #{dn_autoencoder_forward.33}
  #allocation0 [shape = 'u32[]', space=smem, size = 0x4, offset = 0x4, fixed_abs, tag = 'smem constant byte address 0x4 - core index']
  #allocation1 [shape = 'u32[144,128]{1,0:T(1,128)}', space=vmem, size = 0x12000, scoped, tag = 'internal scratch']
  %s0 = inlined_call_operand.vmem [shape: bf16[32,288], index: 0, kind: input, shape index: {}]
  %s1 = inlined_call_operand.vmem [shape: bf16[288,512], index: 1, kind: input, shape index: {}]
  %s2 = inlined_call_operand.vmem [shape: f32[32,512], index: 2, kind: output, shape index: {0}]
  %s3 = inlined_call_operand.vmem [shape: f32[32,1], index: 3, kind: output, shape index: {1}]
  %s4 = inlined_call_operand.vmem [shape: f32[32,1], index: 4, kind: output, shape index: {2}]
  %5 = xla_tuple %s2, %s3, %s4
  %s6 = sld [smem:[#allocation0]]
  $region38: #{dn_autoencoder_forward.33} parent=0
    _
  %s8 = ssub.s32 1, %s6
  %s9 = scalar_select 0, %s8, %s6
  // Predicated region
  $region2: #{dn_autoencoder_forward.33} parent=0 // pred_check
    _
  $region3: #{dn_autoencoder_forward.33} parent=0 // pred_check_branch
    %11 = sbr.rel (0) target = $region5
  $region4: #{dn_autoencoder_forward.33} parent=0 // pred_region
    _
  $region5: #{dn_autoencoder_forward.33} parent=0 // pred_fallthru
    _
  // Predicated region
  $region6: #{dn_autoencoder_forward.33} parent=0 // pred_check
    _
  $region7: #{dn_autoencoder_forward.33} parent=0 // pred_check_branch
    %13 = sbr.rel (0) target = $region9
  $region8: #{dn_autoencoder_forward.33} parent=0 // pred_region
    _
  $region9: #{dn_autoencoder_forward.33} parent=0 // pred_fallthru
    _
  %p15 = scmp.eq.s32.totalorder 0, 0
  // Predicated region
  $region10: #{dn_autoencoder_forward.33} parent=0 // pred_check
    %p16 = pneg %p15
  $region11: #{dn_autoencoder_forward.33} parent=0 // pred_check_branch
    %18 = sbr.rel (%p16) target = $region13
  $region12: #{dn_autoencoder_forward.33} parent=0 // pred_region
    %vm19 = vcmask 7168
    %20 = vst.msk [vmem:[%s3] sm:$0xff] %vm19, 0.0
    %21 = vst.msk [vmem:[%s3 + $0x8] sm:$0xff] %vm19, 0.0
    %22 = vst.msk [vmem:[%s3 + $0x10] sm:$0xff] %vm19, 0.0
    %23 = vst.msk [vmem:[%s3 + $0x18] sm:$0xff] %vm19, 0.0
    %24 = vst.msk [vmem:[%s4] sm:$0xff] %vm19, 0.0
    %25 = vst.msk [vmem:[%s4 + $0x8] sm:$0xff] %vm19, 0.0
    %26 = vst.msk [vmem:[%s4 + $0x10] sm:$0xff] %vm19, 0.0
    %27 = vst.msk [vmem:[%s4 + $0x18] sm:$0xff] %vm19, 0.0
  $region13: #{dn_autoencoder_forward.33} parent=0 // pred_fallthru
    _
  %v28 = vld [vmem:[%s0] sm:$0xff]
  %v29 = vld [vmem:[%s0 + $0x8] sm:$0xf]
  %v30 = vld [vmem:[%s0 + $0xc] sm:$0xff]
  %v31 = vld [vmem:[%s0 + $0x14] sm:$0xf]
  %v32 = vld [vmem:[%s0 + $0x18] sm:$0xff]
  %v33 = vld [vmem:[%s0 + $0x20] sm:$0xf]
  %v34 = vld [vmem:[%s0 + $0x24] sm:$0xff]
  %v35 = vld [vmem:[%s0 + $0x2c] sm:$0xf]
  %v36 = vld [vmem:[%s1] sm:$0xff]
  %v37 = vld [vmem:[%s1 + $0x8] sm:$0xff]
  %v38 = vld [vmem:[%s1 + $0x10] sm:$0xff]
  %v39 = vld [vmem:[%s1 + $0x18] sm:$0xff]
  %v40 = vld [vmem:[%s1 + $0x20] sm:$0xff]
  %v41 = vld [vmem:[%s1 + $0x28] sm:$0xff]
  %v42 = vld [vmem:[%s1 + $0x30] sm:$0xff]
  %v43 = vld [vmem:[%s1 + $0x38] sm:$0xff]
  %v44 = vld [vmem:[%s1 + $0x40] sm:$0xff]
  %v45 = vld [vmem:[%s1 + $0x48] sm:$0xff]
  %v46 = vld [vmem:[%s1 + $0x50] sm:$0xff]
  %v47 = vld [vmem:[%s1 + $0x58] sm:$0xff]
  %v48 = vld [vmem:[%s1 + $0x60] sm:$0xff]
  %v49 = vld [vmem:[%s1 + $0x68] sm:$0xff]
  %v50 = vld [vmem:[%s1 + $0x70] sm:$0xff]
  %v51 = vld [vmem:[%s1 + $0x78] sm:$0xff]
  %v52 = vld [vmem:[%s1 + $0x80] sm:$0xff]
  %v53 = vld [vmem:[%s1 + $0x88] sm:$0xff]
  %v54 = vld [vmem:[%s1 + $0x90] sm:$0xff]
  %v55 = vld [vmem:[%s1 + $0x98] sm:$0xff]
  %v56 = vld [vmem:[%s1 + $0xa0] sm:$0xff]
  %v57 = vld [vmem:[%s1 + $0xa8] sm:$0xff]
  %v58 = vld [vmem:[%s1 + $0xb0] sm:$0xff]
  %v59 = vld [vmem:[%s1 + $0xb8] sm:$0xff]
  %v60 = vld [vmem:[%s1 + $0xc0] sm:$0xff]
  %v61 = vld [vmem:[%s1 + $0xc8] sm:$0xff]
  %v62 = vld [vmem:[%s1 + $0xd0] sm:$0xff]
  %v63 = vld [vmem:[%s1 + $0xd8] sm:$0xff]
  %v64 = vld [vmem:[%s1 + $0xe0] sm:$0xff]
  %v65 = vld [vmem:[%s1 + $0xe8] sm:$0xff]
  %v66 = vld [vmem:[%s1 + $0xf0] sm:$0xff]
  %v67 = vld [vmem:[%s1 + $0xf8] sm:$0xff]
  %v68 = vld [vmem:[%s1 + $0x100] sm:$0xff]
  %v69 = vld [vmem:[%s1 + $0x108] sm:$0xff]
  %v70 = vld [vmem:[%s1 + $0x110] sm:$0xff]
  %v71 = vld [vmem:[%s1 + $0x118] sm:$0xff]
  %v72 = vld [vmem:[%s1 + $0x120] sm:$0xff]
  %v73 = vld [vmem:[%s1 + $0x128] sm:$0xff]
  %v74 = vld [vmem:[%s1 + $0x130] sm:$0xff]
  %v75 = vld [vmem:[%s1 + $0x138] sm:$0xff]
  %v76 = vld [vmem:[%s1 + $0x140] sm:$0xff]
  %v77 = vld [vmem:[%s1 + $0x148] sm:$0xff]
  %v78 = vld [vmem:[%s1 + $0x150] sm:$0xff]
  %v79 = vld [vmem:[%s1 + $0x158] sm:$0xff]
  %v80 = vld [vmem:[%s1 + $0x160] sm:$0xff]
  %v81 = vld [vmem:[%s1 + $0x168] sm:$0xff]
  %v82 = vld [vmem:[%s1 + $0x170] sm:$0xff]
  %v83 = vld [vmem:[%s1 + $0x178] sm:$0xff]
  %v84 = vld [vmem:[%s1 + $0x180] sm:$0xff]
  %v85 = vld [vmem:[%s1 + $0x188] sm:$0xff]
  %v86 = vld [vmem:[%s1 + $0x190] sm:$0xff]
  %v87 = vld [vmem:[%s1 + $0x198] sm:$0xff]
  %v88 = vld [vmem:[%s1 + $0x1a0] sm:$0xff]
  %v89 = vld [vmem:[%s1 + $0x1a8] sm:$0xff]
  %v90 = vld [vmem:[%s1 + $0x1b0] sm:$0xff]
  %v91 = vld [vmem:[%s1 + $0x1b8] sm:$0xff]
  %v92 = vld [vmem:[%s1 + $0x1c0] sm:$0xff]
  %v93 = vld [vmem:[%s1 + $0x1c8] sm:$0xff]
  %v94 = vld [vmem:[%s1 + $0x1d0] sm:$0xff]
  %v95 = vld [vmem:[%s1 + $0x1d8] sm:$0xff]
  %v96 = vld [vmem:[%s1 + $0x1e0] sm:$0xff]
  %v97 = vld [vmem:[%s1 + $0x1e8] sm:$0xff]
  %v98 = vld [vmem:[%s1 + $0x1f0] sm:$0xff]
  %v99 = vld [vmem:[%s1 + $0x1f8] sm:$0xff]
  %v100 = vld [vmem:[%s1 + $0x200] sm:$0xff]
  %v101 = vld [vmem:[%s1 + $0x208] sm:$0xff]
  %v102 = vld [vmem:[%s1 + $0x210] sm:$0xff]
  %v103 = vld [vmem:[%s1 + $0x218] sm:$0xff]
  %v104 = vld [vmem:[%s1 + $0x220] sm:$0xff]
  %v105 = vld [vmem:[%s1 + $0x228] sm:$0xff]
  %v106 = vld [vmem:[%s1 + $0x230] sm:$0xff]
  %v107 = vld [vmem:[%s1 + $0x238] sm:$0xff]
  %v116 = vunpack.c.l.b16 %v28
  %v117 = vunpack.c.h.b16 %v28
  %v118 = vunpack.c.l.b16 %v29
  %v119 = vunpack.c.l.b16 %v30
  %v120 = vunpack.c.h.b16 %v30
  %v121 = vunpack.c.l.b16 %v31
  %v122 = vunpack.c.l.b16 %v32
  %v123 = vunpack.c.h.b16 %v32
  %v124 = vunpack.c.l.b16 %v33
  %v125 = vunpack.c.l.b16 %v34
  %v126 = vunpack.c.h.b16 %v34
  %v127 = vunpack.c.l.b16 %v35
  %v128 = vpack.c.b16 %v119, %v116
  %v129 = vpack.c.b16 %v120, %v117
  %v130 = vpack.c.b16 %v121, %v118
  %v131 = vpack.c.b16 %v125, %v122
  %v132 = vpack.c.b16 %v126, %v123
  %v133 = vpack.c.b16 %v127, %v124
  %v210 = vunpack.c.l.b16 %v36
  %v211 = vunpack.c.h.b16 %v36
  %v212 = vunpack.c.l.b16 %v37
  %v213 = vunpack.c.h.b16 %v37
  %v214 = vunpack.c.l.b16 %v38
  %v215 = vunpack.c.h.b16 %v38
  %v216 = vunpack.c.l.b16 %v39
  %v217 = vunpack.c.h.b16 %v39
  %v218 = vunpack.c.l.b16 %v40
  %v219 = vunpack.c.h.b16 %v40
  %v220 = vunpack.c.l.b16 %v41
  %v221 = vunpack.c.h.b16 %v41
  %v222 = vunpack.c.l.b16 %v42
  %v223 = vunpack.c.h.b16 %v42
  %v224 = vunpack.c.l.b16 %v43
  %v225 = vunpack.c.h.b16 %v43
  %v226 = vunpack.c.l.b16 %v44
  %v227 = vunpack.c.h.b16 %v44
  %v228 = vunpack.c.l.b16 %v45
  %v229 = vunpack.c.h.b16 %v45
  %v230 = vunpack.c.l.b16 %v46
  %v231 = vunpack.c.h.b16 %v46
  %v232 = vunpack.c.l.b16 %v47
  %v233 = vunpack.c.h.b16 %v47
  %v234 = vunpack.c.l.b16 %v48
  %v235 = vunpack.c.h.b16 %v48
  %v236 = vunpack.c.l.b16 %v49
  %v237 = vunpack.c.h.b16 %v49
  %v238 = vunpack.c.l.b16 %v50
  %v239 = vunpack.c.h.b16 %v50
  %v240 = vunpack.c.l.b16 %v51
  %v241 = vunpack.c.h.b16 %v51
  %v242 = vunpack.c.l.b16 %v52
  %v243 = vunpack.c.h.b16 %v52
  %v244 = vunpack.c.l.b16 %v53
  %v245 = vunpack.c.h.b16 %v53
  %v246 = vunpack.c.l.b16 %v54
  %v247 = vunpack.c.h.b16 %v54
  %v248 = vunpack.c.l.b16 %v55
  %v249 = vunpack.c.h.b16 %v55
  %v250 = vunpack.c.l.b16 %v56
  %v251 = vunpack.c.h.b16 %v56
  %v252 = vunpack.c.l.b16 %v57
  %v253 = vunpack.c.h.b16 %v57
  %v254 = vunpack.c.l.b16 %v58
  %v255 = vunpack.c.h.b16 %v58
  %v256 = vunpack.c.l.b16 %v59
  %v257 = vunpack.c.h.b16 %v59
  %v258 = vunpack.c.l.b16 %v60
  %v259 = vunpack.c.h.b16 %v60
  %v260 = vunpack.c.l.b16 %v61
  %v261 = vunpack.c.h.b16 %v61
  %v262 = vunpack.c.l.b16 %v62
  %v263 = vunpack.c.h.b16 %v62
  %v264 = vunpack.c.l.b16 %v63
  %v265 = vunpack.c.h.b16 %v63
  %v266 = vunpack.c.l.b16 %v64
  %v267 = vunpack.c.h.b16 %v64
  %v268 = vunpack.c.l.b16 %v65
  %v269 = vunpack.c.h.b16 %v65
  %v270 = vunpack.c.l.b16 %v66
  %v271 = vunpack.c.h.b16 %v66
  %v272 = vunpack.c.l.b16 %v67
  %v273 = vunpack.c.h.b16 %v67
  %v274 = vunpack.c.l.b16 %v68
  %v275 = vunpack.c.h.b16 %v68
  %v276 = vunpack.c.l.b16 %v69
  %v277 = vunpack.c.h.b16 %v69
  %v278 = vunpack.c.l.b16 %v70
  %v279 = vunpack.c.h.b16 %v70
  %v280 = vunpack.c.l.b16 %v71
  %v281 = vunpack.c.h.b16 %v71
  %v282 = vunpack.c.l.b16 %v72
  %v283 = vunpack.c.h.b16 %v72
  %v284 = vunpack.c.l.b16 %v73
  %v285 = vunpack.c.h.b16 %v73
  %v286 = vunpack.c.l.b16 %v74
  %v287 = vunpack.c.h.b16 %v74
  %v288 = vunpack.c.l.b16 %v75
  %v289 = vunpack.c.h.b16 %v75
  %v290 = vunpack.c.l.b16 %v76
  %v291 = vunpack.c.h.b16 %v76
  %v292 = vunpack.c.l.b16 %v77
  %v293 = vunpack.c.h.b16 %v77
  %v294 = vunpack.c.l.b16 %v78
  %v295 = vunpack.c.h.b16 %v78
  %v296 = vunpack.c.l.b16 %v79
  %v297 = vunpack.c.h.b16 %v79
  %v298 = vunpack.c.l.b16 %v80
  %v299 = vunpack.c.h.b16 %v80
  %v300 = vunpack.c.l.b16 %v81
  %v301 = vunpack.c.h.b16 %v81
  %v302 = vunpack.c.l.b16 %v82
  %v303 = vunpack.c.h.b16 %v82
  %v304 = vunpack.c.l.b16 %v83
  %v305 = vunpack.c.h.b16 %v83
  %v306 = vunpack.c.l.b16 %v84
  %v307 = vunpack.c.h.b16 %v84
  %v308 = vunpack.c.l.b16 %v85
  %v309 = vunpack.c.h.b16 %v85
  %v310 = vunpack.c.l.b16 %v86
  %v311 = vunpack.c.h.b16 %v86
  %v312 = vunpack.c.l.b16 %v87
  %v313 = vunpack.c.h.b16 %v87
  %v314 = vunpack.c.l.b16 %v88
  %v315 = vunpack.c.h.b16 %v88
  %v316 = vunpack.c.l.b16 %v89
  %v317 = vunpack.c.h.b16 %v89
  %v318 = vunpack.c.l.b16 %v90
  %v319 = vunpack.c.h.b16 %v90
  %v320 = vunpack.c.l.b16 %v91
  %v321 = vunpack.c.h.b16 %v91
  %v322 = vunpack.c.l.b16 %v92
  %v323 = vunpack.c.h.b16 %v92
  %v324 = vunpack.c.l.b16 %v93
  %v325 = vunpack.c.h.b16 %v93
  %v326 = vunpack.c.l.b16 %v94
  %v327 = vunpack.c.h.b16 %v94
  %v328 = vunpack.c.l.b16 %v95
  %v329 = vunpack.c.h.b16 %v95
  %v330 = vunpack.c.l.b16 %v96
  %v331 = vunpack.c.h.b16 %v96
  %v332 = vunpack.c.l.b16 %v97
  %v333 = vunpack.c.h.b16 %v97
  %v334 = vunpack.c.l.b16 %v98
  %v335 = vunpack.c.h.b16 %v98
  %v336 = vunpack.c.l.b16 %v99
  %v337 = vunpack.c.h.b16 %v99
  %v338 = vunpack.c.l.b16 %v100
  %v339 = vunpack.c.h.b16 %v100
  %v340 = vunpack.c.l.b16 %v101
  %v341 = vunpack.c.h.b16 %v101
  %v342 = vunpack.c.l.b16 %v102
  %v343 = vunpack.c.h.b16 %v102
  %v344 = vunpack.c.l.b16 %v103
  %v345 = vunpack.c.h.b16 %v103
  %v346 = vunpack.c.l.b16 %v104
  %v347 = vunpack.c.h.b16 %v104
  %v348 = vunpack.c.l.b16 %v105
  %v349 = vunpack.c.h.b16 %v105
  %v350 = vunpack.c.l.b16 %v106
  %v351 = vunpack.c.h.b16 %v106
  %v352 = vunpack.c.l.b16 %v107
  %v353 = vunpack.c.h.b16 %v107
  %v354 = vpack.c.b16 %v214, %v210
  %v355 = vpack.c.b16 %v215, %v211
  %v356 = vpack.c.b16 %v216, %v212
  %v357 = vpack.c.b16 %v217, %v213
  %v358 = vpack.c.b16 %v222, %v218
  %v359 = vpack.c.b16 %v223, %v219
  %v360 = vpack.c.b16 %v224, %v220
  %v361 = vpack.c.b16 %v225, %v221
  %v362 = vpack.c.b16 %v230, %v226
  %v363 = vpack.c.b16 %v231, %v227
  %v364 = vpack.c.b16 %v232, %v228
  %v365 = vpack.c.b16 %v233, %v229
  %v366 = vpack.c.b16 %v238, %v234
  %v367 = vpack.c.b16 %v239, %v235
  %v368 = vpack.c.b16 %v240, %v236
  %v369 = vpack.c.b16 %v241, %v237
  %v370 = vpack.c.b16 %v246, %v242
  %v371 = vpack.c.b16 %v247, %v243
  %v372 = vpack.c.b16 %v248, %v244
  %v373 = vpack.c.b16 %v249, %v245
  %v374 = vpack.c.b16 %v254, %v250
  %v375 = vpack.c.b16 %v255, %v251
  %v376 = vpack.c.b16 %v256, %v252
  %v377 = vpack.c.b16 %v257, %v253
  %v378 = vpack.c.b16 %v262, %v258
  %v379 = vpack.c.b16 %v263, %v259
  %v380 = vpack.c.b16 %v264, %v260
  %v381 = vpack.c.b16 %v265, %v261
  %v382 = vpack.c.b16 %v270, %v266
  %v383 = vpack.c.b16 %v271, %v267
  %v384 = vpack.c.b16 %v272, %v268
  %v385 = vpack.c.b16 %v273, %v269
  %v386 = vpack.c.b16 %v278, %v274
  %v387 = vpack.c.b16 %v279, %v275
  %v388 = vpack.c.b16 %v280, %v276
  %v389 = vpack.c.b16 %v281, %v277
  %v390 = vpack.c.b16 %v286, %v282
  %v391 = vpack.c.b16 %v287, %v283
  %v392 = vpack.c.b16 %v288, %v284
  %v393 = vpack.c.b16 %v289, %v285
  %v394 = vpack.c.b16 %v294, %v290
  %v395 = vpack.c.b16 %v295, %v291
  %v396 = vpack.c.b16 %v296, %v292
  %v397 = vpack.c.b16 %v297, %v293
  %v398 = vpack.c.b16 %v302, %v298
  %v399 = vpack.c.b16 %v303, %v299
  %v400 = vpack.c.b16 %v304, %v300
  %v401 = vpack.c.b16 %v305, %v301
  %v402 = vpack.c.b16 %v310, %v306
  %v403 = vpack.c.b16 %v311, %v307
  %v404 = vpack.c.b16 %v312, %v308
  %v405 = vpack.c.b16 %v313, %v309
  %v406 = vpack.c.b16 %v318, %v314
  %v407 = vpack.c.b16 %v319, %v315
  %v408 = vpack.c.b16 %v320, %v316
  %v409 = vpack.c.b16 %v321, %v317
  %v410 = vpack.c.b16 %v326, %v322
  %v411 = vpack.c.b16 %v327, %v323
  %v412 = vpack.c.b16 %v328, %v324
  %v413 = vpack.c.b16 %v329, %v325
  %v414 = vpack.c.b16 %v334, %v330
  %v415 = vpack.c.b16 %v335, %v331
  %v416 = vpack.c.b16 %v336, %v332
  %v417 = vpack.c.b16 %v337, %v333
  %v418 = vpack.c.b16 %v342, %v338
  %v419 = vpack.c.b16 %v343, %v339
  %v420 = vpack.c.b16 %v344, %v340
  %v421 = vpack.c.b16 %v345, %v341
  %v422 = vpack.c.b16 %v350, %v346
  %v423 = vpack.c.b16 %v351, %v347
  %v424 = vpack.c.b16 %v352, %v348
  %v425 = vpack.c.b16 %v353, %v349
  %vm498 = vcmask 261120
  %v500 = vsel %vm498, %v130, 0
  %v503 = vsel %vm498, %v133, 0
  %505 = vmatprep.subr.bf16.mxu0 %v355
  %506 = vmatpush1.bf16.msra.mxu0 %v354
  %507 = vmatprep.subr.bf16.mxu0 %v359
  %508 = vmatpush1.bf16.msra.mxu0 %v358
  %509 = vmatprep.subr.bf16.mxu0 %v363
  %510 = vmatpush1.bf16.msra.mxu0 %v362
  %511 = vmatprep.subr.bf16.mxu0 %v367
  %512 = vmatpush1.bf16.msra.mxu0 %v366
  %513 = vmatprep.subr.bf16.mxu0 %v371
  %514 = vmatpush1.bf16.msra.mxu0 %v370
  %515 = vmatprep.subr.bf16.mxu0 %v375
  %516 = vmatpush1.bf16.msra.mxu0 %v374
  %517 = vmatprep.subr.bf16.mxu0 %v379
  %518 = vmatpush1.bf16.msra.mxu0 %v378
  %519 = vmatprep.subr.bf16.mxu0 %v383
  %520 = vmatpush1.bf16.msra.mxu0 %v382
  %521 = vmatprep.subr.bf16.mxu0 %v387
  %522 = vmatpush1.bf16.msra.mxu0 %v386
  %523 = vmatprep.subr.bf16.mxu0 %v391
  %524 = vmatpush1.bf16.msra.mxu0 %v390
  %525 = vmatprep.subr.bf16.mxu0 %v395
  %526 = vmatpush1.bf16.msra.mxu0 %v394
  %527 = vmatprep.subr.bf16.mxu0 %v399
  %528 = vmatpush1.bf16.msra.mxu0 %v398
  %529 = vmatprep.subr.bf16.mxu0 %v403
  %530 = vmatpush1.bf16.msra.mxu0 %v402
  %531 = vmatprep.subr.bf16.mxu0 %v407
  %532 = vmatpush1.bf16.msra.mxu0 %v406
  %533 = vmatprep.subr.bf16.mxu0 %v411
  %534 = vmatpush1.bf16.msra.mxu0 %v410
  %535 = vmatprep.subr.bf16.mxu0 %v415
  %536 = vmatpush1.bf16.msra.mxu0 %v414
  %537 = vmatprep.mubr.bf16.mxu0 %v129
  %538 = vmatmul.mubr.bf16.gmra.mrb[0].mxu0 %v128
  %v539 = vpop.f32.mrb[0].mxu0
  %v540 = vadd.f32 0.0, %v539
  %v541 = vpop.f32.mrb[0].mxu0
  %v542 = vadd.f32 0.0, %v541
  %v543 = vpop.f32.mrb[0].mxu0
  %v544 = vadd.f32 0.0, %v543
  %v545 = vpop.f32.mrb[0].mxu0
  %v546 = vadd.f32 0.0, %v545
  %547 = vmatprep.mubr.bf16.mxu0 %v132
  %548 = vmatmul.mubr.bf16.gmra.mrb[0].mxu0 %v131
  %v549 = vpop.f32.mrb[0].mxu0
  %v550 = vadd.f32 0.0, %v549
  %v551 = vpop.f32.mrb[0].mxu0
  %v552 = vadd.f32 0.0, %v551
  %v553 = vpop.f32.mrb[0].mxu0
  %v554 = vadd.f32 0.0, %v553
  %v555 = vpop.f32.mrb[0].mxu0
  %v556 = vadd.f32 0.0, %v555
  %557 = vdwg.mxu0
  %558 = vmatprep.subr.bf16.mxu0 %v419
  %559 = vmatpush1.bf16.msra.mxu0 %v418
  %560 = vmatprep.subr.bf16.mxu0 %v423
  %561 = vmatpush1.bf16.msra.mxu0 %v422
  %562 = vmatprep.subr.bf16.mxu0 0
  %563 = vmatpush1.bf16.msra.mxu0 0
  %564 = vmatprep.subr.bf16.mxu0 0
  %565 = vmatpush1.bf16.msra.mxu0 0
  %566 = vmatprep.subr.bf16.mxu0 0
  %567 = vmatpush1.bf16.msra.mxu0 0
  %568 = vmatprep.subr.bf16.mxu0 0
  %569 = vmatpush1.bf16.msra.mxu0 0
  %570 = vmatprep.subr.bf16.mxu0 0
  %571 = vmatpush1.bf16.msra.mxu0 0
  %572 = vmatprep.subr.bf16.mxu0 0
  %573 = vmatpush1.bf16.msra.mxu0 0
  %574 = vmatprep.subr.bf16.mxu0 0
  %575 = vmatpush1.bf16.msra.mxu0 0
  %576 = vmatprep.subr.bf16.mxu0 0
  %577 = vmatpush1.bf16.msra.mxu0 0
  %578 = vmatprep.subr.bf16.mxu0 0
  %579 = vmatpush1.bf16.msra.mxu0 0
  %580 = vmatprep.subr.bf16.mxu0 0
  %581 = vmatpush1.bf16.msra.mxu0 0
  %582 = vmatprep.subr.bf16.mxu0 0
  %583 = vmatpush1.bf16.msra.mxu0 0
  %584 = vmatprep.subr.bf16.mxu0 0
  %585 = vmatpush1.bf16.msra.mxu0 0
  %586 = vmatprep.subr.bf16.mxu0 0
  %587 = vmatpush1.bf16.msra.mxu0 0
  %588 = vmatprep.subr.bf16.mxu0 0
  %589 = vmatpush1.bf16.msra.mxu0 0
  %590 = vmatprep.mubr.bf16.mxu0 0
  %591 = vmatmul.mubr.bf16.gmra.mrb[0].mxu0 %v500
  %v592 = vpop.f32.mrb[0].mxu0
  %v593 = vadd.f32 %v540, %v592
  %v594 = vpop.f32.mrb[0].mxu0
  %v595 = vadd.f32 %v542, %v594
  %v596 = vpop.f32.mrb[0].mxu0
  %v597 = vadd.f32 %v544, %v596
  %v598 = vpop.f32.mrb[0].mxu0
  %v599 = vadd.f32 %v546, %v598
  %600 = vmatprep.mubr.bf16.mxu0 0
  %601 = vmatmul.mubr.bf16.gmra.mrb[0].mxu0 %v503
  %v602 = vpop.f32.mrb[0].mxu0
  %v603 = vadd.f32 %v550, %v602
  %v604 = vpop.f32.mrb[0].mxu0
  %v605 = vadd.f32 %v552, %v604
  %v606 = vpop.f32.mrb[0].mxu0
  %v607 = vadd.f32 %v554, %v606
  %v608 = vpop.f32.mrb[0].mxu0
  %v609 = vadd.f32 %v556, %v608
  %610 = vdwg.mxu0
  %611 = vmatprep.subr.bf16.mxu0 %v357
  %612 = vmatpush1.bf16.msra.mxu0 %v356
  %613 = vmatprep.subr.bf16.mxu0 %v361
  %614 = vmatpush1.bf16.msra.mxu0 %v360
  %615 = vmatprep.subr.bf16.mxu0 %v365
  %616 = vmatpush1.bf16.msra.mxu0 %v364
  %617 = vmatprep.subr.bf16.mxu0 %v369
  %618 = vmatpush1.bf16.msra.mxu0 %v368
  %619 = vmatprep.subr.bf16.mxu0 %v373
  %620 = vmatpush1.bf16.msra.mxu0 %v372
  %621 = vmatprep.subr.bf16.mxu0 %v377
  %622 = vmatpush1.bf16.msra.mxu0 %v376
  %623 = vmatprep.subr.bf16.mxu0 %v381
  %624 = vmatpush1.bf16.msra.mxu0 %v380
  %625 = vmatprep.subr.bf16.mxu0 %v385
  %626 = vmatpush1.bf16.msra.mxu0 %v384
  %627 = vmatprep.subr.bf16.mxu0 %v389
  %628 = vmatpush1.bf16.msra.mxu0 %v388
  %629 = vmatprep.subr.bf16.mxu0 %v393
  %630 = vmatpush1.bf16.msra.mxu0 %v392
  %631 = vmatprep.subr.bf16.mxu0 %v397
  %632 = vmatpush1.bf16.msra.mxu0 %v396
  %633 = vmatprep.subr.bf16.mxu0 %v401
  %634 = vmatpush1.bf16.msra.mxu0 %v400
  %635 = vmatprep.subr.bf16.mxu0 %v405
  %636 = vmatpush1.bf16.msra.mxu0 %v404
  %637 = vmatprep.subr.bf16.mxu0 %v409
  %638 = vmatpush1.bf16.msra.mxu0 %v408
  %639 = vmatprep.subr.bf16.mxu0 %v413
  %640 = vmatpush1.bf16.msra.mxu0 %v412
  %641 = vmatprep.subr.bf16.mxu0 %v417
  %642 = vmatpush1.bf16.msra.mxu0 %v416
  %643 = vmatprep.mubr.bf16.mxu0 %v129
  %644 = vmatmul.mubr.bf16.gmra.mrb[0].mxu0 %v128
  %v645 = vpop.f32.mrb[0].mxu0
  %v646 = vadd.f32 0.0, %v645
  %v647 = vpop.f32.mrb[0].mxu0
  %v648 = vadd.f32 0.0, %v647
  %v649 = vpop.f32.mrb[0].mxu0
  %v650 = vadd.f32 0.0, %v649
  %v651 = vpop.f32.mrb[0].mxu0
  %v652 = vadd.f32 0.0, %v651
  %653 = vmatprep.mubr.bf16.mxu0 %v132
  %654 = vmatmul.mubr.bf16.gmra.mrb[0].mxu0 %v131
  %v655 = vpop.f32.mrb[0].mxu0
  %v656 = vadd.f32 0.0, %v655
  %v657 = vpop.f32.mrb[0].mxu0
  %v658 = vadd.f32 0.0, %v657
  %v659 = vpop.f32.mrb[0].mxu0
  %v660 = vadd.f32 0.0, %v659
  %v661 = vpop.f32.mrb[0].mxu0
  %v662 = vadd.f32 0.0, %v661
  %663 = vdwg.mxu0
  %664 = vmatprep.subr.bf16.mxu0 %v421
  %665 = vmatpush1.bf16.msra.mxu0 %v420
  %666 = vmatprep.subr.bf16.mxu0 %v425
  %667 = vmatpush1.bf16.msra.mxu0 %v424
  %668 = vmatprep.subr.bf16.mxu0 0
  %669 = vmatpush1.bf16.msra.mxu0 0
  %670 = vmatprep.subr.bf16.mxu0 0
  %671 = vmatpush1.bf16.msra.mxu0 0
  %672 = vmatprep.subr.bf16.mxu0 0
  %673 = vmatpush1.bf16.msra.mxu0 0
  %674 = vmatprep.subr.bf16.mxu0 0
  %675 = vmatpush1.bf16.msra.mxu0 0
  %676 = vmatprep.subr.bf16.mxu0 0
  %677 = vmatpush1.bf16.msra.mxu0 0
  %678 = vmatprep.subr.bf16.mxu0 0
  %679 = vmatpush1.bf16.msra.mxu0 0
  %680 = vmatprep.subr.bf16.mxu0 0
  %681 = vmatpush1.bf16.msra.mxu0 0
  %682 = vmatprep.subr.bf16.mxu0 0
  %683 = vmatpush1.bf16.msra.mxu0 0
  %684 = vmatprep.subr.bf16.mxu0 0
  %685 = vmatpush1.bf16.msra.mxu0 0
  %686 = vmatprep.subr.bf16.mxu0 0
  %687 = vmatpush1.bf16.msra.mxu0 0
  %688 = vmatprep.subr.bf16.mxu0 0
  %689 = vmatpush1.bf16.msra.mxu0 0
  %690 = vmatprep.subr.bf16.mxu0 0
  %691 = vmatpush1.bf16.msra.mxu0 0
  %692 = vmatprep.subr.bf16.mxu0 0
  %693 = vmatpush1.bf16.msra.mxu0 0
  %694 = vmatprep.subr.bf16.mxu0 0
  %695 = vmatpush1.bf16.msra.mxu0 0
  %696 = vmatprep.mubr.bf16.mxu0 0
  %697 = vmatmul.mubr.bf16.gmra.mrb[0].mxu0 %v500
  %v698 = vpop.f32.mrb[0].mxu0
  %v699 = vadd.f32 %v646, %v698
  %v700 = vpop.f32.mrb[0].mxu0
  %v701 = vadd.f32 %v648, %v700
  %v702 = vpop.f32.mrb[0].mxu0
  %v703 = vadd.f32 %v650, %v702
  %v704 = vpop.f32.mrb[0].mxu0
  %v705 = vadd.f32 %v652, %v704
  %706 = vmatprep.mubr.bf16.mxu0 0
  %707 = vmatmul.mubr.bf16.gmra.mrb[0].mxu0 %v503
  %v708 = vpop.f32.mrb[0].mxu0
  %v709 = vadd.f32 %v656, %v708
  %v710 = vpop.f32.mrb[0].mxu0
  %v711 = vadd.f32 %v658, %v710
  %v712 = vpop.f32.mrb[0].mxu0
  %v713 = vadd.f32 %v660, %v712
  %v714 = vpop.f32.mrb[0].mxu0
  %v715 = vadd.f32 %v662, %v714
  %716 = vdwg.mxu0
  %717 = vst [vmem:[%s2] sm:$0xff] %v593
  %718 = vst [vmem:[%s2 + $0x8] sm:$0xff] %v595
  %719 = vst [vmem:[%s2 + $0x10] sm:$0xff] %v699
  %720 = vst [vmem:[%s2 + $0x18] sm:$0xff] %v701
  %721 = vst [vmem:[%s2 + $0x20] sm:$0xff] %v597
  %722 = vst [vmem:[%s2 + $0x28] sm:$0xff] %v599
  %723 = vst [vmem:[%s2 + $0x30] sm:$0xff] %v703
  %724 = vst [vmem:[%s2 + $0x38] sm:$0xff] %v705
  %725 = vst [vmem:[%s2 + $0x40] sm:$0xff] %v603
  %726 = vst [vmem:[%s2 + $0x48] sm:$0xff] %v605
  %727 = vst [vmem:[%s2 + $0x50] sm:$0xff] %v709
  %728 = vst [vmem:[%s2 + $0x58] sm:$0xff] %v711
  %729 = vst [vmem:[%s2 + $0x60] sm:$0xff] %v607
  %730 = vst [vmem:[%s2 + $0x68] sm:$0xff] %v609
  %731 = vst [vmem:[%s2 + $0x70] sm:$0xff] %v713
  %732 = vst [vmem:[%s2 + $0x78] sm:$0xff] %v715
  %v733 = vld [vmem:[%s3] sm:$0xff]
  %v734 = vld [vmem:[%s3 + $0x8] sm:$0xff]
  %v735 = vld [vmem:[%s3 + $0x10] sm:$0xff]
  %v736 = vld [vmem:[%s3 + $0x18] sm:$0xff]
  %v737 = vadd.f32 %v593, %v595
  %v738 = vadd.f32 %v737, %v699
  %v739 = vadd.f32 %v738, %v701
  %740 = vadd.xlane.f32.xlu0 %v739
  %v741 = vpop.xlane.xlu0 %740
  %v742 = vadd.f32 %v597, %v599
  %v743 = vadd.f32 %v742, %v703
  %v744 = vadd.f32 %v743, %v705
  %745 = vadd.xlane.f32.xlu0 %v744
  %v746 = vpop.xlane.xlu0 %745
  %v747 = vadd.f32 %v603, %v605
  %v748 = vadd.f32 %v747, %v709
  %v749 = vadd.f32 %v748, %v711
  %750 = vadd.xlane.f32.xlu0 %v749
  %v751 = vpop.xlane.xlu0 %750
  %v752 = vadd.f32 %v607, %v609
  %v753 = vadd.f32 %v752, %v713
  %v754 = vadd.f32 %v753, %v715
  %755 = vadd.xlane.f32.xlu0 %v754
  %v756 = vpop.xlane.xlu0 %755
  %v757 = vadd.f32 %v733, %v741
  %v758 = vadd.f32 %v734, %v746
  %v759 = vadd.f32 %v735, %v751
  %v760 = vadd.f32 %v736, %v756
  %vm761 = vcmask 7168
  %762 = vst.msk [vmem:[%s3] sm:$0xff] %vm761, %v757
  %763 = vst.msk [vmem:[%s3 + $0x8] sm:$0xff] %vm761, %v758
  %764 = vst.msk [vmem:[%s3 + $0x10] sm:$0xff] %vm761, %v759
  %765 = vst.msk [vmem:[%s3 + $0x18] sm:$0xff] %vm761, %v760
  %v766 = vld [vmem:[%s4] sm:$0xff]
  %v767 = vld [vmem:[%s4 + $0x8] sm:$0xff]
  %v768 = vld [vmem:[%s4 + $0x10] sm:$0xff]
  %v769 = vld [vmem:[%s4 + $0x18] sm:$0xff]
  %v770 = vmul.f32 %v593, %v593
  %v771 = vmul.f32 %v595, %v595
  %v772 = vmul.f32 %v699, %v699
  %v773 = vmul.f32 %v701, %v701
  %v774 = vmul.f32 %v597, %v597
  %v775 = vmul.f32 %v599, %v599
  %v776 = vmul.f32 %v703, %v703
  %v777 = vmul.f32 %v705, %v705
  %v778 = vmul.f32 %v603, %v603
  %v779 = vmul.f32 %v605, %v605
  %v780 = vmul.f32 %v709, %v709
  %v781 = vmul.f32 %v711, %v711
  %v782 = vmul.f32 %v607, %v607
  %v783 = vmul.f32 %v609, %v609
  %v784 = vmul.f32 %v713, %v713
  %v785 = vmul.f32 %v715, %v715
  %v786 = vadd.f32 %v770, %v771
  %v787 = vadd.f32 %v786, %v772
  %v788 = vadd.f32 %v787, %v773
  %789 = vadd.xlane.f32.xlu0 %v788
  %v790 = vpop.xlane.xlu0 %789
  %v791 = vadd.f32 %v774, %v775
  %v792 = vadd.f32 %v791, %v776
  %v793 = vadd.f32 %v792, %v777
  %794 = vadd.xlane.f32.xlu0 %v793
  %v795 = vpop.xlane.xlu0 %794
  %v796 = vadd.f32 %v778, %v779
  %v797 = vadd.f32 %v796, %v780
  %v798 = vadd.f32 %v797, %v781
  %799 = vadd.xlane.f32.xlu0 %v798
  %v800 = vpop.xlane.xlu0 %799
  %v801 = vadd.f32 %v782, %v783
  %v802 = vadd.f32 %v801, %v784
  %v803 = vadd.f32 %v802, %v785
  %804 = vadd.xlane.f32.xlu0 %v803
  %v805 = vpop.xlane.xlu0 %804
  %v806 = vadd.f32 %v766, %v790
  %v807 = vadd.f32 %v767, %v795
  %v808 = vadd.f32 %v768, %v800
  %v809 = vadd.f32 %v769, %v805
  %810 = vst.msk [vmem:[%s4] sm:$0xff] %vm761, %v806
  %811 = vst.msk [vmem:[%s4 + $0x8] sm:$0xff] %vm761, %v807
  %812 = vst.msk [vmem:[%s4 + $0x10] sm:$0xff] %vm761, %v808
  %813 = vst.msk [vmem:[%s4 + $0x18] sm:$0xff] %vm761, %v809
  // Predicated region
  $region14: #{dn_autoencoder_forward.33} parent=0 // pred_check
    _
  $region15: #{dn_autoencoder_forward.33} parent=0 // pred_check_branch
    %815 = sbr.rel (0) target = $region17
  $region16: #{dn_autoencoder_forward.33} parent=0 // pred_region
    _
  $region17: #{dn_autoencoder_forward.33} parent=0 // pred_fallthru
    _
  // Predicated region
  $region18: #{dn_autoencoder_forward.33} parent=0 // pred_check
    _
  $region19: #{dn_autoencoder_forward.33} parent=0 // pred_check_branch
    %817 = sbr.rel (0) target = $region21
  $region20: #{dn_autoencoder_forward.33} parent=0 // pred_region
    _
  $region21: #{dn_autoencoder_forward.33} parent=0 // pred_fallthru
    _
  // Predicated region
  $region22: #{dn_autoencoder_forward.33} parent=0 // pred_check
    _
  $region23: #{dn_autoencoder_forward.33} parent=0 // pred_check_branch
    %819 = sbr.rel (0) target = $region25
  $region24: #{dn_autoencoder_forward.33} parent=0 // pred_region
    _
  $region25: #{dn_autoencoder_forward.33} parent=0 // pred_fallthru
    _
  // Predicated region
  $region26: #{dn_autoencoder_forward.33} parent=0 // pred_check
    _
  $region27: #{dn_autoencoder_forward.33} parent=0 // pred_check_branch
    %821 = sbr.rel (0) target = $region29
  $region28: #{dn_autoencoder_forward.33} parent=0 // pred_region
    _
  $region29: #{dn_autoencoder_forward.33} parent=0 // pred_fallthru
    _
  // Predicated region
  $region30: #{dn_autoencoder_forward.33} parent=0 // pred_check
    _
  $region31: #{dn_autoencoder_forward.33} parent=0 // pred_check_branch
    %823 = sbr.rel (0) target = $region33
  $region32: #{dn_autoencoder_forward.33} parent=0 // pred_region
    _
  $region33: #{dn_autoencoder_forward.33} parent=0 // pred_fallthru
    _
  // Predicated region
  $region34: #{dn_autoencoder_forward.33} parent=0 // pred_check
    _
  $region35: #{dn_autoencoder_forward.33} parent=0 // pred_check_branch
    %825 = sbr.rel (0) target = $region37
  $region36: #{dn_autoencoder_forward.33} parent=0 // pred_region
    _
  $region37: #{dn_autoencoder_forward.33} parent=0 // pred_fallthru
    _

// kernel: dn_autoencoder_forward.34
$region0: #{dn_autoencoder_forward.34}
  #allocation0 [shape = 'u32[]', space=smem, size = 0x4, offset = 0x4, fixed_abs, tag = 'smem constant byte address 0x4 - core index']
  #allocation1 [shape = 'u32[144,128]{1,0:T(1,128)}', space=vmem, size = 0x12000, scoped, tag = 'internal scratch']
  %s0 = inlined_call_operand.vmem [shape: f32[32,512], index: 0, kind: input, shape index: {}]
  %s1 = inlined_call_operand.vmem [shape: f32[32,1], index: 1, kind: input, shape index: {}]
  %s2 = inlined_call_operand.vmem [shape: f32[32,1], index: 2, kind: input, shape index: {}]
  %s3 = inlined_call_operand.vmem [shape: f32[32,512], index: 3, kind: output, shape index: {}]
  %s4 = sld [smem:[#allocation0]]
  $region22: #{dn_autoencoder_forward.34} parent=0
    _
  %s6 = ssub.s32 1, %s4
  %s7 = scalar_select 0, %s6, %s4
  // Predicated region
  $region2: #{dn_autoencoder_forward.34} parent=0 // pred_check
    _
  $region3: #{dn_autoencoder_forward.34} parent=0 // pred_check_branch
    %9 = sbr.rel (0) target = $region5
  $region4: #{dn_autoencoder_forward.34} parent=0 // pred_region
    _
  $region5: #{dn_autoencoder_forward.34} parent=0 // pred_fallthru
    _
  // Predicated region
  $region6: #{dn_autoencoder_forward.34} parent=0 // pred_check
    _
  $region7: #{dn_autoencoder_forward.34} parent=0 // pred_check_branch
    %11 = sbr.rel (0) target = $region9
  $region8: #{dn_autoencoder_forward.34} parent=0 // pred_region
    _
  $region9: #{dn_autoencoder_forward.34} parent=0 // pred_fallthru
    _
  // Predicated region
  $region10: #{dn_autoencoder_forward.34} parent=0 // pred_check
    _
  $region11: #{dn_autoencoder_forward.34} parent=0 // pred_check_branch
    %13 = sbr.rel (0) target = $region13
  $region12: #{dn_autoencoder_forward.34} parent=0 // pred_region
    _
  $region13: #{dn_autoencoder_forward.34} parent=0 // pred_fallthru
    _
  %v14 = vld [vmem:[%s0] sm:$0xff]
  %v15 = vld [vmem:[%s0 + $0x8] sm:$0xff]
  %v16 = vld [vmem:[%s0 + $0x10] sm:$0xff]
  %v17 = vld [vmem:[%s0 + $0x18] sm:$0xff]
  %v18 = vld [vmem:[%s0 + $0x20] sm:$0xff]
  %v19 = vld [vmem:[%s0 + $0x28] sm:$0xff]
  %v20 = vld [vmem:[%s0 + $0x30] sm:$0xff]
  %v21 = vld [vmem:[%s0 + $0x38] sm:$0xff]
  %v22 = vld [vmem:[%s0 + $0x40] sm:$0xff]
  %v23 = vld [vmem:[%s0 + $0x48] sm:$0xff]
  %v24 = vld [vmem:[%s0 + $0x50] sm:$0xff]
  %v25 = vld [vmem:[%s0 + $0x58] sm:$0xff]
  %v26 = vld [vmem:[%s0 + $0x60] sm:$0xff]
  %v27 = vld [vmem:[%s0 + $0x68] sm:$0xff]
  %v28 = vld [vmem:[%s0 + $0x70] sm:$0xff]
  %v29 = vld [vmem:[%s0 + $0x78] sm:$0xff]
  %v30 = vld [vmem:[%s1] sm:$0xff]
  %v31 = vld [vmem:[%s1 + $0x8] sm:$0xff]
  %v32 = vld [vmem:[%s1 + $0x10] sm:$0xff]
  %v33 = vld [vmem:[%s1 + $0x18] sm:$0xff]
  %35 = vset.pattern.permute.xlu0 0
  %36 = vperm.xlu0 %35, %v30
  %v37 = vpop.permute.xlu0 %36
  %40 = vset.pattern.permute.xlu0 0
  %41 = vperm.xlu0 %40, %v31
  %v42 = vpop.permute.xlu0 %41
  %45 = vset.pattern.permute.xlu0 0
  %46 = vperm.xlu0 %45, %v32
  %v47 = vpop.permute.xlu0 %46
  %50 = vset.pattern.permute.xlu0 0
  %51 = vperm.xlu0 %50, %v33
  %v52 = vpop.permute.xlu0 %51
  %v54 = vmul.f32 %v14, %v37
  %v55 = vmul.f32 %v15, %v37
  %v56 = vmul.f32 %v16, %v37
  %v57 = vmul.f32 %v17, %v37
  %v58 = vmul.f32 %v18, %v42
  %v59 = vmul.f32 %v19, %v42
  %v60 = vmul.f32 %v20, %v42
  %v61 = vmul.f32 %v21, %v42
  %v62 = vmul.f32 %v22, %v47
  %v63 = vmul.f32 %v23, %v47
  %v64 = vmul.f32 %v24, %v47
  %v65 = vmul.f32 %v25, %v47
  %v66 = vmul.f32 %v26, %v52
  %v67 = vmul.f32 %v27, %v52
  %v68 = vmul.f32 %v28, %v52
  %v69 = vmul.f32 %v29, %v52
  %v70 = vld [vmem:[%s2] sm:$0xff]
  %v71 = vld [vmem:[%s2 + $0x8] sm:$0xff]
  %v72 = vld [vmem:[%s2 + $0x10] sm:$0xff]
  %v73 = vld [vmem:[%s2 + $0x18] sm:$0xff]
  %75 = vset.pattern.permute.xlu0 0
  %76 = vperm.xlu0 %75, %v70
  %v77 = vpop.permute.xlu0 %76
  %80 = vset.pattern.permute.xlu0 0
  %81 = vperm.xlu0 %80, %v71
  %v82 = vpop.permute.xlu0 %81
  %85 = vset.pattern.permute.xlu0 0
  %86 = vperm.xlu0 %85, %v72
  %v87 = vpop.permute.xlu0 %86
  %90 = vset.pattern.permute.xlu0 0
  %91 = vperm.xlu0 %90, %v73
  %v92 = vpop.permute.xlu0 %91
  %v94 = vadd.f32 %v54, %v77
  %v95 = vadd.f32 %v55, %v77
  %v96 = vadd.f32 %v56, %v77
  %v97 = vadd.f32 %v57, %v77
  %v98 = vadd.f32 %v58, %v82
  %v99 = vadd.f32 %v59, %v82
  %v100 = vadd.f32 %v60, %v82
  %v101 = vadd.f32 %v61, %v82
  %v102 = vadd.f32 %v62, %v87
  %v103 = vadd.f32 %v63, %v87
  %v104 = vadd.f32 %v64, %v87
  %v105 = vadd.f32 %v65, %v87
  %v106 = vadd.f32 %v66, %v92
  %v107 = vadd.f32 %v67, %v92
  %v108 = vadd.f32 %v68, %v92
  %v109 = vadd.f32 %v69, %v92
  %vm110 = vcmp.ge.f32.partialorder %v94, 0.0
  %vm111 = vcmp.ge.f32.partialorder %v95, 0.0
  %vm112 = vcmp.ge.f32.partialorder %v96, 0.0
  %vm113 = vcmp.ge.f32.partialorder %v97, 0.0
  %vm114 = vcmp.ge.f32.partialorder %v98, 0.0
  %vm115 = vcmp.ge.f32.partialorder %v99, 0.0
  %vm116 = vcmp.ge.f32.partialorder %v100, 0.0
  %vm117 = vcmp.ge.f32.partialorder %v101, 0.0
  %vm118 = vcmp.ge.f32.partialorder %v102, 0.0
  %vm119 = vcmp.ge.f32.partialorder %v103, 0.0
  %vm120 = vcmp.ge.f32.partialorder %v104, 0.0
  %vm121 = vcmp.ge.f32.partialorder %v105, 0.0
  %vm122 = vcmp.ge.f32.partialorder %v106, 0.0
  %vm123 = vcmp.ge.f32.partialorder %v107, 0.0
  %vm124 = vcmp.ge.f32.partialorder %v108, 0.0
  %vm125 = vcmp.ge.f32.partialorder %v109, 0.0
  %v126 = vmul.f32 %v94, 0.2
  %v127 = vmul.f32 %v95, 0.2
  %v128 = vmul.f32 %v96, 0.2
  %v129 = vmul.f32 %v97, 0.2
  %v130 = vmul.f32 %v98, 0.2
  %v131 = vmul.f32 %v99, 0.2
  %v132 = vmul.f32 %v100, 0.2
  %v133 = vmul.f32 %v101, 0.2
  %v134 = vmul.f32 %v102, 0.2
  %v135 = vmul.f32 %v103, 0.2
  %v136 = vmul.f32 %v104, 0.2
  %v137 = vmul.f32 %v105, 0.2
  %v138 = vmul.f32 %v106, 0.2
  %v139 = vmul.f32 %v107, 0.2
  %v140 = vmul.f32 %v108, 0.2
  %v141 = vmul.f32 %v109, 0.2
  %v142 = vsel %vm110, %v94, %v126
  %v143 = vsel %vm111, %v95, %v127
  %v144 = vsel %vm112, %v96, %v128
  %v145 = vsel %vm113, %v97, %v129
  %v146 = vsel %vm114, %v98, %v130
  %v147 = vsel %vm115, %v99, %v131
  %v148 = vsel %vm116, %v100, %v132
  %v149 = vsel %vm117, %v101, %v133
  %v150 = vsel %vm118, %v102, %v134
  %v151 = vsel %vm119, %v103, %v135
  %v152 = vsel %vm120, %v104, %v136
  %v153 = vsel %vm121, %v105, %v137
  %v154 = vsel %vm122, %v106, %v138
  %v155 = vsel %vm123, %v107, %v139
  %v156 = vsel %vm124, %v108, %v140
  %v157 = vsel %vm125, %v109, %v141
  %158 = vst [vmem:[%s3] sm:$0xff] %v142
  %159 = vst [vmem:[%s3 + $0x8] sm:$0xff] %v143
  %160 = vst [vmem:[%s3 + $0x10] sm:$0xff] %v144
  %161 = vst [vmem:[%s3 + $0x18] sm:$0xff] %v145
  %162 = vst [vmem:[%s3 + $0x20] sm:$0xff] %v146
  %163 = vst [vmem:[%s3 + $0x28] sm:$0xff] %v147
  %164 = vst [vmem:[%s3 + $0x30] sm:$0xff] %v148
  %165 = vst [vmem:[%s3 + $0x38] sm:$0xff] %v149
  %166 = vst [vmem:[%s3 + $0x40] sm:$0xff] %v150
  %167 = vst [vmem:[%s3 + $0x48] sm:$0xff] %v151
  %168 = vst [vmem:[%s3 + $0x50] sm:$0xff] %v152
  %169 = vst [vmem:[%s3 + $0x58] sm:$0xff] %v153
  %170 = vst [vmem:[%s3 + $0x60] sm:$0xff] %v154
  %171 = vst [vmem:[%s3 + $0x68] sm:$0xff] %v155
  %172 = vst [vmem:[%s3 + $0x70] sm:$0xff] %v156
  %173 = vst [vmem:[%s3 + $0x78] sm:$0xff] %v157
  // Predicated region
  $region14: #{dn_autoencoder_forward.34} parent=0 // pred_check
    _
  $region15: #{dn_autoencoder_forward.34} parent=0 // pred_check_branch
    %175 = sbr.rel (0) target = $region17
  $region16: #{dn_autoencoder_forward.34} parent=0 // pred_region
    _
  $region17: #{dn_autoencoder_forward.34} parent=0 // pred_fallthru
    _
  // Predicated region
  $region18: #{dn_autoencoder_forward.34} parent=0 // pred_check
    _
  $region19: #{dn_autoencoder_forward.34} parent=0 // pred_check_branch
    %177 = sbr.rel (0) target = $region21
  $region20: #{dn_autoencoder_forward.34} parent=0 // pred_region
    _
  $region21: #{dn_autoencoder_forward.34} parent=0 // pred_fallthru
    _

// kernel: dn_autoencoder_forward.35
$region0: #{dn_autoencoder_forward.35}
  #allocation0 [shape = 'u32[]', space=smem, size = 0x4, offset = 0x4, fixed_abs, tag = 'smem constant byte address 0x4 - core index']
  #allocation1 [shape = 'u32[144,128]{1,0:T(1,128)}', space=vmem, size = 0x12000, scoped, tag = 'internal scratch']
  %s0 = inlined_call_operand.vmem [shape: bf16[16,288], index: 0, kind: input, shape index: {}]
  %s1 = inlined_call_operand.vmem [shape: bf16[288,2048], index: 1, kind: input, shape index: {}]
  %s2 = inlined_call_operand.vmem [shape: f32[16,2048], index: 2, kind: output, shape index: {0}]
  %s3 = inlined_call_operand.vmem [shape: f32[16,1], index: 3, kind: output, shape index: {1}]
  %s4 = inlined_call_operand.vmem [shape: f32[16,1], index: 4, kind: output, shape index: {2}]
  %5 = xla_tuple %s2, %s3, %s4
  %s6 = sld [smem:[#allocation0]]
  $region103: #{dn_autoencoder_forward.35} parent=0
    _
  %s8 = ssub.s32 1, %s6
  %s9 = scalar_select 0, %s8, %s6
  $region1: #{dn_autoencoder_forward.35} parent=0
    #allocation2 [shape = 'u8[589824]{0}', space=vmem, size = 0x90000, scoped, tag = 'input window, operand 1']
    #allocation3 [shape = 'u8[65536]{0}', space=vmem, size = 0x10000, scoped, tag = 'output window, operand 0']
    loop: start=0, step=1, limit=6
    $region2: #{dn_autoencoder_forward.35} parent=1 // loop_pre_header
      _
    $region3: #{dn_autoencoder_forward.35} parent=1 // loop_header
      %s11 = sphi 0, %s15
      %p12 = scmp.ge.s32.totalorder %s11, 6
      %s19 = sphi 0, %s19
      %s21 = sphi 0, %s19
      %s22 = sphi 0, %s21
      %s36 = sphi 0, %s22
      %s42 = sphi 0, %s44
      %s45 = sphi 0, %s42
      %s46 = sphi 0, %s45
      %s62 = sphi 0, %s46
      %s68 = sphi 0, %s70
      %s71 = sphi 0, %s68
      %s72 = sphi 0, %s71
      %s88 = sphi 0, %s72
      %s92 = sphi 0, %s92
      %s94 = sphi 0, %s92
      %s95 = sphi 0, %s94
      %s109 = sphi 0, %s95
      %s113 = sphi 0, %s113
      %s115 = sphi 0, %s113
      %s116 = sphi 0, %s115
      %s130 = sphi 0, %s116
    $region4: #{dn_autoencoder_forward.35} parent=1 // loop_header_branch
      %14 = sbr.rel (%p12) target = $region8
    $region5: #{dn_autoencoder_forward.35} parent=1 // loop_body
      %s16 = ssub.s32 %s11, 1
      %s17 = ssub.s32 %s11, 2
      %s18 = sadd.s32 %s11, 1
      %s20 = sadd.s32 %s19, 1
      %p23 = scmp.eq.s32.totalorder %s11, 3
      %p24 = scmp.ne.s32.totalorder %s19, %s21
      %p25 = scmp.eq.s32.totalorder %s11, 0
      %p26 = por %p24, %p25
      %p27 = scmp.ne.s32.totalorder %s19, %s21
      %p28 = scmp.eq.s32.totalorder %s16, 3
      %p29 = por %p27, %p28
      %p30 = scmp.ne.s32.totalorder %s21, %s22
      %p31 = scmp.eq.s32.totalorder %s16, 0
      %p32 = por %p30, %p31
      %p33 = scmp.ne.s32.totalorder %s21, %s22
      %p34 = scmp.eq.s32.totalorder %s17, 3
      %p35 = por %p33, %p34
      %p37 = scmp.ne.s32.totalorder %s22, %s36
      %p38 = scmp.eq.s32.totalorder %s17, 0
      %p39 = por %p37, %p38
      %s40 = ssub.s32 %s11, %s18
      %p41 = scmp.eq.s32.totalorder %s40, 0
      %s43 = sadd.s32 %s42, 1
      %s44 = scalar_select %p41, %s42, %s43
      %p47 = pneg %p41
      %p48 = scmp.eq.s32.totalorder %s11, 3
      %p49 = por %p47, %p48
      %p50 = scmp.ne.s32.totalorder %s42, %s45
      %p51 = scmp.eq.s32.totalorder %s11, 0
      %p52 = por %p50, %p51
      %p53 = scmp.ne.s32.totalorder %s42, %s45
      %p54 = scmp.eq.s32.totalorder %s16, 3
      %p55 = por %p53, %p54
      %p56 = scmp.ne.s32.totalorder %s45, %s46
      %p57 = scmp.eq.s32.totalorder %s16, 0
      %p58 = por %p56, %p57
      %p59 = scmp.ne.s32.totalorder %s45, %s46
      %p60 = scmp.eq.s32.totalorder %s17, 3
      %p61 = por %p59, %p60
      %p63 = scmp.ne.s32.totalorder %s46, %s62
      %p64 = scmp.eq.s32.totalorder %s17, 0
      %p65 = por %p63, %p64
      %s66 = ssub.s32 %s11, %s18
      %p67 = scmp.eq.s32.totalorder %s66, 0
      %s69 = sadd.s32 %s68, 1
      %s70 = scalar_select %p67, %s68, %s69
      %p73 = pneg %p67
      %p74 = scmp.eq.s32.totalorder %s11, 3
      %p75 = por %p73, %p74
      %p76 = scmp.ne.s32.totalorder %s68, %s71
      %p77 = scmp.eq.s32.totalorder %s11, 0
      %p78 = por %p76, %p77
      %p79 = scmp.ne.s32.totalorder %s68, %s71
      %p80 = scmp.eq.s32.totalorder %s16, 3
      %p81 = por %p79, %p80
      %p82 = scmp.ne.s32.totalorder %s71, %s72
      %p83 = scmp.eq.s32.totalorder %s16, 0
      %p84 = por %p82, %p83
      %p85 = scmp.ne.s32.totalorder %s71, %s72
      %p86 = scmp.eq.s32.totalorder %s17, 3
      %p87 = por %p85, %p86
      %p89 = scmp.ne.s32.totalorder %s72, %s88
      %p90 = scmp.eq.s32.totalorder %s17, 0
      %p91 = por %p89, %p90
      %s93 = sadd.s32 %s92, 1
      %p96 = scmp.eq.s32.totalorder %s11, 3
      %p97 = scmp.ne.s32.totalorder %s92, %s94
      %p98 = scmp.eq.s32.totalorder %s11, 0
      %p99 = por %p97, %p98
      %p100 = scmp.ne.s32.totalorder %s92, %s94
      %p101 = scmp.eq.s32.totalorder %s16, 3
      %p102 = por %p100, %p101
      %p103 = scmp.ne.s32.totalorder %s94, %s95
      %p104 = scmp.eq.s32.totalorder %s16, 0
      %p105 = por %p103, %p104
      %p106 = scmp.ne.s32.totalorder %s94, %s95
      %p107 = scmp.eq.s32.totalorder %s17, 3
      %p108 = por %p106, %p107
      %p110 = scmp.ne.s32.totalorder %s95, %s109
      %p111 = scmp.eq.s32.totalorder %s17, 0
      %p112 = por %p110, %p111
      %s114 = sadd.s32 %s113, 1
      %p117 = scmp.eq.s32.totalorder %s11, 3
      %p118 = scmp.ne.s32.totalorder %s113, %s115
      %p119 = scmp.eq.s32.totalorder %s11, 0
      %p120 = por %p118, %p119
      %p121 = scmp.ne.s32.totalorder %s113, %s115
      %p122 = scmp.eq.s32.totalorder %s16, 3
      %p123 = por %p121, %p122
      %p124 = scmp.ne.s32.totalorder %s115, %s116
      %p125 = scmp.eq.s32.totalorder %s16, 0
      %p126 = por %p124, %p125
      %p127 = scmp.ne.s32.totalorder %s115, %s116
      %p128 = scmp.eq.s32.totalorder %s17, 3
      %p129 = por %p127, %p128
      %p131 = scmp.ne.s32.totalorder %s116, %s130
      %p132 = scmp.eq.s32.totalorder %s17, 0
      %p133 = por %p131, %p132
      %p134 = scmp.le.s32.totalorder 1, %s11
      %p135 = scmp.lt.s32.totalorder %s11, 5
      %p136 = pnand %p134, %p135
      %p137 = pneg %p136
      // Predicated region
      $region9: #{dn_autoencoder_forward.35} parent=5 // pred_check
        _
      $region10: #{dn_autoencoder_forward.35} parent=5 // pred_check_branch
        %139 = sbr.rel (%p136) target = $region12
      $region11: #{dn_autoencoder_forward.35} parent=5 // pred_region
        %s140 = ssub.s32 %s11, 1
        // Predicated region
        $region13: #{dn_autoencoder_forward.35} parent=11 // pred_check
          %p141 = pneg %p32
        $region14: #{dn_autoencoder_forward.35} parent=11 // pred_check_branch
          %143 = sbr.rel (%p141) target = $region16
        $region15: #{dn_autoencoder_forward.35} parent=11 // pred_region
          _
        $region16: #{dn_autoencoder_forward.35} parent=11 // pred_fallthru
          _
      $region12: #{dn_autoencoder_forward.35} parent=5 // pred_fallthru
        _
      %p144 = scmp.lt.s32.totalorder %s11, 4
      // Predicated region
      $region17: #{dn_autoencoder_forward.35} parent=5 // pred_check
        %p145 = pneg %p144
      $region18: #{dn_autoencoder_forward.35} parent=5 // pred_check_branch
        %147 = sbr.rel (%p145) target = $region20
      $region19: #{dn_autoencoder_forward.35} parent=5 // pred_region
        // Predicated region
        $region21: #{dn_autoencoder_forward.35} parent=19 // pred_check
          %p148 = pneg %p52
        $region22: #{dn_autoencoder_forward.35} parent=19 // pred_check_branch
          %150 = sbr.rel (%p148) target = $region24
        $region23: #{dn_autoencoder_forward.35} parent=19 // pred_region
          %s151 = sand.u32 %s42, 1
          %s152 = sand.u32 %s42, 1
          %s153 = smul.addr %s152, 576
          %s154 = scalar_lea.vmem [#allocation2], %s153
          %s155 = smul.u32 4, %s11
          %s156 = smul.addr %s155, 4
          %s157 = scalar_lea.vmem %s1, %s156
          // Predicated region
          $region25: #{dn_autoencoder_forward.35} parent=23 // pred_check
            _
          $region26: #{dn_autoencoder_forward.35} parent=23 // pred_check_branch
            %159 = sbr.rel (0) target = $region28
          $region27: #{dn_autoencoder_forward.35} parent=23 // pred_region
            // Predicated region
            $region29: #{dn_autoencoder_forward.35} parent=27 // pred_check
              _
            $region30: #{dn_autoencoder_forward.35} parent=27 // pred_check_branch
              %161 = sbr.rel (0) target = $region32
            $region31: #{dn_autoencoder_forward.35} parent=27 // pred_region
              loop: start=0, step=1, limit=1
              $region33: #{dn_autoencoder_forward.35} parent=31 // loop_pre_header
                _
              $region34: #{dn_autoencoder_forward.35} parent=31 // loop_header
                %s163 = sphi 0, %s167
                %p164 = scmp.ge.s32.totalorder %s163, 1
                %s168 = sphi %s157, %s157
                %s169 = sphi %s154, %s154
              $region35: #{dn_autoencoder_forward.35} parent=31 // loop_header_branch
                %166 = sbr.rel (%p164) target = $region39
              $region36: #{dn_autoencoder_forward.35} parent=31 // loop_body
                %v170 = vld [vmem:[%s168] sm:$0xff]
                %171 = vst [vmem:[%s169] sm:$0xff] %v170
                %v172 = vld [vmem:[%s168 + $0x8] sm:$0xff]
                %173 = vst [vmem:[%s169 + $0x8] sm:$0xff] %v172
                %v174 = vld [vmem:[%s168 + $0x40] sm:$0xff]
                %175 = vst [vmem:[%s169 + $0x10] sm:$0xff] %v174
                %v176 = vld [vmem:[%s168 + $0x48] sm:$0xff]
                %177 = vst [vmem:[%s169 + $0x18] sm:$0xff] %v176
                %v178 = vld [vmem:[%s168 + $0x80] sm:$0xff]
                %179 = vst [vmem:[%s169 + $0x20] sm:$0xff] %v178
                %v180 = vld [vmem:[%s168 + $0x88] sm:$0xff]
                %181 = vst [vmem:[%s169 + $0x28] sm:$0xff] %v180
                %v182 = vld [vmem:[%s168 + $0xc0] sm:$0xff]
                %183 = vst [vmem:[%s169 + $0x30] sm:$0xff] %v182
                %v184 = vld [vmem:[%s168 + $0xc8] sm:$0xff]
                %185 = vst [vmem:[%s169 + $0x38] sm:$0xff] %v184
                %v186 = vld [vmem:[%s168 + $0x100] sm:$0xff]
                %187 = vst [vmem:[%s169 + $0x40] sm:$0xff] %v186
                %v188 = vld [vmem:[%s168 + $0x108] sm:$0xff]
                %189 = vst [vmem:[%s169 + $0x48] sm:$0xff] %v188
                %v190 = vld [vmem:[%s168 + $0x140] sm:$0xff]
                %191 = vst [vmem:[%s169 + $0x50] sm:$0xff] %v190
                %v192 = vld [vmem:[%s168 + $0x148] sm:$0xff]
                %193 = vst [vmem:[%s169 + $0x58] sm:$0xff] %v192
                %v194 = vld [vmem:[%s168 + $0x180] sm:$0xff]
                %195 = vst [vmem:[%s169 + $0x60] sm:$0xff] %v194
                %v196 = vld [vmem:[%s168 + $0x188] sm:$0xff]
                %197 = vst [vmem:[%s169 + $0x68] sm:$0xff] %v196
                %v198 = vld [vmem:[%s168 + $0x1c0] sm:$0xff]
                %199 = vst [vmem:[%s169 + $0x70] sm:$0xff] %v198
                %v200 = vld [vmem:[%s168 + $0x1c8] sm:$0xff]
                %201 = vst [vmem:[%s169 + $0x78] sm:$0xff] %v200
                %v202 = vld [vmem:[%s168 + $0x200] sm:$0xff]
                %203 = vst [vmem:[%s169 + $0x80] sm:$0xff] %v202
                %v204 = vld [vmem:[%s168 + $0x208] sm:$0xff]
                %205 = vst [vmem:[%s169 + $0x88] sm:$0xff] %v204
                %v206 = vld [vmem:[%s168 + $0x240] sm:$0xff]
                %207 = vst [vmem:[%s169 + $0x90] sm:$0xff] %v206
                %v208 = vld [vmem:[%s168 + $0x248] sm:$0xff]
                %209 = vst [vmem:[%s169 + $0x98] sm:$0xff] %v208
                %v210 = vld [vmem:[%s168 + $0x280] sm:$0xff]
                %211 = vst [vmem:[%s169 + $0xa0] sm:$0xff] %v210
                %v212 = vld [vmem:[%s168 + $0x288] sm:$0xff]
                %213 = vst [vmem:[%s169 + $0xa8] sm:$0xff] %v212
                %v214 = vld [vmem:[%s168 + $0x2c0] sm:$0xff]
                %215 = vst [vmem:[%s169 + $0xb0] sm:$0xff] %v214
                %v216 = vld [vmem:[%s168 + $0x2c8] sm:$0xff]
                %217 = vst [vmem:[%s169 + $0xb8] sm:$0xff] %v216
                %v218 = vld [vmem:[%s168 + $0x300] sm:$0xff]
                %219 = vst [vmem:[%s169 + $0xc0] sm:$0xff] %v218
                %v220 = vld [vmem:[%s168 + $0x308] sm:$0xff]
                %221 = vst [vmem:[%s169 + $0xc8] sm:$0xff] %v220
                %v222 = vld [vmem:[%s168 + $0x340] sm:$0xff]
                %223 = vst [vmem:[%s169 + $0xd0] sm:$0xff] %v222
                %v224 = vld [vmem:[%s168 + $0x348] sm:$0xff]
                %225 = vst [vmem:[%s169 + $0xd8] sm:$0xff] %v224
                %v226 = vld [vmem:[%s168 + $0x380] sm:$0xff]
                %227 = vst [vmem:[%s169 + $0xe0] sm:$0xff] %v226
                %v228 = vld [vmem:[%s168 + $0x388] sm:$0xff]
                %229 = vst [vmem:[%s169 + $0xe8] sm:$0xff] %v228
                %v230 = vld [vmem:[%s168 + $0x3c0] sm:$0xff]
                %231 = vst [vmem:[%s169 + $0xf0] sm:$0xff] %v230
                %v232 = vld [vmem:[%s168 + $0x3c8] sm:$0xff]
                %233 = vst [vmem:[%s169 + $0xf8] sm:$0xff] %v232
                %v234 = vld [vmem:[%s168 + $0x400] sm:$0xff]
                %235 = vst [vmem:[%s169 + $0x100] sm:$0xff] %v234
                %v236 = vld [vmem:[%s168 + $0x408] sm:$0xff]
                %237 = vst [vmem:[%s169 + $0x108] sm:$0xff] %v236
                %v238 = vld [vmem:[%s168 + $0x440] sm:$0xff]
                %239 = vst [vmem:[%s169 + $0x110] sm:$0xff] %v238
                %v240 = vld [vmem:[%s168 + $0x448] sm:$0xff]
                %241 = vst [vmem:[%s169 + $0x118] sm:$0xff] %v240
                %v242 = vld [vmem:[%s168 + $0x480] sm:$0xff]
                %243 = vst [vmem:[%s169 + $0x120] sm:$0xff] %v242
                %v244 = vld [vmem:[%s168 + $0x488] sm:$0xff]
                %245 = vst [vmem:[%s169 + $0x128] sm:$0xff] %v244
                %v246 = vld [vmem:[%s168 + $0x4c0] sm:$0xff]
                %247 = vst [vmem:[%s169 + $0x130] sm:$0xff] %v246
                %v248 = vld [vmem:[%s168 + $0x4c8] sm:$0xff]
                %249 = vst [vmem:[%s169 + $0x138] sm:$0xff] %v248
                %v250 = vld [vmem:[%s168 + $0x500] sm:$0xff]
                %251 = vst [vmem:[%s169 + $0x140] sm:$0xff] %v250
                %v252 = vld [vmem:[%s168 + $0x508] sm:$0xff]
                %253 = vst [vmem:[%s169 + $0x148] sm:$0xff] %v252
                %v254 = vld [vmem:[%s168 + $0x540] sm:$0xff]
                %255 = vst [vmem:[%s169 + $0x150] sm:$0xff] %v254
                %v256 = vld [vmem:[%s168 + $0x548] sm:$0xff]
                %257 = vst [vmem:[%s169 + $0x158] sm:$0xff] %v256
                %v258 = vld [vmem:[%s168 + $0x580] sm:$0xff]
                %259 = vst [vmem:[%s169 + $0x160] sm:$0xff] %v258
                %v260 = vld [vmem:[%s168 + $0x588] sm:$0xff]
                %261 = vst [vmem:[%s169 + $0x168] sm:$0xff] %v260
                %v262 = vld [vmem:[%s168 + $0x5c0] sm:$0xff]
                %263 = vst [vmem:[%s169 + $0x170] sm:$0xff] %v262
                %v264 = vld [vmem:[%s168 + $0x5c8] sm:$0xff]
                %265 = vst [vmem:[%s169 + $0x178] sm:$0xff] %v264
                %v266 = vld [vmem:[%s168 + $0x600] sm:$0xff]
                %267 = vst [vmem:[%s169 + $0x180] sm:$0xff] %v266
                %v268 = vld [vmem:[%s168 + $0x608] sm:$0xff]
                %269 = vst [vmem:[%s169 + $0x188] sm:$0xff] %v268
                %v270 = vld [vmem:[%s168 + $0x640] sm:$0xff]
                %271 = vst [vmem:[%s169 + $0x190] sm:$0xff] %v270
                %v272 = vld [vmem:[%s168 + $0x648] sm:$0xff]
                %273 = vst [vmem:[%s169 + $0x198] sm:$0xff] %v272
                %v274 = vld [vmem:[%s168 + $0x680] sm:$0xff]
                %275 = vst [vmem:[%s169 + $0x1a0] sm:$0xff] %v274
                %v276 = vld [vmem:[%s168 + $0x688] sm:$0xff]
                %277 = vst [vmem:[%s169 + $0x1a8] sm:$0xff] %v276
                %v278 = vld [vmem:[%s168 + $0x6c0] sm:$0xff]
                %279 = vst [vmem:[%s169 + $0x1b0] sm:$0xff] %v278
                %v280 = vld [vmem:[%s168 + $0x6c8] sm:$0xff]
                %281 = vst [vmem:[%s169 + $0x1b8] sm:$0xff] %v280
                %v282 = vld [vmem:[%s168 + $0x700] sm:$0xff]
                %283 = vst [vmem:[%s169 + $0x1c0] sm:$0xff] %v282
                %v284 = vld [vmem:[%s168 + $0x708] sm:$0xff]
                %285 = vst [vmem:[%s169 + $0x1c8] sm:$0xff] %v284
                %v286 = vld [vmem:[%s168 + $0x740] sm:$0xff]
                %287 = vst [vmem:[%s169 + $0x1d0] sm:$0xff] %v286
                %v288 = vld [vmem:[%s168 + $0x748] sm:$0xff]
                %289 = vst [vmem:[%s169 + $0x1d8] sm:$0xff] %v288
                %v290 = vld [vmem:[%s168 + $0x780] sm:$0xff]
                %291 = vst [vmem:[%s169 + $0x1e0] sm:$0xff] %v290
                %v292 = vld [vmem:[%s168 + $0x788] sm:$0xff]
                %293 = vst [vmem:[%s169 + $0x1e8] sm:$0xff] %v292
                %v294 = vld [vmem:[%s168 + $0x7c0] sm:$0xff]
                %295 = vst [vmem:[%s169 + $0x1f0] sm:$0xff] %v294
                %v296 = vld [vmem:[%s168 + $0x7c8] sm:$0xff]
                %297 = vst [vmem:[%s169 + $0x1f8] sm:$0xff] %v296
                %v298 = vld [vmem:[%s168 + $0x800] sm:$0xff]
                %299 = vst [vmem:[%s169 + $0x200] sm:$0xff] %v298
                %v300 = vld [vmem:[%s168 + $0x808] sm:$0xff]
                %301 = vst [vmem:[%s169 + $0x208] sm:$0xff] %v300
                %v302 = vld [vmem:[%s168 + $0x840] sm:$0xff]
                %303 = vst [vmem:[%s169 + $0x210] sm:$0xff] %v302
                %v304 = vld [vmem:[%s168 + $0x848] sm:$0xff]
                %305 = vst [vmem:[%s169 + $0x218] sm:$0xff] %v304
                %v306 = vld [vmem:[%s168 + $0x880] sm:$0xff]
                %307 = vst [vmem:[%s169 + $0x220] sm:$0xff] %v306
                %v308 = vld [vmem:[%s168 + $0x888] sm:$0xff]
                %309 = vst [vmem:[%s169 + $0x228] sm:$0xff] %v308
                %v310 = vld [vmem:[%s168 + $0x8c0] sm:$0xff]
                %311 = vst [vmem:[%s169 + $0x230] sm:$0xff] %v310
                %v312 = vld [vmem:[%s168 + $0x8c8] sm:$0xff]
                %313 = vst [vmem:[%s169 + $0x238] sm:$0xff] %v312
              $region37: #{dn_autoencoder_forward.35} parent=31 // loop_footer
                %s167 = sadd.s32 1, %s163
              $region38: #{dn_autoencoder_forward.35} parent=31 // loop_footer_branch
                %162 = sbr.rel target = $region34
              $region39: #{dn_autoencoder_forward.35} parent=31 // loop_exit
                _
            $region32: #{dn_autoencoder_forward.35} parent=27 // pred_fallthru
              _
            // Predicated region
            $region40: #{dn_autoencoder_forward.35} parent=27 // pred_check
              _
            $region41: #{dn_autoencoder_forward.35} parent=27 // pred_check_branch
              %315 = sbr.rel target = $region43
            $region42: #{dn_autoencoder_forward.35} parent=27 // pred_region
              _
            $region43: #{dn_autoencoder_forward.35} parent=27 // pred_fallthru
              _
          $region28: #{dn_autoencoder_forward.35} parent=23 // pred_fallthru
            _
          %316 = vnop
        $region24: #{dn_autoencoder_forward.35} parent=19 // pred_fallthru
          _
      $region20: #{dn_autoencoder_forward.35} parent=5 // pred_fallthru
        _
      %p317 = scmp.le.s32.totalorder 1, %s11
      %p318 = scmp.lt.s32.totalorder %s11, 5
      %p319 = pnand %p317, %p318
      %p320 = pneg %p319
      // Predicated region
      $region44: #{dn_autoencoder_forward.35} parent=5 // pred_check
        _
      $region45: #{dn_autoencoder_forward.35} parent=5 // pred_check_branch
        %322 = sbr.rel (%p319) target = $region47
      $region46: #{dn_autoencoder_forward.35} parent=5 // pred_region
        %s323 = ssub.s32 %s11, 1
        %s324 = sand.u32 %s45, 1
        %s325 = sand.u32 %s45, 1
        %s326 = smul.addr %s325, 576
        %s327 = scalar_lea.vmem [#allocation2], %s326
        // Predicated region
        $region48: #{dn_autoencoder_forward.35} parent=46 // pred_check
          %p328 = pneg %p58
        $region49: #{dn_autoencoder_forward.35} parent=46 // pred_check_branch
          %330 = sbr.rel (%p328) target = $region51
        $region50: #{dn_autoencoder_forward.35} parent=46 // pred_region
          _
        $region51: #{dn_autoencoder_forward.35} parent=46 // pred_fallthru
          _
        %p331 = pneg %p32
        %p332 = pneg %p29
        %s333 = sand.u32 %s45, 1
        %s334 = sand.u32 %s45, 1
        %s335 = smul.addr %s334, 576
        %s336 = scalar_lea.vmem [#allocation2], %s335
        %p337 = pneg %p58
        %p338 = pneg %p55
        %p339 = pneg %p84
        %p340 = pneg %p81
        %s341 = sand.u32 %s71, 1
        %s342 = sand.u32 %s71, 1
        %s343 = smul.addr %s342, 64
        %s344 = scalar_lea.vmem [#allocation3], %s343
        %p345 = pneg %p105
        %p346 = pneg %p102
        %p347 = pneg %p126
        %p348 = pneg %p123
        %s349 = smul.u32 4, %s16
        %s350 = smul.u32 4, %s16
        %p352 = scmp.eq.s32.totalorder %s16, 0
        // Predicated region
        $region52: #{dn_autoencoder_forward.35} parent=46 // pred_check
          %p353 = pneg %p352
        $region53: #{dn_autoencoder_forward.35} parent=46 // pred_check_branch
          %355 = sbr.rel (%p353) target = $region55
        $region54: #{dn_autoencoder_forward.35} parent=46 // pred_region
          %vm356 = vcmask 7168
          %357 = vst.msk [vmem:[%s3] sm:$0xff] %vm356, 0.0
          %358 = vst.msk [vmem:[%s3 + $0x8] sm:$0xff] %vm356, 0.0
          %359 = vst.msk [vmem:[%s4] sm:$0xff] %vm356, 0.0
          %360 = vst.msk [vmem:[%s4 + $0x8] sm:$0xff] %vm356, 0.0
        $region55: #{dn_autoencoder_forward.35} parent=46 // pred_fallthru
          _
        %v361 = vld [vmem:[%s0] sm:$0xff]
        %v362 = vld [vmem:[%s0 + $0x8] sm:$0xf]
        %v363 = vld [vmem:[%s0 + $0xc] sm:$0xff]
        %v364 = vld [vmem:[%s0 + $0x14] sm:$0xf]
        %v365 = vld [vmem:[%s327] sm:$0xff]
        %v366 = vld [vmem:[%s327 + $0x8] sm:$0xff]
        %v367 = vld [vmem:[%s327 + $0x10] sm:$0xff]
        %v368 = vld [vmem:[%s327 + $0x18] sm:$0xff]
        %v369 = vld [vmem:[%s327 + $0x20] sm:$0xff]
        %v370 = vld [vmem:[%s327 + $0x28] sm:$0xff]
        %v371 = vld [vmem:[%s327 + $0x30] sm:$0xff]
        %v372 = vld [vmem:[%s327 + $0x38] sm:$0xff]
        %v373 = vld [vmem:[%s327 + $0x40] sm:$0xff]
        %v374 = vld [vmem:[%s327 + $0x48] sm:$0xff]
        %v375 = vld [vmem:[%s327 + $0x50] sm:$0xff]
        %v376 = vld [vmem:[%s327 + $0x58] sm:$0xff]
        %v377 = vld [vmem:[%s327 + $0x60] sm:$0xff]
        %v378 = vld [vmem:[%s327 + $0x68] sm:$0xff]
        %v379 = vld [vmem:[%s327 + $0x70] sm:$0xff]
        %v380 = vld [vmem:[%s327 + $0x78] sm:$0xff]
        %v381 = vld [vmem:[%s327 + $0x80] sm:$0xff]
        %v382 = vld [vmem:[%s327 + $0x88] sm:$0xff]
        %v383 = vld [vmem:[%s327 + $0x90] sm:$0xff]
        %v384 = vld [vmem:[%s327 + $0x98] sm:$0xff]
        %v385 = vld [vmem:[%s327 + $0xa0] sm:$0xff]
        %v386 = vld [vmem:[%s327 + $0xa8] sm:$0xff]
        %v387 = vld [vmem:[%s327 + $0xb0] sm:$0xff]
        %v388 = vld [vmem:[%s327 + $0xb8] sm:$0xff]
        %v389 = vld [vmem:[%s327 + $0xc0] sm:$0xff]
        %v390 = vld [vmem:[%s327 + $0xc8] sm:$0xff]
        %v391 = vld [vmem:[%s327 + $0xd0] sm:$0xff]
        %v392 = vld [vmem:[%s327 + $0xd8] sm:$0xff]
        %v393 = vld [vmem:[%s327 + $0xe0] sm:$0xff]
        %v394 = vld [vmem:[%s327 + $0xe8] sm:$0xff]
        %v395 = vld [vmem:[%s327 + $0xf0] sm:$0xff]
        %v396 = vld [vmem:[%s327 + $0xf8] sm:$0xff]
        %v397 = vld [vmem:[%s327 + $0x100] sm:$0xff]
        %v398 = vld [vmem:[%s327 + $0x108] sm:$0xff]
        %v399 = vld [vmem:[%s327 + $0x110] sm:$0xff]
        %v400 = vld [vmem:[%s327 + $0x118] sm:$0xff]
        %v401 = vld [vmem:[%s327 + $0x120] sm:$0xff]
        %v402 = vld [vmem:[%s327 + $0x128] sm:$0xff]
        %v403 = vld [vmem:[%s327 + $0x130] sm:$0xff]
        %v404 = vld [vmem:[%s327 + $0x138] sm:$0xff]
        %v405 = vld [vmem:[%s327 + $0x140] sm:$0xff]
        %v406 = vld [vmem:[%s327 + $0x148] sm:$0xff]
        %v407 = vld [vmem:[%s327 + $0x150] sm:$0xff]
        %v408 = vld [vmem:[%s327 + $0x158] sm:$0xff]
        %v409 = vld [vmem:[%s327 + $0x160] sm:$0xff]
        %v410 = vld [vmem:[%s327 + $0x168] sm:$0xff]
        %v411 = vld [vmem:[%s327 + $0x170] sm:$0xff]
        %v412 = vld [vmem:[%s327 + $0x178] sm:$0xff]
        %v413 = vld [vmem:[%s327 + $0x180] sm:$0xff]
        %v414 = vld [vmem:[%s327 + $0x188] sm:$0xff]
        %v415 = vld [vmem:[%s327 + $0x190] sm:$0xff]
        %v416 = vld [vmem:[%s327 + $0x198] sm:$0xff]
        %v417 = vld [vmem:[%s327 + $0x1a0] sm:$0xff]
        %v418 = vld [vmem:[%s327 + $0x1a8] sm:$0xff]
        %v419 = vld [vmem:[%s327 + $0x1b0] sm:$0xff]
        %v420 = vld [vmem:[%s327 + $0x1b8] sm:$0xff]
        %v421 = vld [vmem:[%s327 + $0x1c0] sm:$0xff]
        %v422 = vld [vmem:[%s327 + $0x1c8] sm:$0xff]
        %v423 = vld [vmem:[%s327 + $0x1d0] sm:$0xff]
        %v424 = vld [vmem:[%s327 + $0x1d8] sm:$0xff]
        %v425 = vld [vmem:[%s327 + $0x1e0] sm:$0xff]
        %v426 = vld [vmem:[%s327 + $0x1e8] sm:$0xff]
        %v427 = vld [vmem:[%s327 + $0x1f0] sm:$0xff]
        %v428 = vld [vmem:[%s327 + $0x1f8] sm:$0xff]
        %v429 = vld [vmem:[%s327 + $0x200] sm:$0xff]
        %v430 = vld [vmem:[%s327 + $0x208] sm:$0xff]
        %v431 = vld [vmem:[%s327 + $0x210] sm:$0xff]
        %v432 = vld [vmem:[%s327 + $0x218] sm:$0xff]
        %v433 = vld [vmem:[%s327 + $0x220] sm:$0xff]
        %v434 = vld [vmem:[%s327 + $0x228] sm:$0xff]
        %v435 = vld [vmem:[%s327 + $0x230] sm:$0xff]
        %v436 = vld [vmem:[%s327 + $0x238] sm:$0xff]
        %v441 = vunpack.c.l.b16 %v361
        %v442 = vunpack.c.h.b16 %v361
        %v443 = vunpack.c.l.b16 %v362
        %v444 = vunpack.c.l.b16 %v363
        %v445 = vunpack.c.h.b16 %v363
        %v446 = vunpack.c.l.b16 %v364
        %v447 = vpack.c.b16 %v444, %v441
        %v448 = vpack.c.b16 %v445, %v442
        %v449 = vpack.c.b16 %v446, %v443
        %v524 = vunpack.c.l.b16 %v365
        %v525 = vunpack.c.h.b16 %v365
        %v526 = vunpack.c.l.b16 %v366
        %v527 = vunpack.c.h.b16 %v366
        %v528 = vunpack.c.l.b16 %v367
        %v529 = vunpack.c.h.b16 %v367
        %v530 = vunpack.c.l.b16 %v368
        %v531 = vunpack.c.h.b16 %v368
        %v532 = vunpack.c.l.b16 %v369
        %v533 = vunpack.c.h.b16 %v369
        %v534 = vunpack.c.l.b16 %v370
        %v535 = vunpack.c.h.b16 %v370
        %v536 = vunpack.c.l.b16 %v371
        %v537 = vunpack.c.h.b16 %v371
        %v538 = vunpack.c.l.b16 %v372
        %v539 = vunpack.c.h.b16 %v372
        %v540 = vunpack.c.l.b16 %v373
        %v541 = vunpack.c.h.b16 %v373
        %v542 = vunpack.c.l.b16 %v374
        %v543 = vunpack.c.h.b16 %v374
        %v544 = vunpack.c.l.b16 %v375
        %v545 = vunpack.c.h.b16 %v375
        %v546 = vunpack.c.l.b16 %v376
        %v547 = vunpack.c.h.b16 %v376
        %v548 = vunpack.c.l.b16 %v377
        %v549 = vunpack.c.h.b16 %v377
        %v550 = vunpack.c.l.b16 %v378
        %v551 = vunpack.c.h.b16 %v378
        %v552 = vunpack.c.l.b16 %v379
        %v553 = vunpack.c.h.b16 %v379
        %v554 = vunpack.c.l.b16 %v380
        %v555 = vunpack.c.h.b16 %v380
        %v556 = vunpack.c.l.b16 %v381
        %v557 = vunpack.c.h.b16 %v381
        %v558 = vunpack.c.l.b16 %v382
        %v559 = vunpack.c.h.b16 %v382
        %v560 = vunpack.c.l.b16 %v383
        %v561 = vunpack.c.h.b16 %v383
        %v562 = vunpack.c.l.b16 %v384
        %v563 = vunpack.c.h.b16 %v384
        %v564 = vunpack.c.l.b16 %v385
        %v565 = vunpack.c.h.b16 %v385
        %v566 = vunpack.c.l.b16 %v386
        %v567 = vunpack.c.h.b16 %v386
        %v568 = vunpack.c.l.b16 %v387
        %v569 = vunpack.c.h.b16 %v387
        %v570 = vunpack.c.l.b16 %v388
        %v571 = vunpack.c.h.b16 %v388
        %v572 = vunpack.c.l.b16 %v389
        %v573 = vunpack.c.h.b16 %v389
        %v574 = vunpack.c.l.b16 %v390
        %v575 = vunpack.c.h.b16 %v390
        %v576 = vunpack.c.l.b16 %v391
        %v577 = vunpack.c.h.b16 %v391
        %v578 = vunpack.c.l.b16 %v392
        %v579 = vunpack.c.h.b16 %v392
        %v580 = vunpack.c.l.b16 %v393
        %v581 = vunpack.c.h.b16 %v393
        %v582 = vunpack.c.l.b16 %v394
        %v583 = vunpack.c.h.b16 %v394
        %v584 = vunpack.c.l.b16 %v395
        %v585 = vunpack.c.h.b16 %v395
        %v586 = vunpack.c.l.b16 %v396
        %v587 = vunpack.c.h.b16 %v396
        %v588 = vunpack.c.l.b16 %v397
        %v589 = vunpack.c.h.b16 %v397
        %v590 = vunpack.c.l.b16 %v398
        %v591 = vunpack.c.h.b16 %v398
        %v592 = vunpack.c.l.b16 %v399
        %v593 = vunpack.c.h.b16 %v399
        %v594 = vunpack.c.l.b16 %v400
        %v595 = vunpack.c.h.b16 %v400
        %v596 = vunpack.c.l.b16 %v401
        %v597 = vunpack.c.h.b16 %v401
        %v598 = vunpack.c.l.b16 %v402
        %v599 = vunpack.c.h.b16 %v402
        %v600 = vunpack.c.l.b16 %v403
        %v601 = vunpack.c.h.b16 %v403
        %v602 = vunpack.c.l.b16 %v404
        %v603 = vunpack.c.h.b16 %v404
        %v604 = vunpack.c.l.b16 %v405
        %v605 = vunpack.c.h.b16 %v405
        %v606 = vunpack.c.l.b16 %v406
        %v607 = vunpack.c.h.b16 %v406
        %v608 = vunpack.c.l.b16 %v407
        %v609 = vunpack.c.h.b16 %v407
        %v610 = vunpack.c.l.b16 %v408
        %v611 = vunpack.c.h.b16 %v408
        %v612 = vunpack.c.l.b16 %v409
        %v613 = vunpack.c.h.b16 %v409
        %v614 = vunpack.c.l.b16 %v410
        %v615 = vunpack.c.h.b16 %v410
        %v616 = vunpack.c.l.b16 %v411
        %v617 = vunpack.c.h.b16 %v411
        %v618 = vunpack.c.l.b16 %v412
        %v619 = vunpack.c.h.b16 %v412
        %v620 = vunpack.c.l.b16 %v413
        %v621 = vunpack.c.h.b16 %v413
        %v622 = vunpack.c.l.b16 %v414
        %v623 = vunpack.c.h.b16 %v414
        %v624 = vunpack.c.l.b16 %v415
        %v625 = vunpack.c.h.b16 %v415
        %v626 = vunpack.c.l.b16 %v416
        %v627 = vunpack.c.h.b16 %v416
        %v628 = vunpack.c.l.b16 %v417
        %v629 = vunpack.c.h.b16 %v417
        %v630 = vunpack.c.l.b16 %v418
        %v631 = vunpack.c.h.b16 %v418
        %v632 = vunpack.c.l.b16 %v419
        %v633 = vunpack.c.h.b16 %v419
        %v634 = vunpack.c.l.b16 %v420
        %v635 = vunpack.c.h.b16 %v420
        %v636 = vunpack.c.l.b16 %v421
        %v637 = vunpack.c.h.b16 %v421
        %v638 = vunpack.c.l.b16 %v422
        %v639 = vunpack.c.h.b16 %v422
        %v640 = vunpack.c.l.b16 %v423
        %v641 = vunpack.c.h.b16 %v423
        %v642 = vunpack.c.l.b16 %v424
        %v643 = vunpack.c.h.b16 %v424
        %v644 = vunpack.c.l.b16 %v425
        %v645 = vunpack.c.h.b16 %v425
        %v646 = vunpack.c.l.b16 %v426
        %v647 = vunpack.c.h.b16 %v426
        %v648 = vunpack.c.l.b16 %v427
        %v649 = vunpack.c.h.b16 %v427
        %v650 = vunpack.c.l.b16 %v428
        %v651 = vunpack.c.h.b16 %v428
        %v652 = vunpack.c.l.b16 %v429
        %v653 = vunpack.c.h.b16 %v429
        %v654 = vunpack.c.l.b16 %v430
        %v655 = vunpack.c.h.b16 %v430
        %v656 = vunpack.c.l.b16 %v431
        %v657 = vunpack.c.h.b16 %v431
        %v658 = vunpack.c.l.b16 %v432
        %v659 = vunpack.c.h.b16 %v432
        %v660 = vunpack.c.l.b16 %v433
        %v661 = vunpack.c.h.b16 %v433
        %v662 = vunpack.c.l.b16 %v434
        %v663 = vunpack.c.h.b16 %v434
        %v664 = vunpack.c.l.b16 %v435
        %v665 = vunpack.c.h.b16 %v435
        %v666 = vunpack.c.l.b16 %v436
        %v667 = vunpack.c.h.b16 %v436
        %v668 = vpack.c.b16 %v528, %v524
        %v669 = vpack.c.b16 %v529, %v525
        %v670 = vpack.c.b16 %v530, %v526
        %v671 = vpack.c.b16 %v531, %v527
        %v672 = vpack.c.b16 %v536, %v532
        %v673 = vpack.c.b16 %v537, %v533
        %v674 = vpack.c.b16 %v538, %v534
        %v675 = vpack.c.b16 %v539, %v535
        %v676 = vpack.c.b16 %v544, %v540
        %v677 = vpack.c.b16 %v545, %v541
        %v678 = vpack.c.b16 %v546, %v542
        %v679 = vpack.c.b16 %v547, %v543
        %v680 = vpack.c.b16 %v552, %v548
        %v681 = vpack.c.b16 %v553, %v549
        %v682 = vpack.c.b16 %v554, %v550
        %v683 = vpack.c.b16 %v555, %v551
        %v684 = vpack.c.b16 %v560, %v556
        %v685 = vpack.c.b16 %v561, %v557
        %v686 = vpack.c.b16 %v562, %v558
        %v687 = vpack.c.b16 %v563, %v559
        %v688 = vpack.c.b16 %v568, %v564
        %v689 = vpack.c.b16 %v569, %v565
        %v690 = vpack.c.b16 %v570, %v566
        %v691 = vpack.c.b16 %v571, %v567
        %v692 = vpack.c.b16 %v576, %v572
        %v693 = vpack.c.b16 %v577, %v573
        %v694 = vpack.c.b16 %v578, %v574
        %v695 = vpack.c.b16 %v579, %v575
        %v696 = vpack.c.b16 %v584, %v580
        %v697 = vpack.c.b16 %v585, %v581
        %v698 = vpack.c.b16 %v586, %v582
        %v699 = vpack.c.b16 %v587, %v583
        %v700 = vpack.c.b16 %v592, %v588
        %v701 = vpack.c.b16 %v593, %v589
        %v702 = vpack.c.b16 %v594, %v590
        %v703 = vpack.c.b16 %v595, %v591
        %v704 = vpack.c.b16 %v600, %v596
        %v705 = vpack.c.b16 %v601, %v597
        %v706 = vpack.c.b16 %v602, %v598
        %v707 = vpack.c.b16 %v603, %v599
        %v708 = vpack.c.b16 %v608, %v604
        %v709 = vpack.c.b16 %v609, %v605
        %v710 = vpack.c.b16 %v610, %v606
        %v711 = vpack.c.b16 %v611, %v607
        %v712 = vpack.c.b16 %v616, %v612
        %v713 = vpack.c.b16 %v617, %v613
        %v714 = vpack.c.b16 %v618, %v614
        %v715 = vpack.c.b16 %v619, %v615
        %v716 = vpack.c.b16 %v624, %v620
        %v717 = vpack.c.b16 %v625, %v621
        %v718 = vpack.c.b16 %v626, %v622
        %v719 = vpack.c.b16 %v627, %v623
        %v720 = vpack.c.b16 %v632, %v628
        %v721 = vpack.c.b16 %v633, %v629
        %v722 = vpack.c.b16 %v634, %v630
        %v723 = vpack.c.b16 %v635, %v631
        %v724 = vpack.c.b16 %v640, %v636
        %v725 = vpack.c.b16 %v641, %v637
        %v726 = vpack.c.b16 %v642, %v638
        %v727 = vpack.c.b16 %v643, %v639
        %v728 = vpack.c.b16 %v648, %v644
        %v729 = vpack.c.b16 %v649, %v645
        %v730 = vpack.c.b16 %v650, %v646
        %v731 = vpack.c.b16 %v651, %v647
        %v732 = vpack.c.b16 %v656, %v652
        %v733 = vpack.c.b16 %v657, %v653
        %v734 = vpack.c.b16 %v658, %v654
        %v735 = vpack.c.b16 %v659, %v655
        %v736 = vpack.c.b16 %v664, %v660
        %v737 = vpack.c.b16 %v665, %v661
        %v738 = vpack.c.b16 %v666, %v662
        %v739 = vpack.c.b16 %v667, %v663
        %vm812 = vcmask 261120
        %v814 = vsel %vm812, %v449, 0
        %816 = vmatprep.subr.bf16.mxu0 %v669
        %817 = vmatpush1.bf16.msra.mxu0 %v668
        %818 = vmatprep.subr.bf16.mxu0 %v673
        %819 = vmatpush1.bf16.msra.mxu0 %v672
        %820 = vmatprep.subr.bf16.mxu0 %v677
        %821 = vmatpush1.bf16.msra.mxu0 %v676
        %822 = vmatprep.subr.bf16.mxu0 %v681
        %823 = vmatpush1.bf16.msra.mxu0 %v680
        %824 = vmatprep.subr.bf16.mxu0 %v685
        %825 = vmatpush1.bf16.msra.mxu0 %v684
        %826 = vmatprep.subr.bf16.mxu0 %v689
        %827 = vmatpush1.bf16.msra.mxu0 %v688
        %828 = vmatprep.subr.bf16.mxu0 %v693
        %829 = vmatpush1.bf16.msra.mxu0 %v692
        %830 = vmatprep.subr.bf16.mxu0 %v697
        %831 = vmatpush1.bf16.msra.mxu0 %v696
        %832 = vmatprep.subr.bf16.mxu0 %v701
        %833 = vmatpush1.bf16.msra.mxu0 %v700
        %834 = vmatprep.subr.bf16.mxu0 %v705
        %835 = vmatpush1.bf16.msra.mxu0 %v704
        %836 = vmatprep.subr.bf16.mxu0 %v709
        %837 = vmatpush1.bf16.msra.mxu0 %v708
        %838 = vmatprep.subr.bf16.mxu0 %v713
        %839 = vmatpush1.bf16.msra.mxu0 %v712
        %840 = vmatprep.subr.bf16.mxu0 %v717
        %841 = vmatpush1.bf16.msra.mxu0 %v716
        %842 = vmatprep.subr.bf16.mxu0 %v721
        %843 = vmatpush1.bf16.msra.mxu0 %v720
        %844 = vmatprep.subr.bf16.mxu0 %v725
        %845 = vmatpush1.bf16.msra.mxu0 %v724
        %846 = vmatprep.subr.bf16.mxu0 %v729
        %847 = vmatpush1.bf16.msra.mxu0 %v728
        %848 = vmatprep.mubr.bf16.mxu0 %v448
        %849 = vmatmul.mubr.bf16.gmra.mrb[0].mxu0 %v447
        %v850 = vpop.f32.mrb[0].mxu0
        %v851 = vadd.f32 0.0, %v850
        %v852 = vpop.f32.mrb[0].mxu0
        %v853 = vadd.f32 0.0, %v852
        %v854 = vpop.f32.mrb[0].mxu0
        %v855 = vadd.f32 0.0, %v854
        %v856 = vpop.f32.mrb[0].mxu0
        %v857 = vadd.f32 0.0, %v856
        %858 = vdwg.mxu0
        %859 = vmatprep.subr.bf16.mxu0 %v733
        %860 = vmatpush1.bf16.msra.mxu0 %v732
        %861 = vmatprep.subr.bf16.mxu0 %v737
        %862 = vmatpush1.bf16.msra.mxu0 %v736
        %863 = vmatprep.subr.bf16.mxu0 0
        %864 = vmatpush1.bf16.msra.mxu0 0
        %865 = vmatprep.subr.bf16.mxu0 0
        %866 = vmatpush1.bf16.msra.mxu0 0
        %867 = vmatprep.subr.bf16.mxu0 0
        %868 = vmatpush1.bf16.msra.mxu0 0
        %869 = vmatprep.subr.bf16.mxu0 0
        %870 = vmatpush1.bf16.msra.mxu0 0
        %871 = vmatprep.subr.bf16.mxu0 0
        %872 = vmatpush1.bf16.msra.mxu0 0
        %873 = vmatprep.subr.bf16.mxu0 0
        %874 = vmatpush1.bf16.msra.mxu0 0
        %875 = vmatprep.subr.bf16.mxu0 0
        %876 = vmatpush1.bf16.msra.mxu0 0
        %877 = vmatprep.subr.bf16.mxu0 0
        %878 = vmatpush1.bf16.msra.mxu0 0
        %879 = vmatprep.subr.bf16.mxu0 0
        %880 = vmatpush1.bf16.msra.mxu0 0
        %881 = vmatprep.subr.bf16.mxu0 0
        %882 = vmatpush1.bf16.msra.mxu0 0
        %883 = vmatprep.subr.bf16.mxu0 0
        %884 = vmatpush1.bf16.msra.mxu0 0
        %885 = vmatprep.subr.bf16.mxu0 0
        %886 = vmatpush1.bf16.msra.mxu0 0
        %887 = vmatprep.subr.bf16.mxu0 0
        %888 = vmatpush1.bf16.msra.mxu0 0
        %889 = vmatprep.subr.bf16.mxu0 0
        %890 = vmatpush1.bf16.msra.mxu0 0
        %891 = vmatprep.mubr.bf16.mxu0 0
        %892 = vmatmul.mubr.bf16.gmra.mrb[0].mxu0 %v814
        %v893 = vpop.f32.mrb[0].mxu0
        %v894 = vadd.f32 %v851, %v893
        %v895 = vpop.f32.mrb[0].mxu0
        %v896 = vadd.f32 %v853, %v895
        %v897 = vpop.f32.mrb[0].mxu0
        %v898 = vadd.f32 %v855, %v897
        %v899 = vpop.f32.mrb[0].mxu0
        %v900 = vadd.f32 %v857, %v899
        %901 = vdwg.mxu0
        %902 = vmatprep.subr.bf16.mxu0 %v671
        %903 = vmatpush1.bf16.msra.mxu0 %v670
        %904 = vmatprep.subr.bf16.mxu0 %v675
        %905 = vmatpush1.bf16.msra.mxu0 %v674
        %906 = vmatprep.subr.bf16.mxu0 %v679
        %907 = vmatpush1.bf16.msra.mxu0 %v678
        %908 = vmatprep.subr.bf16.mxu0 %v683
        %909 = vmatpush1.bf16.msra.mxu0 %v682
        %910 = vmatprep.subr.bf16.mxu0 %v687
        %911 = vmatpush1.bf16.msra.mxu0 %v686
        %912 = vmatprep.subr.bf16.mxu0 %v691
        %913 = vmatpush1.bf16.msra.mxu0 %v690
        %914 = vmatprep.subr.bf16.mxu0 %v695
        %915 = vmatpush1.bf16.msra.mxu0 %v694
        %916 = vmatprep.subr.bf16.mxu0 %v699
        %917 = vmatpush1.bf16.msra.mxu0 %v698
        %918 = vmatprep.subr.bf16.mxu0 %v703
        %919 = vmatpush1.bf16.msra.mxu0 %v702
        %920 = vmatprep.subr.bf16.mxu0 %v707
        %921 = vmatpush1.bf16.msra.mxu0 %v706
        %922 = vmatprep.subr.bf16.mxu0 %v711
        %923 = vmatpush1.bf16.msra.mxu0 %v710
        %924 = vmatprep.subr.bf16.mxu0 %v715
        %925 = vmatpush1.bf16.msra.mxu0 %v714
        %926 = vmatprep.subr.bf16.mxu0 %v719
        %927 = vmatpush1.bf16.msra.mxu0 %v718
        %928 = vmatprep.subr.bf16.mxu0 %v723
        %929 = vmatpush1.bf16.msra.mxu0 %v722
        %930 = vmatprep.subr.bf16.mxu0 %v727
        %931 = vmatpush1.bf16.msra.mxu0 %v726
        %932 = vmatprep.subr.bf16.mxu0 %v731
        %933 = vmatpush1.bf16.msra.mxu0 %v730
        %934 = vmatprep.mubr.bf16.mxu0 %v448
        %935 = vmatmul.mubr.bf16.gmra.mrb[0].mxu0 %v447
        %v936 = vpop.f32.mrb[0].mxu0
        %v937 = vadd.f32 0.0, %v936
        %v938 = vpop.f32.mrb[0].mxu0
        %v939 = vadd.f32 0.0, %v938
        %v940 = vpop.f32.mrb[0].mxu0
        %v941 = vadd.f32 0.0, %v940
        %v942 = vpop.f32.mrb[0].mxu0
        %v943 = vadd.f32 0.0, %v942
        %944 = vdwg.mxu0
        %945 = vmatprep.subr.bf16.mxu0 %v735
        %946 = vmatpush1.bf16.msra.mxu0 %v734
        %947 = vmatprep.subr.bf16.mxu0 %v739
        %948 = vmatpush1.bf16.msra.mxu0 %v738
        %949 = vmatprep.subr.bf16.mxu0 0
        %950 = vmatpush1.bf16.msra.mxu0 0
        %951 = vmatprep.subr.bf16.mxu0 0
        %952 = vmatpush1.bf16.msra.mxu0 0
        %953 = vmatprep.subr.bf16.mxu0 0
        %954 = vmatpush1.bf16.msra.mxu0 0
        %955 = vmatprep.subr.bf16.mxu0 0
        %956 = vmatpush1.bf16.msra.mxu0 0
        %957 = vmatprep.subr.bf16.mxu0 0
        %958 = vmatpush1.bf16.msra.mxu0 0
        %959 = vmatprep.subr.bf16.mxu0 0
        %960 = vmatpush1.bf16.msra.mxu0 0
        %961 = vmatprep.subr.bf16.mxu0 0
        %962 = vmatpush1.bf16.msra.mxu0 0
        %963 = vmatprep.subr.bf16.mxu0 0
        %964 = vmatpush1.bf16.msra.mxu0 0
        %965 = vmatprep.subr.bf16.mxu0 0
        %966 = vmatpush1.bf16.msra.mxu0 0
        %967 = vmatprep.subr.bf16.mxu0 0
        %968 = vmatpush1.bf16.msra.mxu0 0
        %969 = vmatprep.subr.bf16.mxu0 0
        %970 = vmatpush1.bf16.msra.mxu0 0
        %971 = vmatprep.subr.bf16.mxu0 0
        %972 = vmatpush1.bf16.msra.mxu0 0
        %973 = vmatprep.subr.bf16.mxu0 0
        %974 = vmatpush1.bf16.msra.mxu0 0
        %975 = vmatprep.subr.bf16.mxu0 0
        %976 = vmatpush1.bf16.msra.mxu0 0
        %977 = vmatprep.mubr.bf16.mxu0 0
        %978 = vmatmul.mubr.bf16.gmra.mrb[0].mxu0 %v814
        %v979 = vpop.f32.mrb[0].mxu0
        %v980 = vadd.f32 %v937, %v979
        %v981 = vpop.f32.mrb[0].mxu0
        %v982 = vadd.f32 %v939, %v981
        %v983 = vpop.f32.mrb[0].mxu0
        %v984 = vadd.f32 %v941, %v983
        %v985 = vpop.f32.mrb[0].mxu0
        %v986 = vadd.f32 %v943, %v985
        %987 = vdwg.mxu0
        %988 = vst [vmem:[%s344] sm:$0xff] %v894
        %989 = vst [vmem:[%s344 + $0x8] sm:$0xff] %v896
        %990 = vst [vmem:[%s344 + $0x10] sm:$0xff] %v980
        %991 = vst [vmem:[%s344 + $0x18] sm:$0xff] %v982
        %992 = vst [vmem:[%s344 + $0x20] sm:$0xff] %v898
        %993 = vst [vmem:[%s344 + $0x28] sm:$0xff] %v900
        %994 = vst [vmem:[%s344 + $0x30] sm:$0xff] %v984
        %995 = vst [vmem:[%s344 + $0x38] sm:$0xff] %v986
        %v996 = vld [vmem:[%s3] sm:$0xff]
        %v997 = vld [vmem:[%s3 + $0x8] sm:$0xff]
        %v998 = vadd.f32 %v894, %v896
        %v999 = vadd.f32 %v998, %v980
        %v1000 = vadd.f32 %v999, %v982
        %1001 = vadd.xlane.f32.xlu0 %v1000
        %v1002 = vpop.xlane.xlu0 %1001
        %v1003 = vadd.f32 %v898, %v900
        %v1004 = vadd.f32 %v1003, %v984
        %v1005 = vadd.f32 %v1004, %v986
        %1006 = vadd.xlane.f32.xlu0 %v1005
        %v1007 = vpop.xlane.xlu0 %1006
        %v1008 = vadd.f32 %v996, %v1002
        %v1009 = vadd.f32 %v997, %v1007
        %vm1010 = vcmask 7168
        %1011 = vst.msk [vmem:[%s3] sm:$0xff] %vm1010, %v1008
        %1012 = vst.msk [vmem:[%s3 + $0x8] sm:$0xff] %vm1010, %v1009
        %v1013 = vld [vmem:[%s4] sm:$0xff]
        %v1014 = vld [vmem:[%s4 + $0x8] sm:$0xff]
        %v1015 = vmul.f32 %v894, %v894
        %v1016 = vmul.f32 %v896, %v896
        %v1017 = vmul.f32 %v980, %v980
        %v1018 = vmul.f32 %v982, %v982
        %v1019 = vmul.f32 %v898, %v898
        %v1020 = vmul.f32 %v900, %v900
        %v1021 = vmul.f32 %v984, %v984
        %v1022 = vmul.f32 %v986, %v986
        %v1023 = vadd.f32 %v1015, %v1016
        %v1024 = vadd.f32 %v1023, %v1017
        %v1025 = vadd.f32 %v1024, %v1018
        %1026 = vadd.xlane.f32.xlu0 %v1025
        %v1027 = vpop.xlane.xlu0 %1026
        %v1028 = vadd.f32 %v1019, %v1020
        %v1029 = vadd.f32 %v1028, %v1021
        %v1030 = vadd.f32 %v1029, %v1022
        %1031 = vadd.xlane.f32.xlu0 %v1030
        %v1032 = vpop.xlane.xlu0 %1031
        %v1033 = vadd.f32 %v1013, %v1027
        %v1034 = vadd.f32 %v1014, %v1032
        %1035 = vst.msk [vmem:[%s4] sm:$0xff] %vm1010, %v1033
        %1036 = vst.msk [vmem:[%s4 + $0x8] sm:$0xff] %vm1010, %v1034
        %s1037 = sand.u32 %s71, 1
        %s1038 = sand.u32 %s71, 1
        %s1039 = smul.addr %s1038, 64
        %s1040 = scalar_lea.vmem [#allocation3], %s1039
        // Predicated region
        $region56: #{dn_autoencoder_forward.35} parent=46 // pred_check
          %p1041 = pneg %p81
        $region57: #{dn_autoencoder_forward.35} parent=46 // pred_check_branch
          %1043 = sbr.rel (%p1041) target = $region59
        $region58: #{dn_autoencoder_forward.35} parent=46 // pred_region
          %s1044 = smul.u32 4, %s16
          %s1045 = smul.addr %s1044, 8
          %s1046 = scalar_lea.vmem %s2, %s1045
          // Predicated region
          $region60: #{dn_autoencoder_forward.35} parent=58 // pred_check
            _
          $region61: #{dn_autoencoder_forward.35} parent=58 // pred_check_branch
            %1048 = sbr.rel (0) target = $region63
          $region62: #{dn_autoencoder_forward.35} parent=58 // pred_region
            // Predicated region
            $region64: #{dn_autoencoder_forward.35} parent=62 // pred_check
              _
            $region65: #{dn_autoencoder_forward.35} parent=62 // pred_check_branch
              %1050 = sbr.rel (0) target = $region67
            $region66: #{dn_autoencoder_forward.35} parent=62 // pred_region
              loop: start=0, step=1, limit=1
              $region68: #{dn_autoencoder_forward.35} parent=66 // loop_pre_header
                _
              $region69: #{dn_autoencoder_forward.35} parent=66 // loop_header
                %s1052 = sphi 0, %s1056
                %p1053 = scmp.ge.s32.totalorder %s1052, 1
                %s1057 = sphi %s1040, %s1040
                %s1058 = sphi %s1046, %s1046
              $region70: #{dn_autoencoder_forward.35} parent=66 // loop_header_branch
                %1055 = sbr.rel (%p1053) target = $region74
              $region71: #{dn_autoencoder_forward.35} parent=66 // loop_body
                %v1059 = vld [vmem:[%s1057] sm:$0xff]
                %1060 = vst [vmem:[%s1058] sm:$0xff] %v1059
                %v1061 = vld [vmem:[%s1057 + $0x8] sm:$0xff]
                %1062 = vst [vmem:[%s1058 + $0x8] sm:$0xff] %v1061
                %v1063 = vld [vmem:[%s1057 + $0x10] sm:$0xff]
                %1064 = vst [vmem:[%s1058 + $0x10] sm:$0xff] %v1063
                %v1065 = vld [vmem:[%s1057 + $0x18] sm:$0xff]
                %1066 = vst [vmem:[%s1058 + $0x18] sm:$0xff] %v1065
                %v1067 = vld [vmem:[%s1057 + $0x20] sm:$0xff]
                %1068 = vst [vmem:[%s1058 + $0x80] sm:$0xff] %v1067
                %v1069 = vld [vmem:[%s1057 + $0x28] sm:$0xff]
                %1070 = vst [vmem:[%s1058 + $0x88] sm:$0xff] %v1069
                %v1071 = vld [vmem:[%s1057 + $0x30] sm:$0xff]
                %1072 = vst [vmem:[%s1058 + $0x90] sm:$0xff] %v1071
                %v1073 = vld [vmem:[%s1057 + $0x38] sm:$0xff]
                %1074 = vst [vmem:[%s1058 + $0x98] sm:$0xff] %v1073
              $region72: #{dn_autoencoder_forward.35} parent=66 // loop_footer
                %s1056 = sadd.s32 1, %s1052
              $region73: #{dn_autoencoder_forward.35} parent=66 // loop_footer_branch
                %1051 = sbr.rel target = $region69
              $region74: #{dn_autoencoder_forward.35} parent=66 // loop_exit
                _
            $region67: #{dn_autoencoder_forward.35} parent=62 // pred_fallthru
              _
            // Predicated region
            $region75: #{dn_autoencoder_forward.35} parent=62 // pred_check
              _
            $region76: #{dn_autoencoder_forward.35} parent=62 // pred_check_branch
              %1076 = sbr.rel target = $region78
            $region77: #{dn_autoencoder_forward.35} parent=62 // pred_region
              _
            $region78: #{dn_autoencoder_forward.35} parent=62 // pred_fallthru
              _
          $region63: #{dn_autoencoder_forward.35} parent=58 // pred_fallthru
            _
          %1077 = vnop
        $region59: #{dn_autoencoder_forward.35} parent=46 // pred_fallthru
          _
        // Predicated region
        $region79: #{dn_autoencoder_forward.35} parent=46 // pred_check
          %p1078 = pneg %p102
        $region80: #{dn_autoencoder_forward.35} parent=46 // pred_check_branch
          %1080 = sbr.rel (%p1078) target = $region82
        $region81: #{dn_autoencoder_forward.35} parent=46 // pred_region
          _
        $region82: #{dn_autoencoder_forward.35} parent=46 // pred_fallthru
          _
        // Predicated region
        $region83: #{dn_autoencoder_forward.35} parent=46 // pred_check
          %p1081 = pneg %p123
        $region84: #{dn_autoencoder_forward.35} parent=46 // pred_check_branch
          %1083 = sbr.rel (%p1081) target = $region86
        $region85: #{dn_autoencoder_forward.35} parent=46 // pred_region
          _
        $region86: #{dn_autoencoder_forward.35} parent=46 // pred_fallthru
          _
        // Predicated region
        $region87: #{dn_autoencoder_forward.35} parent=46 // pred_check
          %p1084 = pneg %p102
        $region88: #{dn_autoencoder_forward.35} parent=46 // pred_check_branch
          %1086 = sbr.rel (%p1084) target = $region90
        $region89: #{dn_autoencoder_forward.35} parent=46 // pred_region
          _
        $region90: #{dn_autoencoder_forward.35} parent=46 // pred_fallthru
          _
        // Predicated region
        $region91: #{dn_autoencoder_forward.35} parent=46 // pred_check
          %p1087 = pneg %p123
        $region92: #{dn_autoencoder_forward.35} parent=46 // pred_check_branch
          %1089 = sbr.rel (%p1087) target = $region94
        $region93: #{dn_autoencoder_forward.35} parent=46 // pred_region
          _
        $region94: #{dn_autoencoder_forward.35} parent=46 // pred_fallthru
          _
      $region47: #{dn_autoencoder_forward.35} parent=5 // pred_fallthru
        _
      %p1090 = scmp.le.s32.totalorder 2, %s11
      // Predicated region
      $region95: #{dn_autoencoder_forward.35} parent=5 // pred_check
        %p1091 = pneg %p1090
      $region96: #{dn_autoencoder_forward.35} parent=5 // pred_check_branch
        %1093 = sbr.rel (%p1091) target = $region98
      $region97: #{dn_autoencoder_forward.35} parent=5 // pred_region
        %s1094 = ssub.s32 %s11, 2
        // Predicated region
        $region99: #{dn_autoencoder_forward.35} parent=97 // pred_check
          %p1095 = pneg %p87
        $region100: #{dn_autoencoder_forward.35} parent=97 // pred_check_branch
          %1097 = sbr.rel (%p1095) target = $region102
        $region101: #{dn_autoencoder_forward.35} parent=97 // pred_region
          %s1098 = sand.u32 %s72, 1
          %s1099 = sand.u32 %s72, 1
          %s1100 = smul.addr %s1099, 64
          %s1101 = scalar_lea.vmem [#allocation3], %s1100
        $region102: #{dn_autoencoder_forward.35} parent=97 // pred_fallthru
          _
      $region98: #{dn_autoencoder_forward.35} parent=5 // pred_fallthru
        _
    $region6: #{dn_autoencoder_forward.35} parent=1 // loop_footer
      %s15 = sadd.s32 1, %s11
    $region7: #{dn_autoencoder_forward.35} parent=1 // loop_footer_branch
      %10 = sbr.rel target = $region3
    $region8: #{dn_autoencoder_forward.35} parent=1 // loop_exit
      _

// kernel: dn_autoencoder_forward.36
$region0: #{dn_autoencoder_forward.36}
  #allocation0 [shape = 'u32[]', space=smem, size = 0x4, offset = 0x4, fixed_abs, tag = 'smem constant byte address 0x4 - core index']
  #allocation1 [shape = 'u32[144,128]{1,0:T(1,128)}', space=vmem, size = 0x12000, scoped, tag = 'internal scratch']
  %s0 = inlined_call_operand.vmem [shape: f32[16,2048], index: 0, kind: input, shape index: {}]
  %s1 = inlined_call_operand.vmem [shape: f32[16,1], index: 1, kind: input, shape index: {}]
  %s2 = inlined_call_operand.vmem [shape: f32[16,1], index: 2, kind: input, shape index: {}]
  %s3 = inlined_call_operand.vmem [shape: f32[16,2048], index: 3, kind: output, shape index: {}]
  %s4 = sld [smem:[#allocation0]]
  $region87: #{dn_autoencoder_forward.36} parent=0
    _
  %s6 = ssub.s32 1, %s4
  %s7 = scalar_select 0, %s6, %s4
  $region1: #{dn_autoencoder_forward.36} parent=0
    #allocation2 [shape = 'u8[65536]{0}', space=vmem, size = 0x10000, scoped, tag = 'input window, operand 0']
    #allocation3 [shape = 'u8[65536]{0}', space=vmem, size = 0x10000, scoped, tag = 'output window, operand 0']
    loop: start=0, step=1, limit=6
    $region2: #{dn_autoencoder_forward.36} parent=1 // loop_pre_header
      _
    $region3: #{dn_autoencoder_forward.36} parent=1 // loop_header
      %s9 = sphi 0, %s13
      %p10 = scmp.ge.s32.totalorder %s9, 6
      %s19 = sphi 0, %s21
      %s22 = sphi 0, %s19
      %s23 = sphi 0, %s22
      %s39 = sphi 0, %s23
      %s43 = sphi 0, %s43
      %s45 = sphi 0, %s43
      %s46 = sphi 0, %s45
      %s60 = sphi 0, %s46
      %s64 = sphi 0, %s64
      %s66 = sphi 0, %s64
      %s67 = sphi 0, %s66
      %s81 = sphi 0, %s67
      %s87 = sphi 0, %s89
      %s90 = sphi 0, %s87
      %s91 = sphi 0, %s90
      %s107 = sphi 0, %s91
    $region4: #{dn_autoencoder_forward.36} parent=1 // loop_header_branch
      %12 = sbr.rel (%p10) target = $region8
    $region5: #{dn_autoencoder_forward.36} parent=1 // loop_body
      %s14 = ssub.s32 %s9, 1
      %s15 = ssub.s32 %s9, 2
      %s16 = sadd.s32 %s9, 1
      %s17 = ssub.s32 %s9, %s16
      %p18 = scmp.eq.s32.totalorder %s17, 0
      %s20 = sadd.s32 %s19, 1
      %s21 = scalar_select %p18, %s19, %s20
      %p24 = pneg %p18
      %p25 = scmp.eq.s32.totalorder %s9, 3
      %p26 = por %p24, %p25
      %p27 = scmp.ne.s32.totalorder %s19, %s22
      %p28 = scmp.eq.s32.totalorder %s9, 0
      %p29 = por %p27, %p28
      %p30 = scmp.ne.s32.totalorder %s19, %s22
      %p31 = scmp.eq.s32.totalorder %s14, 3
      %p32 = por %p30, %p31
      %p33 = scmp.ne.s32.totalorder %s22, %s23
      %p34 = scmp.eq.s32.totalorder %s14, 0
      %p35 = por %p33, %p34
      %p36 = scmp.ne.s32.totalorder %s22, %s23
      %p37 = scmp.eq.s32.totalorder %s15, 3
      %p38 = por %p36, %p37
      %p40 = scmp.ne.s32.totalorder %s23, %s39
      %p41 = scmp.eq.s32.totalorder %s15, 0
      %p42 = por %p40, %p41
      %s44 = sadd.s32 %s43, 1
      %p47 = scmp.eq.s32.totalorder %s9, 3
      %p48 = scmp.ne.s32.totalorder %s43, %s45
      %p49 = scmp.eq.s32.totalorder %s9, 0
      %p50 = por %p48, %p49
      %p51 = scmp.ne.s32.totalorder %s43, %s45
      %p52 = scmp.eq.s32.totalorder %s14, 3
      %p53 = por %p51, %p52
      %p54 = scmp.ne.s32.totalorder %s45, %s46
      %p55 = scmp.eq.s32.totalorder %s14, 0
      %p56 = por %p54, %p55
      %p57 = scmp.ne.s32.totalorder %s45, %s46
      %p58 = scmp.eq.s32.totalorder %s15, 3
      %p59 = por %p57, %p58
      %p61 = scmp.ne.s32.totalorder %s46, %s60
      %p62 = scmp.eq.s32.totalorder %s15, 0
      %p63 = por %p61, %p62
      %s65 = sadd.s32 %s64, 1
      %p68 = scmp.eq.s32.totalorder %s9, 3
      %p69 = scmp.ne.s32.totalorder %s64, %s66
      %p70 = scmp.eq.s32.totalorder %s9, 0
      %p71 = por %p69, %p70
      %p72 = scmp.ne.s32.totalorder %s64, %s66
      %p73 = scmp.eq.s32.totalorder %s14, 3
      %p74 = por %p72, %p73
      %p75 = scmp.ne.s32.totalorder %s66, %s67
      %p76 = scmp.eq.s32.totalorder %s14, 0
      %p77 = por %p75, %p76
      %p78 = scmp.ne.s32.totalorder %s66, %s67
      %p79 = scmp.eq.s32.totalorder %s15, 3
      %p80 = por %p78, %p79
      %p82 = scmp.ne.s32.totalorder %s67, %s81
      %p83 = scmp.eq.s32.totalorder %s15, 0
      %p84 = por %p82, %p83
      %s85 = ssub.s32 %s9, %s16
      %p86 = scmp.eq.s32.totalorder %s85, 0
      %s88 = sadd.s32 %s87, 1
      %s89 = scalar_select %p86, %s87, %s88
      %p92 = pneg %p86
      %p93 = scmp.eq.s32.totalorder %s9, 3
      %p94 = por %p92, %p93
      %p95 = scmp.ne.s32.totalorder %s87, %s90
      %p96 = scmp.eq.s32.totalorder %s9, 0
      %p97 = por %p95, %p96
      %p98 = scmp.ne.s32.totalorder %s87, %s90
      %p99 = scmp.eq.s32.totalorder %s14, 3
      %p100 = por %p98, %p99
      %p101 = scmp.ne.s32.totalorder %s90, %s91
      %p102 = scmp.eq.s32.totalorder %s14, 0
      %p103 = por %p101, %p102
      %p104 = scmp.ne.s32.totalorder %s90, %s91
      %p105 = scmp.eq.s32.totalorder %s15, 3
      %p106 = por %p104, %p105
      %p108 = scmp.ne.s32.totalorder %s91, %s107
      %p109 = scmp.eq.s32.totalorder %s15, 0
      %p110 = por %p108, %p109
      %p111 = scmp.le.s32.totalorder 1, %s9
      %p112 = scmp.lt.s32.totalorder %s9, 5
      %p113 = pnand %p111, %p112
      %p114 = pneg %p113
      // Predicated region
      $region9: #{dn_autoencoder_forward.36} parent=5 // pred_check
        _
      $region10: #{dn_autoencoder_forward.36} parent=5 // pred_check_branch
        %116 = sbr.rel (%p113) target = $region12
      $region11: #{dn_autoencoder_forward.36} parent=5 // pred_region
        %s117 = ssub.s32 %s9, 1
        // Predicated region
        $region13: #{dn_autoencoder_forward.36} parent=11 // pred_check
          %p118 = pneg %p56
        $region14: #{dn_autoencoder_forward.36} parent=11 // pred_check_branch
          %120 = sbr.rel (%p118) target = $region16
        $region15: #{dn_autoencoder_forward.36} parent=11 // pred_region
          _
        $region16: #{dn_autoencoder_forward.36} parent=11 // pred_fallthru
          _
        // Predicated region
        $region17: #{dn_autoencoder_forward.36} parent=11 // pred_check
          %p121 = pneg %p77
        $region18: #{dn_autoencoder_forward.36} parent=11 // pred_check_branch
          %123 = sbr.rel (%p121) target = $region20
        $region19: #{dn_autoencoder_forward.36} parent=11 // pred_region
          _
        $region20: #{dn_autoencoder_forward.36} parent=11 // pred_fallthru
          _
      $region12: #{dn_autoencoder_forward.36} parent=5 // pred_fallthru
        _
      %p124 = scmp.lt.s32.totalorder %s9, 4
      // Predicated region
      $region21: #{dn_autoencoder_forward.36} parent=5 // pred_check
        %p125 = pneg %p124
      $region22: #{dn_autoencoder_forward.36} parent=5 // pred_check_branch
        %127 = sbr.rel (%p125) target = $region24
      $region23: #{dn_autoencoder_forward.36} parent=5 // pred_region
        // Predicated region
        $region25: #{dn_autoencoder_forward.36} parent=23 // pred_check
          %p128 = pneg %p29
        $region26: #{dn_autoencoder_forward.36} parent=23 // pred_check_branch
          %130 = sbr.rel (%p128) target = $region28
        $region27: #{dn_autoencoder_forward.36} parent=23 // pred_region
          %s131 = sand.u32 %s19, 1
          %s132 = sand.u32 %s19, 1
          %s133 = smul.addr %s132, 64
          %s134 = scalar_lea.vmem [#allocation2], %s133
          %s135 = smul.u32 4, %s9
          %s136 = smul.addr %s135, 8
          %s137 = scalar_lea.vmem %s0, %s136
          // Predicated region
          $region29: #{dn_autoencoder_forward.36} parent=27 // pred_check
            _
          $region30: #{dn_autoencoder_forward.36} parent=27 // pred_check_branch
            %139 = sbr.rel (0) target = $region32
          $region31: #{dn_autoencoder_forward.36} parent=27 // pred_region
            // Predicated region
            $region33: #{dn_autoencoder_forward.36} parent=31 // pred_check
              _
            $region34: #{dn_autoencoder_forward.36} parent=31 // pred_check_branch
              %141 = sbr.rel (0) target = $region36
            $region35: #{dn_autoencoder_forward.36} parent=31 // pred_region
              loop: start=0, step=1, limit=1
              $region37: #{dn_autoencoder_forward.36} parent=35 // loop_pre_header
                _
              $region38: #{dn_autoencoder_forward.36} parent=35 // loop_header
                %s143 = sphi 0, %s147
                %p144 = scmp.ge.s32.totalorder %s143, 1
                %s148 = sphi %s137, %s137
                %s149 = sphi %s134, %s134
              $region39: #{dn_autoencoder_forward.36} parent=35 // loop_header_branch
                %146 = sbr.rel (%p144) target = $region43
              $region40: #{dn_autoencoder_forward.36} parent=35 // loop_body
                %v150 = vld [vmem:[%s148] sm:$0xff]
                %151 = vst [vmem:[%s149] sm:$0xff] %v150
                %v152 = vld [vmem:[%s148 + $0x8] sm:$0xff]
                %153 = vst [vmem:[%s149 + $0x8] sm:$0xff] %v152
                %v154 = vld [vmem:[%s148 + $0x10] sm:$0xff]
                %155 = vst [vmem:[%s149 + $0x10] sm:$0xff] %v154
                %v156 = vld [vmem:[%s148 + $0x18] sm:$0xff]
                %157 = vst [vmem:[%s149 + $0x18] sm:$0xff] %v156
                %v158 = vld [vmem:[%s148 + $0x80] sm:$0xff]
                %159 = vst [vmem:[%s149 + $0x20] sm:$0xff] %v158
                %v160 = vld [vmem:[%s148 + $0x88] sm:$0xff]
                %161 = vst [vmem:[%s149 + $0x28] sm:$0xff] %v160
                %v162 = vld [vmem:[%s148 + $0x90] sm:$0xff]
                %163 = vst [vmem:[%s149 + $0x30] sm:$0xff] %v162
                %v164 = vld [vmem:[%s148 + $0x98] sm:$0xff]
                %165 = vst [vmem:[%s149 + $0x38] sm:$0xff] %v164
              $region41: #{dn_autoencoder_forward.36} parent=35 // loop_footer
                %s147 = sadd.s32 1, %s143
              $region42: #{dn_autoencoder_forward.36} parent=35 // loop_footer_branch
                %142 = sbr.rel target = $region38
              $region43: #{dn_autoencoder_forward.36} parent=35 // loop_exit
                _
            $region36: #{dn_autoencoder_forward.36} parent=31 // pred_fallthru
              _
            // Predicated region
            $region44: #{dn_autoencoder_forward.36} parent=31 // pred_check
              _
            $region45: #{dn_autoencoder_forward.36} parent=31 // pred_check_branch
              %167 = sbr.rel target = $region47
            $region46: #{dn_autoencoder_forward.36} parent=31 // pred_region
              _
            $region47: #{dn_autoencoder_forward.36} parent=31 // pred_fallthru
              _
          $region32: #{dn_autoencoder_forward.36} parent=27 // pred_fallthru
            _
          %168 = vnop
        $region28: #{dn_autoencoder_forward.36} parent=23 // pred_fallthru
          _
      $region24: #{dn_autoencoder_forward.36} parent=5 // pred_fallthru
        _
      %p169 = scmp.le.s32.totalorder 1, %s9
      %p170 = scmp.lt.s32.totalorder %s9, 5
      %p171 = pnand %p169, %p170
      %p172 = pneg %p171
      // Predicated region
      $region48: #{dn_autoencoder_forward.36} parent=5 // pred_check
        _
      $region49: #{dn_autoencoder_forward.36} parent=5 // pred_check_branch
        %174 = sbr.rel (%p171) target = $region51
      $region50: #{dn_autoencoder_forward.36} parent=5 // pred_region
        %s175 = ssub.s32 %s9, 1
        %s176 = sand.u32 %s22, 1
        %s177 = sand.u32 %s22, 1
        %s178 = smul.addr %s177, 64
        %s179 = scalar_lea.vmem [#allocation2], %s178
        // Predicated region
        $region52: #{dn_autoencoder_forward.36} parent=50 // pred_check
          %p180 = pneg %p35
        $region53: #{dn_autoencoder_forward.36} parent=50 // pred_check_branch
          %182 = sbr.rel (%p180) target = $region55
        $region54: #{dn_autoencoder_forward.36} parent=50 // pred_region
          _
        $region55: #{dn_autoencoder_forward.36} parent=50 // pred_fallthru
          _
        %s183 = sand.u32 %s22, 1
        %s184 = sand.u32 %s22, 1
        %s185 = smul.addr %s184, 64
        %s186 = scalar_lea.vmem [#allocation2], %s185
        %p187 = pneg %p35
        %p188 = pneg %p32
        %p189 = pneg %p56
        %p190 = pneg %p53
        %p191 = pneg %p77
        %p192 = pneg %p74
        %p193 = pneg %p103
        %p194 = pneg %p100
        %s195 = sand.u32 %s90, 1
        %s196 = sand.u32 %s90, 1
        %s197 = smul.addr %s196, 64
        %s198 = scalar_lea.vmem [#allocation3], %s197
        %s199 = smul.u32 4, %s14
        %s200 = smul.u32 4, %s14
        %v201 = vld [vmem:[%s179] sm:$0xff]
        %v202 = vld [vmem:[%s179 + $0x8] sm:$0xff]
        %v203 = vld [vmem:[%s179 + $0x10] sm:$0xff]
        %v204 = vld [vmem:[%s179 + $0x18] sm:$0xff]
        %v205 = vld [vmem:[%s179 + $0x20] sm:$0xff]
        %v206 = vld [vmem:[%s179 + $0x28] sm:$0xff]
        %v207 = vld [vmem:[%s179 + $0x30] sm:$0xff]
        %v208 = vld [vmem:[%s179 + $0x38] sm:$0xff]
        %v209 = vld [vmem:[%s1] sm:$0xff]
        %v210 = vld [vmem:[%s1 + $0x8] sm:$0xff]
        %212 = vset.pattern.permute.xlu0 0
        %213 = vperm.xlu0 %212, %v209
        %v214 = vpop.permute.xlu0 %213
        %217 = vset.pattern.permute.xlu0 0
        %218 = vperm.xlu0 %217, %v210
        %v219 = vpop.permute.xlu0 %218
        %v221 = vmul.f32 %v201, %v214
        %v222 = vmul.f32 %v202, %v214
        %v223 = vmul.f32 %v203, %v214
        %v224 = vmul.f32 %v204, %v214
        %v225 = vmul.f32 %v205, %v219
        %v226 = vmul.f32 %v206, %v219
        %v227 = vmul.f32 %v207, %v219
        %v228 = vmul.f32 %v208, %v219
        %v229 = vld [vmem:[%s2] sm:$0xff]
        %v230 = vld [vmem:[%s2 + $0x8] sm:$0xff]
        %232 = vset.pattern.permute.xlu0 0
        %233 = vperm.xlu0 %232, %v229
        %v234 = vpop.permute.xlu0 %233
        %237 = vset.pattern.permute.xlu0 0
        %238 = vperm.xlu0 %237, %v230
        %v239 = vpop.permute.xlu0 %238
        %v241 = vadd.f32 %v221, %v234
        %v242 = vadd.f32 %v222, %v234
        %v243 = vadd.f32 %v223, %v234
        %v244 = vadd.f32 %v224, %v234
        %v245 = vadd.f32 %v225, %v239
        %v246 = vadd.f32 %v226, %v239
        %v247 = vadd.f32 %v227, %v239
        %v248 = vadd.f32 %v228, %v239
        %vm249 = vcmp.ge.f32.partialorder %v241, 0.0
        %vm250 = vcmp.ge.f32.partialorder %v242, 0.0
        %vm251 = vcmp.ge.f32.partialorder %v243, 0.0
        %vm252 = vcmp.ge.f32.partialorder %v244, 0.0
        %vm253 = vcmp.ge.f32.partialorder %v245, 0.0
        %vm254 = vcmp.ge.f32.partialorder %v246, 0.0
        %vm255 = vcmp.ge.f32.partialorder %v247, 0.0
        %vm256 = vcmp.ge.f32.partialorder %v248, 0.0
        %v257 = vmul.f32 %v241, 0.2
        %v258 = vmul.f32 %v242, 0.2
        %v259 = vmul.f32 %v243, 0.2
        %v260 = vmul.f32 %v244, 0.2
        %v261 = vmul.f32 %v245, 0.2
        %v262 = vmul.f32 %v246, 0.2
        %v263 = vmul.f32 %v247, 0.2
        %v264 = vmul.f32 %v248, 0.2
        %v265 = vsel %vm249, %v241, %v257
        %v266 = vsel %vm250, %v242, %v258
        %v267 = vsel %vm251, %v243, %v259
        %v268 = vsel %vm252, %v244, %v260
        %v269 = vsel %vm253, %v245, %v261
        %v270 = vsel %vm254, %v246, %v262
        %v271 = vsel %vm255, %v247, %v263
        %v272 = vsel %vm256, %v248, %v264
        %273 = vst [vmem:[%s198] sm:$0xff] %v265
        %274 = vst [vmem:[%s198 + $0x8] sm:$0xff] %v266
        %275 = vst [vmem:[%s198 + $0x10] sm:$0xff] %v267
        %276 = vst [vmem:[%s198 + $0x18] sm:$0xff] %v268
        %277 = vst [vmem:[%s198 + $0x20] sm:$0xff] %v269
        %278 = vst [vmem:[%s198 + $0x28] sm:$0xff] %v270
        %279 = vst [vmem:[%s198 + $0x30] sm:$0xff] %v271
        %280 = vst [vmem:[%s198 + $0x38] sm:$0xff] %v272
        %s281 = sand.u32 %s90, 1
        %s282 = sand.u32 %s90, 1
        %s283 = smul.addr %s282, 64
        %s284 = scalar_lea.vmem [#allocation3], %s283
        // Predicated region
        $region56: #{dn_autoencoder_forward.36} parent=50 // pred_check
          %p285 = pneg %p100
        $region57: #{dn_autoencoder_forward.36} parent=50 // pred_check_branch
          %287 = sbr.rel (%p285) target = $region59
        $region58: #{dn_autoencoder_forward.36} parent=50 // pred_region
          %s288 = smul.u32 4, %s14
          %s289 = smul.addr %s288, 8
          %s290 = scalar_lea.vmem %s3, %s289
          // Predicated region
          $region60: #{dn_autoencoder_forward.36} parent=58 // pred_check
            _
          $region61: #{dn_autoencoder_forward.36} parent=58 // pred_check_branch
            %292 = sbr.rel (0) target = $region63
          $region62: #{dn_autoencoder_forward.36} parent=58 // pred_region
            // Predicated region
            $region64: #{dn_autoencoder_forward.36} parent=62 // pred_check
              _
            $region65: #{dn_autoencoder_forward.36} parent=62 // pred_check_branch
              %294 = sbr.rel (0) target = $region67
            $region66: #{dn_autoencoder_forward.36} parent=62 // pred_region
              loop: start=0, step=1, limit=1
              $region68: #{dn_autoencoder_forward.36} parent=66 // loop_pre_header
                _
              $region69: #{dn_autoencoder_forward.36} parent=66 // loop_header
                %s296 = sphi 0, %s300
                %p297 = scmp.ge.s32.totalorder %s296, 1
                %s301 = sphi %s284, %s284
                %s302 = sphi %s290, %s290
              $region70: #{dn_autoencoder_forward.36} parent=66 // loop_header_branch
                %299 = sbr.rel (%p297) target = $region74
              $region71: #{dn_autoencoder_forward.36} parent=66 // loop_body
                %v303 = vld [vmem:[%s301] sm:$0xff]
                %304 = vst [vmem:[%s302] sm:$0xff] %v303
                %v305 = vld [vmem:[%s301 + $0x8] sm:$0xff]
                %306 = vst [vmem:[%s302 + $0x8] sm:$0xff] %v305
                %v307 = vld [vmem:[%s301 + $0x10] sm:$0xff]
                %308 = vst [vmem:[%s302 + $0x10] sm:$0xff] %v307
                %v309 = vld [vmem:[%s301 + $0x18] sm:$0xff]
                %310 = vst [vmem:[%s302 + $0x18] sm:$0xff] %v309
                %v311 = vld [vmem:[%s301 + $0x20] sm:$0xff]
                %312 = vst [vmem:[%s302 + $0x80] sm:$0xff] %v311
                %v313 = vld [vmem:[%s301 + $0x28] sm:$0xff]
                %314 = vst [vmem:[%s302 + $0x88] sm:$0xff] %v313
                %v315 = vld [vmem:[%s301 + $0x30] sm:$0xff]
                %316 = vst [vmem:[%s302 + $0x90] sm:$0xff] %v315
                %v317 = vld [vmem:[%s301 + $0x38] sm:$0xff]
                %318 = vst [vmem:[%s302 + $0x98] sm:$0xff] %v317
              $region72: #{dn_autoencoder_forward.36} parent=66 // loop_footer
                %s300 = sadd.s32 1, %s296
              $region73: #{dn_autoencoder_forward.36} parent=66 // loop_footer_branch
                %295 = sbr.rel target = $region69
              $region74: #{dn_autoencoder_forward.36} parent=66 // loop_exit
                _
            $region67: #{dn_autoencoder_forward.36} parent=62 // pred_fallthru
              _
            // Predicated region
            $region75: #{dn_autoencoder_forward.36} parent=62 // pred_check
              _
            $region76: #{dn_autoencoder_forward.36} parent=62 // pred_check_branch
              %320 = sbr.rel target = $region78
            $region77: #{dn_autoencoder_forward.36} parent=62 // pred_region
              _
            $region78: #{dn_autoencoder_forward.36} parent=62 // pred_fallthru
              _
          $region63: #{dn_autoencoder_forward.36} parent=58 // pred_fallthru
            _
          %321 = vnop
        $region59: #{dn_autoencoder_forward.36} parent=50 // pred_fallthru
          _
      $region51: #{dn_autoencoder_forward.36} parent=5 // pred_fallthru
        _
      %p322 = scmp.le.s32.totalorder 2, %s9
      // Predicated region
      $region79: #{dn_autoencoder_forward.36} parent=5 // pred_check
        %p323 = pneg %p322
      $region80: #{dn_autoencoder_forward.36} parent=5 // pred_check_branch
        %325 = sbr.rel (%p323) target = $region82
      $region81: #{dn_autoencoder_forward.36} parent=5 // pred_region
        %s326 = ssub.s32 %s9, 2
        // Predicated region
        $region83: #{dn_autoencoder_forward.36} parent=81 // pred_check
          %p327 = pneg %p106
        $region84: #{dn_autoencoder_forward.36} parent=81 // pred_check_branch
          %329 = sbr.rel (%p327) target = $region86
        $region85: #{dn_autoencoder_forward.36} parent=81 // pred_region
          %s330 = sand.u32 %s91, 1
          %s331 = sand.u32 %s91, 1
          %s332 = smul.addr %s331, 64
          %s333 = scalar_lea.vmem [#allocation3], %s332
        $region86: #{dn_autoencoder_forward.36} parent=81 // pred_fallthru
          _
      $region82: #{dn_autoencoder_forward.36} parent=5 // pred_fallthru
        _
    $region6: #{dn_autoencoder_forward.36} parent=1 // loop_footer
      %s13 = sadd.s32 1, %s9
    $region7: #{dn_autoencoder_forward.36} parent=1 // loop_footer_branch
      %8 = sbr.rel target = $region3
    $region8: #{dn_autoencoder_forward.36} parent=1 // loop_exit
      _

// kernel: dn_autoencoder_forward.37
$region0: #{dn_autoencoder_forward.37}
  #allocation0 [shape = 'u32[]', space=smem, size = 0x4, offset = 0x4, fixed_abs, tag = 'smem constant byte address 0x4 - core index']
  #allocation1 [shape = 'u32[144,128]{1,0:T(1,128)}', space=vmem, size = 0x12000, scoped, tag = 'internal scratch']
  %s0 = inlined_call_operand.vmem [shape: bf16[1,144], index: 0, kind: input, shape index: {}]
  %s1 = inlined_call_operand.vmem [shape: bf16[144,2048], index: 1, kind: input, shape index: {}]
  %s2 = inlined_call_operand.vmem [shape: f32[1,2048], index: 2, kind: output, shape index: {0}]
  %s3 = inlined_call_operand.hbm [shape: f32[1,1], index: 3, kind: output, shape index: {1}]
  %s4 = inlined_call_operand.hbm [shape: f32[1,1], index: 4, kind: output, shape index: {2}]
  %5 = xla_tuple %s2, %s3, %s4
  %s6 = sld [smem:[#allocation0]]
  $region84: #{dn_autoencoder_forward.37} parent=0
    _
  %s8 = ssub.s32 1, %s6
  %s9 = scalar_select 0, %s8, %s6
  $region1: #{dn_autoencoder_forward.37} parent=0
    #allocation2 [shape = 'u8[294912]{0}', space=vmem, size = 0x48000, scoped, tag = 'input window, operand 1']
    #allocation3 [shape = 'u8[512]{0}', space=vmem, size = 0x400, scoped, tag = 'output window, operand 1, single buffered']
    #allocation4 [shape = 's32[2]{0}', space=sflag, size = 0x8, scoped, tag = 'scoped memory for dn_autoencoder_forward.37']
    #allocation5 [shape = 'u8[512]{0}', space=vmem, size = 0x400, scoped, tag = 'output window, operand 2, single buffered']
    #allocation6 [shape = 's32[1]{0}', space=sflag, size = 0x4, scoped, tag = 'scoped memory for dn_autoencoder_forward.37']
    %10 = vsyncpa [#allocation4], 0
    %11 = vsyncpa [#allocation6], 0
    loop: start=0, step=1, limit=6
    $region2: #{dn_autoencoder_forward.37} parent=1 // loop_pre_header
      _
    $region3: #{dn_autoencoder_forward.37} parent=1 // loop_header
      %s13 = sphi 0, %s17
      %p14 = scmp.ge.s32.totalorder %s13, 6
      %s21 = sphi 0, %s21
      %s23 = sphi 0, %s21
      %s24 = sphi 0, %s23
      %s38 = sphi 0, %s24
      %s44 = sphi 0, %s46
      %s47 = sphi 0, %s44
      %s48 = sphi 0, %s47
      %s64 = sphi 0, %s48
      %s70 = sphi 0, %s72
      %s73 = sphi 0, %s70
      %s74 = sphi 0, %s73
      %s90 = sphi 0, %s74
      %s94 = sphi 0, %s94
      %s96 = sphi 0, %s94
      %s97 = sphi 0, %s96
      %s111 = sphi 0, %s97
      %s115 = sphi 0, %s115
      %s117 = sphi 0, %s115
      %s118 = sphi 0, %s117
      %s132 = sphi 0, %s118
    $region4: #{dn_autoencoder_forward.37} parent=1 // loop_header_branch
      %16 = sbr.rel (%p14) target = $region8
    $region5: #{dn_autoencoder_forward.37} parent=1 // loop_body
      %s18 = ssub.s32 %s13, 1
      %s19 = ssub.s32 %s13, 2
      %s20 = sadd.s32 %s13, 1
      %s22 = sadd.s32 %s21, 1
      %p25 = scmp.eq.s32.totalorder %s13, 3
      %p26 = scmp.ne.s32.totalorder %s21, %s23
      %p27 = scmp.eq.s32.totalorder %s13, 0
      %p28 = por %p26, %p27
      %p29 = scmp.ne.s32.totalorder %s21, %s23
      %p30 = scmp.eq.s32.totalorder %s18, 3
      %p31 = por %p29, %p30
      %p32 = scmp.ne.s32.totalorder %s23, %s24
      %p33 = scmp.eq.s32.totalorder %s18, 0
      %p34 = por %p32, %p33
      %p35 = scmp.ne.s32.totalorder %s23, %s24
      %p36 = scmp.eq.s32.totalorder %s19, 3
      %p37 = por %p35, %p36
      %p39 = scmp.ne.s32.totalorder %s24, %s38
      %p40 = scmp.eq.s32.totalorder %s19, 0
      %p41 = por %p39, %p40
      %s42 = ssub.s32 %s13, %s20
      %p43 = scmp.eq.s32.totalorder %s42, 0
      %s45 = sadd.s32 %s44, 1
      %s46 = scalar_select %p43, %s44, %s45
      %p49 = pneg %p43
      %p50 = scmp.eq.s32.totalorder %s13, 3
      %p51 = por %p49, %p50
      %p52 = scmp.ne.s32.totalorder %s44, %s47
      %p53 = scmp.eq.s32.totalorder %s13, 0
      %p54 = por %p52, %p53
      %p55 = scmp.ne.s32.totalorder %s44, %s47
      %p56 = scmp.eq.s32.totalorder %s18, 3
      %p57 = por %p55, %p56
      %p58 = scmp.ne.s32.totalorder %s47, %s48
      %p59 = scmp.eq.s32.totalorder %s18, 0
      %p60 = por %p58, %p59
      %p61 = scmp.ne.s32.totalorder %s47, %s48
      %p62 = scmp.eq.s32.totalorder %s19, 3
      %p63 = por %p61, %p62
      %p65 = scmp.ne.s32.totalorder %s48, %s64
      %p66 = scmp.eq.s32.totalorder %s19, 0
      %p67 = por %p65, %p66
      %s68 = ssub.s32 %s13, %s20
      %p69 = scmp.eq.s32.totalorder %s68, 0
      %s71 = sadd.s32 %s70, 1
      %s72 = scalar_select %p69, %s70, %s71
      %p75 = pneg %p69
      %p76 = scmp.eq.s32.totalorder %s13, 3
      %p77 = por %p75, %p76
      %p78 = scmp.ne.s32.totalorder %s70, %s73
      %p79 = scmp.eq.s32.totalorder %s13, 0
      %p80 = por %p78, %p79
      %p81 = scmp.ne.s32.totalorder %s70, %s73
      %p82 = scmp.eq.s32.totalorder %s18, 3
      %p83 = por %p81, %p82
      %p84 = scmp.ne.s32.totalorder %s73, %s74
      %p85 = scmp.eq.s32.totalorder %s18, 0
      %p86 = por %p84, %p85
      %p87 = scmp.ne.s32.totalorder %s73, %s74
      %p88 = scmp.eq.s32.totalorder %s19, 3
      %p89 = por %p87, %p88
      %p91 = scmp.ne.s32.totalorder %s74, %s90
      %p92 = scmp.eq.s32.totalorder %s19, 0
      %p93 = por %p91, %p92
      %s95 = sadd.s32 %s94, 1
      %p98 = scmp.eq.s32.totalorder %s13, 3
      %p99 = scmp.ne.s32.totalorder %s94, %s96
      %p100 = scmp.eq.s32.totalorder %s13, 0
      %p101 = por %p99, %p100
      %p102 = scmp.ne.s32.totalorder %s94, %s96
      %p103 = scmp.eq.s32.totalorder %s18, 3
      %p104 = por %p102, %p103
      %p105 = scmp.ne.s32.totalorder %s96, %s97
      %p106 = scmp.eq.s32.totalorder %s18, 0
      %p107 = por %p105, %p106
      %p108 = scmp.ne.s32.totalorder %s96, %s97
      %p109 = scmp.eq.s32.totalorder %s19, 3
      %p110 = por %p108, %p109
      %p112 = scmp.ne.s32.totalorder %s97, %s111
      %p113 = scmp.eq.s32.totalorder %s19, 0
      %p114 = por %p112, %p113
      %s116 = sadd.s32 %s115, 1
      %p119 = scmp.eq.s32.totalorder %s13, 3
      %p120 = scmp.ne.s32.totalorder %s115, %s117
      %p121 = scmp.eq.s32.totalorder %s13, 0
      %p122 = por %p120, %p121
      %p123 = scmp.ne.s32.totalorder %s115, %s117
      %p124 = scmp.eq.s32.totalorder %s18, 3
      %p125 = por %p123, %p124
      %p126 = scmp.ne.s32.totalorder %s117, %s118
      %p127 = scmp.eq.s32.totalorder %s18, 0
      %p128 = por %p126, %p127
      %p129 = scmp.ne.s32.totalorder %s117, %s118
      %p130 = scmp.eq.s32.totalorder %s19, 3
      %p131 = por %p129, %p130
      %p133 = scmp.ne.s32.totalorder %s118, %s132
      %p134 = scmp.eq.s32.totalorder %s19, 0
      %p135 = por %p133, %p134
      %p136 = scmp.le.s32.totalorder 1, %s13
      %p137 = scmp.lt.s32.totalorder %s13, 5
      %p138 = pnand %p136, %p137
      %p139 = pneg %p138
      // Predicated region
      $region9: #{dn_autoencoder_forward.37} parent=5 // pred_check
        _
      $region10: #{dn_autoencoder_forward.37} parent=5 // pred_check_branch
        %141 = sbr.rel (%p138) target = $region12
      $region11: #{dn_autoencoder_forward.37} parent=5 // pred_region
        %s142 = ssub.s32 %s13, 1
        // Predicated region
        $region13: #{dn_autoencoder_forward.37} parent=11 // pred_check
          %p143 = pneg %p34
        $region14: #{dn_autoencoder_forward.37} parent=11 // pred_check_branch
          %145 = sbr.rel (%p143) target = $region16
        $region15: #{dn_autoencoder_forward.37} parent=11 // pred_region
          _
        $region16: #{dn_autoencoder_forward.37} parent=11 // pred_fallthru
          _
      $region12: #{dn_autoencoder_forward.37} parent=5 // pred_fallthru
        _
      %p146 = scmp.lt.s32.totalorder %s13, 4
      // Predicated region
      $region17: #{dn_autoencoder_forward.37} parent=5 // pred_check
        %p147 = pneg %p146
      $region18: #{dn_autoencoder_forward.37} parent=5 // pred_check_branch
        %149 = sbr.rel (%p147) target = $region20
      $region19: #{dn_autoencoder_forward.37} parent=5 // pred_region
        // Predicated region
        $region21: #{dn_autoencoder_forward.37} parent=19 // pred_check
          %p150 = pneg %p54
        $region22: #{dn_autoencoder_forward.37} parent=19 // pred_check_branch
          %152 = sbr.rel (%p150) target = $region24
        $region23: #{dn_autoencoder_forward.37} parent=19 // pred_region
          %s153 = sand.u32 %s44, 1
          %s154 = sand.u32 %s44, 1
          %s155 = smul.addr %s154, 288
          %s156 = scalar_lea.vmem [#allocation2], %s155
          %s157 = smul.u32 4, %s13
          %s158 = smul.addr %s157, 4
          %s159 = scalar_lea.vmem %s1, %s158
          // Predicated region
          $region25: #{dn_autoencoder_forward.37} parent=23 // pred_check
            _
          $region26: #{dn_autoencoder_forward.37} parent=23 // pred_check_branch
            %161 = sbr.rel (0) target = $region28
          $region27: #{dn_autoencoder_forward.37} parent=23 // pred_region
            // Predicated region
            $region29: #{dn_autoencoder_forward.37} parent=27 // pred_check
              _
            $region30: #{dn_autoencoder_forward.37} parent=27 // pred_check_branch
              %163 = sbr.rel (0) target = $region32
            $region31: #{dn_autoencoder_forward.37} parent=27 // pred_region
              loop: start=0, step=1, limit=1
              $region33: #{dn_autoencoder_forward.37} parent=31 // loop_pre_header
                _
              $region34: #{dn_autoencoder_forward.37} parent=31 // loop_header
                %s165 = sphi 0, %s169
                %p166 = scmp.ge.s32.totalorder %s165, 1
                %s170 = sphi %s159, %s159
                %s171 = sphi %s156, %s156
              $region35: #{dn_autoencoder_forward.37} parent=31 // loop_header_branch
                %168 = sbr.rel (%p166) target = $region39
              $region36: #{dn_autoencoder_forward.37} parent=31 // loop_body
                %v172 = vld [vmem:[%s170] sm:$0xff]
                %173 = vst [vmem:[%s171] sm:$0xff] %v172
                %v174 = vld [vmem:[%s170 + $0x8] sm:$0xff]
                %175 = vst [vmem:[%s171 + $0x8] sm:$0xff] %v174
                %v176 = vld [vmem:[%s170 + $0x40] sm:$0xff]
                %177 = vst [vmem:[%s171 + $0x10] sm:$0xff] %v176
                %v178 = vld [vmem:[%s170 + $0x48] sm:$0xff]
                %179 = vst [vmem:[%s171 + $0x18] sm:$0xff] %v178
                %v180 = vld [vmem:[%s170 + $0x80] sm:$0xff]
                %181 = vst [vmem:[%s171 + $0x20] sm:$0xff] %v180
                %v182 = vld [vmem:[%s170 + $0x88] sm:$0xff]
                %183 = vst [vmem:[%s171 + $0x28] sm:$0xff] %v182
                %v184 = vld [vmem:[%s170 + $0xc0] sm:$0xff]
                %185 = vst [vmem:[%s171 + $0x30] sm:$0xff] %v184
                %v186 = vld [vmem:[%s170 + $0xc8] sm:$0xff]
                %187 = vst [vmem:[%s171 + $0x38] sm:$0xff] %v186
                %v188 = vld [vmem:[%s170 + $0x100] sm:$0xff]
                %189 = vst [vmem:[%s171 + $0x40] sm:$0xff] %v188
                %v190 = vld [vmem:[%s170 + $0x108] sm:$0xff]
                %191 = vst [vmem:[%s171 + $0x48] sm:$0xff] %v190
                %v192 = vld [vmem:[%s170 + $0x140] sm:$0xff]
                %193 = vst [vmem:[%s171 + $0x50] sm:$0xff] %v192
                %v194 = vld [vmem:[%s170 + $0x148] sm:$0xff]
                %195 = vst [vmem:[%s171 + $0x58] sm:$0xff] %v194
                %v196 = vld [vmem:[%s170 + $0x180] sm:$0xff]
                %197 = vst [vmem:[%s171 + $0x60] sm:$0xff] %v196
                %v198 = vld [vmem:[%s170 + $0x188] sm:$0xff]
                %199 = vst [vmem:[%s171 + $0x68] sm:$0xff] %v198
                %v200 = vld [vmem:[%s170 + $0x1c0] sm:$0xff]
                %201 = vst [vmem:[%s171 + $0x70] sm:$0xff] %v200
                %v202 = vld [vmem:[%s170 + $0x1c8] sm:$0xff]
                %203 = vst [vmem:[%s171 + $0x78] sm:$0xff] %v202
                %v204 = vld [vmem:[%s170 + $0x200] sm:$0xff]
                %205 = vst [vmem:[%s171 + $0x80] sm:$0xff] %v204
                %v206 = vld [vmem:[%s170 + $0x208] sm:$0xff]
                %207 = vst [vmem:[%s171 + $0x88] sm:$0xff] %v206
                %v208 = vld [vmem:[%s170 + $0x240] sm:$0xff]
                %209 = vst [vmem:[%s171 + $0x90] sm:$0xff] %v208
                %v210 = vld [vmem:[%s170 + $0x248] sm:$0xff]
                %211 = vst [vmem:[%s171 + $0x98] sm:$0xff] %v210
                %v212 = vld [vmem:[%s170 + $0x280] sm:$0xff]
                %213 = vst [vmem:[%s171 + $0xa0] sm:$0xff] %v212
                %v214 = vld [vmem:[%s170 + $0x288] sm:$0xff]
                %215 = vst [vmem:[%s171 + $0xa8] sm:$0xff] %v214
                %v216 = vld [vmem:[%s170 + $0x2c0] sm:$0xff]
                %217 = vst [vmem:[%s171 + $0xb0] sm:$0xff] %v216
                %v218 = vld [vmem:[%s170 + $0x2c8] sm:$0xff]
                %219 = vst [vmem:[%s171 + $0xb8] sm:$0xff] %v218
                %v220 = vld [vmem:[%s170 + $0x300] sm:$0xff]
                %221 = vst [vmem:[%s171 + $0xc0] sm:$0xff] %v220
                %v222 = vld [vmem:[%s170 + $0x308] sm:$0xff]
                %223 = vst [vmem:[%s171 + $0xc8] sm:$0xff] %v222
                %v224 = vld [vmem:[%s170 + $0x340] sm:$0xff]
                %225 = vst [vmem:[%s171 + $0xd0] sm:$0xff] %v224
                %v226 = vld [vmem:[%s170 + $0x348] sm:$0xff]
                %227 = vst [vmem:[%s171 + $0xd8] sm:$0xff] %v226
                %v228 = vld [vmem:[%s170 + $0x380] sm:$0xff]
                %229 = vst [vmem:[%s171 + $0xe0] sm:$0xff] %v228
                %v230 = vld [vmem:[%s170 + $0x388] sm:$0xff]
                %231 = vst [vmem:[%s171 + $0xe8] sm:$0xff] %v230
                %v232 = vld [vmem:[%s170 + $0x3c0] sm:$0xff]
                %233 = vst [vmem:[%s171 + $0xf0] sm:$0xff] %v232
                %v234 = vld [vmem:[%s170 + $0x3c8] sm:$0xff]
                %235 = vst [vmem:[%s171 + $0xf8] sm:$0xff] %v234
                %v236 = vld [vmem:[%s170 + $0x400] sm:$0xff]
                %237 = vst [vmem:[%s171 + $0x100] sm:$0xff] %v236
                %v238 = vld [vmem:[%s170 + $0x408] sm:$0xff]
                %239 = vst [vmem:[%s171 + $0x108] sm:$0xff] %v238
                %v240 = vld [vmem:[%s170 + $0x440] sm:$0xff]
                %241 = vst [vmem:[%s171 + $0x110] sm:$0xff] %v240
                %v242 = vld [vmem:[%s170 + $0x448] sm:$0xff]
                %243 = vst [vmem:[%s171 + $0x118] sm:$0xff] %v242
              $region37: #{dn_autoencoder_forward.37} parent=31 // loop_footer
                %s169 = sadd.s32 1, %s165
              $region38: #{dn_autoencoder_forward.37} parent=31 // loop_footer_branch
                %164 = sbr.rel target = $region34
              $region39: #{dn_autoencoder_forward.37} parent=31 // loop_exit
                _
            $region32: #{dn_autoencoder_forward.37} parent=27 // pred_fallthru
              _
            // Predicated region
            $region40: #{dn_autoencoder_forward.37} parent=27 // pred_check
              _
            $region41: #{dn_autoencoder_forward.37} parent=27 // pred_check_branch
              %245 = sbr.rel target = $region43
            $region42: #{dn_autoencoder_forward.37} parent=27 // pred_region
              _
            $region43: #{dn_autoencoder_forward.37} parent=27 // pred_fallthru
              _
          $region28: #{dn_autoencoder_forward.37} parent=23 // pred_fallthru
            _
          %246 = vnop
        $region24: #{dn_autoencoder_forward.37} parent=19 // pred_fallthru
          _
      $region20: #{dn_autoencoder_forward.37} parent=5 // pred_fallthru
        _
      %p247 = scmp.le.s32.totalorder 1, %s13
      %p248 = scmp.lt.s32.totalorder %s13, 5
      %p249 = pnand %p247, %p248
      %p250 = pneg %p249
      // Predicated region
      $region44: #{dn_autoencoder_forward.37} parent=5 // pred_check
        _
      $region45: #{dn_autoencoder_forward.37} parent=5 // pred_check_branch
        %252 = sbr.rel (%p249) target = $region47
      $region46: #{dn_autoencoder_forward.37} parent=5 // pred_region
        %s253 = ssub.s32 %s13, 1
        %s254 = sand.u32 %s47, 1
        %s255 = sand.u32 %s47, 1
        %s256 = smul.addr %s255, 288
        %s257 = scalar_lea.vmem [#allocation2], %s256
        // Predicated region
        $region48: #{dn_autoencoder_forward.37} parent=46 // pred_check
          %p258 = pneg %p60
        $region49: #{dn_autoencoder_forward.37} parent=46 // pred_check_branch
          %260 = sbr.rel (%p258) target = $region51
        $region50: #{dn_autoencoder_forward.37} parent=46 // pred_region
          _
        $region51: #{dn_autoencoder_forward.37} parent=46 // pred_fallthru
          _
        %p261 = pneg %p34
        %p262 = pneg %p31
        %s263 = sand.u32 %s47, 1
        %s264 = sand.u32 %s47, 1
        %s265 = smul.addr %s264, 288
        %s266 = scalar_lea.vmem [#allocation2], %s265
        %p267 = pneg %p60
        %p268 = pneg %p57
        %p269 = pneg %p86
        %p270 = pneg %p83
        %s271 = smul.u32 4, %s18
        %p272 = scmp.lt.s32.totalorder %s271, 15
        %s273 = scalar_select %p272, %s271, 15
        %s274 = scalar_lea.vmem %s2, %s273
        %p275 = pneg %p107
        %p276 = pneg %p104
        %p277 = pneg %p128
        %p278 = pneg %p125
        %s279 = smul.u32 4, %s18
        %s280 = smul.u32 4, %s18
        %p281 = scmp.lt.s32.totalorder %s280, 15
        %s282 = scalar_select %p281, %s280, 15
        %s283 = scalar_lea.vmem %s2, %s282
        %s284 = smul.u32 4, %s18
        %p286 = scmp.eq.s32.totalorder %s18, 0
        // Predicated region
        $region52: #{dn_autoencoder_forward.37} parent=46 // pred_check
          %p287 = pneg %p286
        $region53: #{dn_autoencoder_forward.37} parent=46 // pred_check_branch
          %289 = sbr.rel (%p287) target = $region55
        $region54: #{dn_autoencoder_forward.37} parent=46 // pred_region
          %vm290 = vcmask 0
          %291 = vst.msk [vmem:[#allocation3] sm:$0x1] %vm290, 0.0
          %292 = vst.msk [vmem:[#allocation5] sm:$0x1] %vm290, 0.0
        $region55: #{dn_autoencoder_forward.37} parent=46 // pred_fallthru
          _
        %v293 = vld [vmem:[%s0] sm:$0x3]
        %v294 = vld [vmem:[%s257] sm:$0xff]
        %v295 = vld [vmem:[%s257 + $0x8] sm:$0xff]
        %v296 = vld [vmem:[%s257 + $0x10] sm:$0xff]
        %v297 = vld [vmem:[%s257 + $0x18] sm:$0xff]
        %v298 = vld [vmem:[%s257 + $0x20] sm:$0xff]
        %v299 = vld [vmem:[%s257 + $0x28] sm:$0xff]
        %v300 = vld [vmem:[%s257 + $0x30] sm:$0xff]
        %v301 = vld [vmem:[%s257 + $0x38] sm:$0xff]
        %v302 = vld [vmem:[%s257 + $0x40] sm:$0xff]
        %v303 = vld [vmem:[%s257 + $0x48] sm:$0xff]
        %v304 = vld [vmem:[%s257 + $0x50] sm:$0xff]
        %v305 = vld [vmem:[%s257 + $0x58] sm:$0xff]
        %v306 = vld [vmem:[%s257 + $0x60] sm:$0xff]
        %v307 = vld [vmem:[%s257 + $0x68] sm:$0xff]
        %v308 = vld [vmem:[%s257 + $0x70] sm:$0xff]
        %v309 = vld [vmem:[%s257 + $0x78] sm:$0xff]
        %v310 = vld [vmem:[%s257 + $0x80] sm:$0xff]
        %v311 = vld [vmem:[%s257 + $0x88] sm:$0xff]
        %v312 = vld [vmem:[%s257 + $0x90] sm:$0xff]
        %v313 = vld [vmem:[%s257 + $0x98] sm:$0xff]
        %v314 = vld [vmem:[%s257 + $0xa0] sm:$0xff]
        %v315 = vld [vmem:[%s257 + $0xa8] sm:$0xff]
        %v316 = vld [vmem:[%s257 + $0xb0] sm:$0xff]
        %v317 = vld [vmem:[%s257 + $0xb8] sm:$0xff]
        %v318 = vld [vmem:[%s257 + $0xc0] sm:$0xff]
        %v319 = vld [vmem:[%s257 + $0xc8] sm:$0xff]
        %v320 = vld [vmem:[%s257 + $0xd0] sm:$0xff]
        %v321 = vld [vmem:[%s257 + $0xd8] sm:$0xff]
        %v322 = vld [vmem:[%s257 + $0xe0] sm:$0xff]
        %v323 = vld [vmem:[%s257 + $0xe8] sm:$0xff]
        %v324 = vld [vmem:[%s257 + $0xf0] sm:$0xff]
        %v325 = vld [vmem:[%s257 + $0xf8] sm:$0xff]
        %v326 = vld [vmem:[%s257 + $0x100] sm:$0xff]
        %v327 = vld [vmem:[%s257 + $0x108] sm:$0xff]
        %v328 = vld [vmem:[%s257 + $0x110] sm:$0xff]
        %v329 = vld [vmem:[%s257 + $0x118] sm:$0xff]
        %v332 = vunpack.c.l.s4 1966171168
        %v333 = vunpack.c.0.s8 %v332
        %v334 = vlaneseq
        %v335 = vshrl.u32 %v334, 7
        %v336 = vsub.s32 %v333, %v335
        %v337 = vrot.slane %v293, %v336
        %v338 = vcombine.high %v337, %v337
        %v340 = vunpack.c.l.s4 1966171168
        %v341 = vunpack.c.0.s8 %v340
        %v342 = vlaneseq
        %v343 = vshrl.u32 %v342, 7
        %v344 = vsub.s32 %v341, %v343
        %v345 = vrot.slane %v337, %v344
        %v347 = vunpack.c.l.s4 1966171168
        %v348 = vunpack.c.0.s8 %v347
        %v349 = vlaneseq
        %v350 = vshrl.u32 %v349, 7
        %v351 = vsub.s32 %v348, %v350
        %v352 = vrot.slane %v338, %v351
        %v390 = vunpack.c.l.b16 %v294
        %v391 = vunpack.c.h.b16 %v294
        %v392 = vunpack.c.l.b16 %v295
        %v393 = vunpack.c.h.b16 %v295
        %v394 = vunpack.c.l.b16 %v296
        %v395 = vunpack.c.h.b16 %v296
        %v396 = vunpack.c.l.b16 %v297
        %v397 = vunpack.c.h.b16 %v297
        %v398 = vunpack.c.l.b16 %v298
        %v399 = vunpack.c.h.b16 %v298
        %v400 = vunpack.c.l.b16 %v299
        %v401 = vunpack.c.h.b16 %v299
        %v402 = vunpack.c.l.b16 %v300
        %v403 = vunpack.c.h.b16 %v300
        %v404 = vunpack.c.l.b16 %v301
        %v405 = vunpack.c.h.b16 %v301
        %v406 = vunpack.c.l.b16 %v302
        %v407 = vunpack.c.h.b16 %v302
        %v408 = vunpack.c.l.b16 %v303
        %v409 = vunpack.c.h.b16 %v303
        %v410 = vunpack.c.l.b16 %v304
        %v411 = vunpack.c.h.b16 %v304
        %v412 = vunpack.c.l.b16 %v305
        %v413 = vunpack.c.h.b16 %v305
        %v414 = vunpack.c.l.b16 %v306
        %v415 = vunpack.c.h.b16 %v306
        %v416 = vunpack.c.l.b16 %v307
        %v417 = vunpack.c.h.b16 %v307
        %v418 = vunpack.c.l.b16 %v308
        %v419 = vunpack.c.h.b16 %v308
        %v420 = vunpack.c.l.b16 %v309
        %v421 = vunpack.c.h.b16 %v309
        %v422 = vunpack.c.l.b16 %v310
        %v423 = vunpack.c.h.b16 %v310
        %v424 = vunpack.c.l.b16 %v311
        %v425 = vunpack.c.h.b16 %v311
        %v426 = vunpack.c.l.b16 %v312
        %v427 = vunpack.c.h.b16 %v312
        %v428 = vunpack.c.l.b16 %v313
        %v429 = vunpack.c.h.b16 %v313
        %v430 = vunpack.c.l.b16 %v314
        %v431 = vunpack.c.h.b16 %v314
        %v432 = vunpack.c.l.b16 %v315
        %v433 = vunpack.c.h.b16 %v315
        %v434 = vunpack.c.l.b16 %v316
        %v435 = vunpack.c.h.b16 %v316
        %v436 = vunpack.c.l.b16 %v317
        %v437 = vunpack.c.h.b16 %v317
        %v438 = vunpack.c.l.b16 %v318
        %v439 = vunpack.c.h.b16 %v318
        %v440 = vunpack.c.l.b16 %v319
        %v441 = vunpack.c.h.b16 %v319
        %v442 = vunpack.c.l.b16 %v320
        %v443 = vunpack.c.h.b16 %v320
        %v444 = vunpack.c.l.b16 %v321
        %v445 = vunpack.c.h.b16 %v321
        %v446 = vunpack.c.l.b16 %v322
        %v447 = vunpack.c.h.b16 %v322
        %v448 = vunpack.c.l.b16 %v323
        %v449 = vunpack.c.h.b16 %v323
        %v450 = vunpack.c.l.b16 %v324
        %v451 = vunpack.c.h.b16 %v324
        %v452 = vunpack.c.l.b16 %v325
        %v453 = vunpack.c.h.b16 %v325
        %v454 = vunpack.c.l.b16 %v326
        %v455 = vunpack.c.h.b16 %v326
        %v456 = vunpack.c.l.b16 %v327
        %v457 = vunpack.c.h.b16 %v327
        %v458 = vunpack.c.l.b16 %v328
        %v459 = vunpack.c.h.b16 %v328
        %v460 = vunpack.c.l.b16 %v329
        %v461 = vunpack.c.h.b16 %v329
        %v462 = vpack.c.b16 %v394, %v390
        %v463 = vpack.c.b16 %v395, %v391
        %v464 = vpack.c.b16 %v396, %v392
        %v465 = vpack.c.b16 %v397, %v393
        %v466 = vpack.c.b16 %v402, %v398
        %v467 = vpack.c.b16 %v403, %v399
        %v468 = vpack.c.b16 %v404, %v400
        %v469 = vpack.c.b16 %v405, %v401
        %v470 = vpack.c.b16 %v410, %v406
        %v471 = vpack.c.b16 %v411, %v407
        %v472 = vpack.c.b16 %v412, %v408
        %v473 = vpack.c.b16 %v413, %v409
        %v474 = vpack.c.b16 %v418, %v414
        %v475 = vpack.c.b16 %v419, %v415
        %v476 = vpack.c.b16 %v420, %v416
        %v477 = vpack.c.b16 %v421, %v417
        %v478 = vpack.c.b16 %v426, %v422
        %v479 = vpack.c.b16 %v427, %v423
        %v480 = vpack.c.b16 %v428, %v424
        %v481 = vpack.c.b16 %v429, %v425
        %v482 = vpack.c.b16 %v434, %v430
        %v483 = vpack.c.b16 %v435, %v431
        %v484 = vpack.c.b16 %v436, %v432
        %v485 = vpack.c.b16 %v437, %v433
        %v486 = vpack.c.b16 %v442, %v438
        %v487 = vpack.c.b16 %v443, %v439
        %v488 = vpack.c.b16 %v444, %v440
        %v489 = vpack.c.b16 %v445, %v441
        %v490 = vpack.c.b16 %v450, %v446
        %v491 = vpack.c.b16 %v451, %v447
        %v492 = vpack.c.b16 %v452, %v448
        %v493 = vpack.c.b16 %v453, %v449
        %v494 = vpack.c.b16 %v458, %v454
        %v495 = vpack.c.b16 %v459, %v455
        %v496 = vpack.c.b16 %v460, %v456
        %v497 = vpack.c.b16 %v461, %v457
        %vm534 = vcmask 130048
        %v536 = vsel %vm534, %v352, 0
        %538 = vmatprep.subr.bf16.mxu0 %v463
        %539 = vmatpush1.bf16.msra.mxu0 %v462
        %540 = vmatprep.subr.bf16.mxu0 %v467
        %541 = vmatpush1.bf16.msra.mxu0 %v466
        %542 = vmatprep.subr.bf16.mxu0 %v471
        %543 = vmatpush1.bf16.msra.mxu0 %v470
        %544 = vmatprep.subr.bf16.mxu0 %v475
        %545 = vmatpush1.bf16.msra.mxu0 %v474
        %546 = vmatprep.subr.bf16.mxu0 %v479
        %547 = vmatpush1.bf16.msra.mxu0 %v478
        %548 = vmatprep.subr.bf16.mxu0 %v483
        %549 = vmatpush1.bf16.msra.mxu0 %v482
        %550 = vmatprep.subr.bf16.mxu0 %v487
        %551 = vmatpush1.bf16.msra.mxu0 %v486
        %552 = vmatprep.subr.bf16.mxu0 %v491
        %553 = vmatpush1.bf16.msra.mxu0 %v490
        %554 = vmatprep.subr.bf16.mxu0 %v495
        %555 = vmatpush1.bf16.msra.mxu0 %v494
        %556 = vmatprep.subr.bf16.mxu0 0
        %557 = vmatpush1.bf16.msra.mxu0 0
        %558 = vmatprep.subr.bf16.mxu0 0
        %559 = vmatpush1.bf16.msra.mxu0 0
        %560 = vmatprep.subr.bf16.mxu0 0
        %561 = vmatpush1.bf16.msra.mxu0 0
        %562 = vmatprep.subr.bf16.mxu0 0
        %563 = vmatpush1.bf16.msra.mxu0 0
        %564 = vmatprep.subr.bf16.mxu0 0
        %565 = vmatpush1.bf16.msra.mxu0 0
        %566 = vmatprep.subr.bf16.mxu0 0
        %567 = vmatpush1.bf16.msra.mxu0 0
        %568 = vmatprep.subr.bf16.mxu0 0
        %569 = vmatpush1.bf16.msra.mxu0 0
        %570 = vmatprep.mubr.bf16.mxu0 %v536
        %571 = vmatmul.mubr.bf16.gmra.mrb[0].mxu0 %v345
        %v572 = vpop.f32.mrb[0].mxu0
        %v573 = vadd.f32 0.0, %v572
        %v574 = vpop.f32.mrb[0].mxu0
        %v575 = vadd.f32 0.0, %v574
        %v576 = vpop.f32.mrb[0].mxu0
        %v577 = vpop.f32.mrb[0].mxu0
        %578 = vdwg.mxu0
        %579 = vmatprep.subr.bf16.mxu0 %v465
        %580 = vmatpush1.bf16.msra.mxu0 %v464
        %581 = vmatprep.subr.bf16.mxu0 %v469
        %582 = vmatpush1.bf16.msra.mxu0 %v468
        %583 = vmatprep.subr.bf16.mxu0 %v473
        %584 = vmatpush1.bf16.msra.mxu0 %v472
        %585 = vmatprep.subr.bf16.mxu0 %v477
        %586 = vmatpush1.bf16.msra.mxu0 %v476
        %587 = vmatprep.subr.bf16.mxu0 %v481
        %588 = vmatpush1.bf16.msra.mxu0 %v480
        %589 = vmatprep.subr.bf16.mxu0 %v485
        %590 = vmatpush1.bf16.msra.mxu0 %v484
        %591 = vmatprep.subr.bf16.mxu0 %v489
        %592 = vmatpush1.bf16.msra.mxu0 %v488
        %593 = vmatprep.subr.bf16.mxu0 %v493
        %594 = vmatpush1.bf16.msra.mxu0 %v492
        %595 = vmatprep.subr.bf16.mxu0 %v497
        %596 = vmatpush1.bf16.msra.mxu0 %v496
        %597 = vmatprep.subr.bf16.mxu0 0
        %598 = vmatpush1.bf16.msra.mxu0 0
        %599 = vmatprep.subr.bf16.mxu0 0
        %600 = vmatpush1.bf16.msra.mxu0 0
        %601 = vmatprep.subr.bf16.mxu0 0
        %602 = vmatpush1.bf16.msra.mxu0 0
        %603 = vmatprep.subr.bf16.mxu0 0
        %604 = vmatpush1.bf16.msra.mxu0 0
        %605 = vmatprep.subr.bf16.mxu0 0
        %606 = vmatpush1.bf16.msra.mxu0 0
        %607 = vmatprep.subr.bf16.mxu0 0
        %608 = vmatpush1.bf16.msra.mxu0 0
        %609 = vmatprep.subr.bf16.mxu0 0
        %610 = vmatpush1.bf16.msra.mxu0 0
        %611 = vmatprep.mubr.bf16.mxu0 %v536
        %612 = vmatmul.mubr.bf16.gmra.mrb[0].mxu0 %v345
        %v613 = vpop.f32.mrb[0].mxu0
        %v614 = vadd.f32 0.0, %v613
        %v615 = vpop.f32.mrb[0].mxu0
        %v616 = vadd.f32 0.0, %v615
        %v617 = vpop.f32.mrb[0].mxu0
        %v618 = vpop.f32.mrb[0].mxu0
        %619 = vdwg.mxu0
        %v624 = vcombine.low %v573, %v575
        %v625 = vcombine.low %v614, %v616
        %v627 = vunpack.c.l.s4 1966171168
        %v628 = vunpack.c.0.s8 %v627
        %v629 = vlaneseq
        %v630 = vshrl.u32 %v629, 7
        %v631 = vsub.s32 %v628, %v630
        %v632 = vrot.slane %v624, %v631
        %v634 = vunpack.c.l.s4 1966171168
        %v635 = vunpack.c.0.s8 %v634
        %v636 = vlaneseq
        %v637 = vshrl.u32 %v636, 7
        %v638 = vsub.s32 %v635, %v637
        %v639 = vrot.slane %v625, %v638
        %v640 = vcombine.low %v632, %v639
        %v642 = vunpack.c.l.s4 1966171168
        %v643 = vunpack.c.0.s8 %v642
        %v644 = vlaneseq
        %v645 = vshrl.u32 %v644, 7
        %v646 = vsub.s32 %v643, %v645
        %v647 = vrot.slane %v640, %v646
        %v649 = vlaneseq
        %vm650 = vcmp.ge.s32.totalorder %v649, 0
        %vm651 = vcmp.lt.s32.totalorder %v649, 512
        %vm652 = vmand %vm650, %vm651
        %653 = vst.msk [vmem:[%s283] sm:$0xf] %vm652, %v647
        %v654 = vld [vmem:[#allocation3] sm:$0x1]
        %vm655 = vcmask 1040384
        %v656 = vsel %vm655, %v573, 0.0
        %v657 = vsel %vm655, %v575, 0.0
        %v658 = vadd.f32 %v656, %v657
        %v659 = vsel %vm655, %v614, 0.0
        %v660 = vadd.f32 %v658, %v659
        %v661 = vsel %vm655, %v616, 0.0
        %v662 = vadd.f32 %v660, %v661
        %663 = vadd.xlane.f32.xlu0 %v662
        %v664 = vpop.xlane.xlu0 %663
        %v665 = vadd.f32 %v654, %v664
        %vm666 = vcmask 0
        %667 = vst.msk [vmem:[#allocation3] sm:$0x1] %vm666, %v665
        %v668 = vld [vmem:[#allocation5] sm:$0x1]
        %v669 = vmul.f32 %v573, %v573
        %v670 = vmul.f32 %v575, %v575
        %v671 = vmul.f32 %v614, %v614
        %v672 = vmul.f32 %v616, %v616
        %v673 = vsel %vm655, %v669, 0.0
        %v674 = vsel %vm655, %v670, 0.0
        %v675 = vadd.f32 %v673, %v674
        %v676 = vsel %vm655, %v671, 0.0
        %v677 = vadd.f32 %v675, %v676
        %v678 = vsel %vm655, %v672, 0.0
        %v679 = vadd.f32 %v677, %v678
        %680 = vadd.xlane.f32.xlu0 %v679
        %v681 = vpop.xlane.xlu0 %680
        %v682 = vadd.f32 %v668, %v681
        %683 = vst.msk [vmem:[#allocation5] sm:$0x1] %vm666, %v682
        %s684 = smul.u32 4, %s18
        %p685 = scmp.lt.s32.totalorder %s684, 15
        %s686 = scalar_select %p685, %s684, 15
        %s687 = scalar_lea.vmem %s2, %s686
        // Predicated region
        $region56: #{dn_autoencoder_forward.37} parent=46 // pred_check
          %p688 = pneg %p83
        $region57: #{dn_autoencoder_forward.37} parent=46 // pred_check_branch
          %690 = sbr.rel (%p688) target = $region59
        $region58: #{dn_autoencoder_forward.37} parent=46 // pred_region
          %s691 = smul.u32 4, %s18
        $region59: #{dn_autoencoder_forward.37} parent=46 // pred_fallthru
          _
        // Predicated region
        $region60: #{dn_autoencoder_forward.37} parent=46 // pred_check
          %p692 = pneg %p104
        $region61: #{dn_autoencoder_forward.37} parent=46 // pred_check_branch
          %694 = sbr.rel (%p692) target = $region63
        $region62: #{dn_autoencoder_forward.37} parent=46 // pred_region
          %s696 = ssub.s32 16, 16
          %697 = vsyncadd [#allocation4], %s696
          %s699 = sshll.u32 [#allocation3], 4
          %s700 = int_to_ptr.vmem [resolvable:$true] %s699
          %702 = dma.vmem_to_hbm [thread:$0]  %s700, 16, %s3, [#allocation4]
        $region63: #{dn_autoencoder_forward.37} parent=46 // pred_fallthru
          _
        // Predicated region
        $region64: #{dn_autoencoder_forward.37} parent=46 // pred_check
          %p703 = pneg %p125
        $region65: #{dn_autoencoder_forward.37} parent=46 // pred_check_branch
          %705 = sbr.rel (%p703) target = $region67
        $region66: #{dn_autoencoder_forward.37} parent=46 // pred_region
          %s707 = ssub.s32 16, 16
          %708 = vsyncadd [#allocation6], %s707
          %s710 = sshll.u32 [#allocation5], 4
          %s711 = int_to_ptr.vmem [resolvable:$true] %s710
          %713 = dma.vmem_to_hbm [thread:$0]  %s711, 16, %s4, [#allocation6]
        $region67: #{dn_autoencoder_forward.37} parent=46 // pred_fallthru
          _
        // Predicated region
        $region68: #{dn_autoencoder_forward.37} parent=46 // pred_check
          %p714 = pneg %p104
        $region69: #{dn_autoencoder_forward.37} parent=46 // pred_check_branch
          %716 = sbr.rel (%p714) target = $region71
        $region70: #{dn_autoencoder_forward.37} parent=46 // pred_region
          %717 = dma.done [#allocation4], 16
        $region71: #{dn_autoencoder_forward.37} parent=46 // pred_fallthru
          _
        // Predicated region
        $region72: #{dn_autoencoder_forward.37} parent=46 // pred_check
          %p718 = pneg %p125
        $region73: #{dn_autoencoder_forward.37} parent=46 // pred_check_branch
          %720 = sbr.rel (%p718) target = $region75
        $region74: #{dn_autoencoder_forward.37} parent=46 // pred_region
          %721 = dma.done [#allocation6], 16
        $region75: #{dn_autoencoder_forward.37} parent=46 // pred_fallthru
          _
      $region47: #{dn_autoencoder_forward.37} parent=5 // pred_fallthru
        _
      %p722 = scmp.le.s32.totalorder 2, %s13
      // Predicated region
      $region76: #{dn_autoencoder_forward.37} parent=5 // pred_check
        %p723 = pneg %p722
      $region77: #{dn_autoencoder_forward.37} parent=5 // pred_check_branch
        %725 = sbr.rel (%p723) target = $region79
      $region78: #{dn_autoencoder_forward.37} parent=5 // pred_region
        %s726 = ssub.s32 %s13, 2
        // Predicated region
        $region80: #{dn_autoencoder_forward.37} parent=78 // pred_check
          %p727 = pneg %p89
        $region81: #{dn_autoencoder_forward.37} parent=78 // pred_check_branch
          %729 = sbr.rel (%p727) target = $region83
        $region82: #{dn_autoencoder_forward.37} parent=78 // pred_region
          %s730 = smul.u32 4, %s19
          %p731 = scmp.lt.s32.totalorder %s730, 15
          %s732 = scalar_select %p731, %s730, 15
          %s733 = scalar_lea.vmem %s2, %s732
        $region83: #{dn_autoencoder_forward.37} parent=78 // pred_fallthru
          _
      $region79: #{dn_autoencoder_forward.37} parent=5 // pred_fallthru
        _
    $region6: #{dn_autoencoder_forward.37} parent=1 // loop_footer
      %s17 = sadd.s32 1, %s13
    $region7: #{dn_autoencoder_forward.37} parent=1 // loop_footer_branch
      %12 = sbr.rel target = $region3
    $region8: #{dn_autoencoder_forward.37} parent=1 // loop_exit
      _
    %734 = vsyncpa [#allocation4], 1
    %s735 = scalar_lea.sflag [#allocation4], 1
    %736 = vsyncpa %s735, 1
    %737 = vsyncpa [#allocation6], 1

</llo_original>
